<compile_context>
chip_gen: v7x
topology: tpu7x:2x2x1
jax: 0.10.0
libtpu: 0.0.40
codegen_flags: <defaults>
</compile_context>

<pallas_src>
import jax
import jax.numpy as jnp
from jax import lax
from jax.experimental import pallas as pl
from jax.experimental.pallas import tpu as pltpu

KH, KW = 5, 5
PAD = 2
LANE = 128


def _relu_dwconv_kernel(x_ref, w_ref, o_ref, xpad_ref):
    # x_ref:    (H, W, Cb, 128)          un-padded channels-blocked input (one batch)
    # w_ref:    (KH, KW, Cb, 128)        depthwise filters
    # o_ref:    (H, W, Cb, 128)          output (one batch)
    # xpad_ref: (H, W + 2*PAD, Cb, 128)  VMEM scratch, W-halo only, ReLU'd interior
    H, W, CB, L = o_ref.shape

    # Halo-only zero fill (left/right W columns) + fused ReLU interior copy.
    # No full-buffer memset, no H halo rows.
    zero_halo = jnp.zeros((H, PAD, CB, L), xpad_ref.dtype)
    xpad_ref[:, :PAD] = zero_halo
    xpad_ref[:, PAD + W:] = zero_halo
    xpad_ref[:, PAD:PAD + W] = jnp.maximum(x_ref[...], 0.0).astype(xpad_ref.dtype)

    # One output row at a time keeps vreg pressure bounded (acc = W tiles).
    for h in range(H):                          # static: tiny H
        acc = jnp.zeros((W, CB, L), jnp.float32)
        # Statically clamp kh taps at the top/bottom boundary rows (skip zero rows).
        kh_lo = max(0, PAD - h)
        kh_hi = min(KH, H + PAD - h)
        for kh in range(kh_lo, kh_hi):          # static 3..5 taps
            # Per-kh weight slab load (5 vreg tiles) -- cheap, avoids 25-vreg preload.
            w_kh = w_ref[kh].astype(jnp.float32)        # (KW, Cb, 128)
            slab = xpad_ref[h + kh - PAD]               # (W + 2*PAD, Cb, 128)
            for kw in range(KW):                # static 5
                # Leading-axis value slice: whole-tile selection, no relayout.
                acc = acc + slab[kw:kw + W] * w_kh[kw]
        o_ref[h] = acc.astype(o_ref.dtype)


def _dwconv_call(N, H, W, CB, dtype):
    flops = 2 * N * H * W * CB * LANE * KH * KW
    itemsize = jnp.dtype(dtype).itemsize
    bytes_accessed = (2 * N * H * W * CB * LANE + KH * KW * CB * LANE) * itemsize
    return pl.pallas_call(
        _relu_dwconv_kernel,
        out_shape=jax.ShapeDtypeStruct((N, H, W, CB, LANE), dtype),
        grid=(N,),
        in_specs=[
            pl.BlockSpec((None, H, W, CB, LANE), lambda n: (n, 0, 0, 0, 0)),
            pl.BlockSpec((KH, KW, CB, LANE), lambda n: (0, 0, 0, 0)),
        ],
        out_specs=pl.BlockSpec((None, H, W, CB, LANE), lambda n: (n, 0, 0, 0, 0)),
        scratch_shapes=[
            pltpu.VMEM((H, W + 2 * PAD, CB, LANE), jnp.float32),
        ],
        compiler_params=pltpu.CompilerParams(dimension_semantics=("parallel",)),
        cost_estimate=pl.CostEstimate(
            flops=flops, transcendentals=0, bytes_accessed=bytes_accessed),
    )


def prepare_weights(weight_oihw):
    """One-time (parameter-load-time) layout: (C, 1, KH, KW) -> (KH, KW, Cb, 128)."""
    C = weight_oihw.shape[0]
    assert weight_oihw.shape == (C, 1, KH, KW)
    CB = pl.cdiv(C, LANE)
    CPAD = CB * LANE
    w_hwc = jnp.transpose(weight_oihw[:, 0, :, :], (1, 2, 0))        # (KH, KW, C)
    w_hwc = jnp.pad(w_hwc, ((0, 0), (0, 0), (0, CPAD - C)))          # zero-padded lanes
    return w_hwc.reshape(KH, KW, CB, LANE)


@jax.jit
def relu_dwconv2d(x_nchw, w_prepared):
    """x_nchw: (N, C, H, W); w_prepared: (KH, KW, Cb, 128) from prepare_weights()."""
    N, C, H, W = x_nchw.shape
    _, _, CB, L = w_prepared.shape
    CPAD = CB * L

    # Activation layout glue (tiny ~113 KB tensor): channels -> lanes, pad C to 5*128.
    x = jnp.transpose(x_nchw, (0, 2, 3, 1))                          # (N, H, W, C)
    x = jnp.pad(x, ((0, 0), (0, 0), (0, 0), (0, CPAD - C)))
    x = x.reshape(N, H, W, CB, L)

    o = _dwconv_call(N, H, W, CB, x_nchw.dtype)(x, w_prepared)       # (N, H, W, Cb, 128)

    o = o.reshape(N, H, W, CPAD)[..., :C]                            # drop padded lanes
    return jnp.transpose(o, (0, 3, 1, 2))                            # (N, C, H, W)


if __name__ == "__main__":
    # Shapes implied by the module: x: (1, 576, 7, 7); depthwise weight: (576, 1, 5, 5)
    key = jax.random.PRNGKey(0)
    kx, kw = jax.random.split(key)
    x = jax.random.normal(kx, (1, 576, 7, 7), dtype=jnp.float32)
    w = jax.random.normal(kw, (576, 1, 5, 5), dtype=jnp.float32) * 0.1

    # Weight layout prep happens once, outside the jitted forward.
    w_prep = jax.block_until_ready(prepare_weights(w))

    out = jax.block_until_ready(relu_dwconv2d(x, w_prep))

    # Pure-JAX reference: ReLU -> depthwise Conv2d (pad=2, stride=1, no bias).
    ref = lax.conv_general_dilated(
        jnp.maximum(x, 0.0), w,
        window_strides=(1, 1),
        padding=((PAD, PAD), (PAD, PAD)),
        dimension_numbers=("NCHW", "OIHW", "NCHW"),
        feature_group_count=576,
    )
    ref = jax.block_until_ready(ref)

    assert out.shape == (1, 576, 7, 7)
    err = float(jnp.max(jnp.abs(out - ref)))
    assert jnp.allclose(out, ref, atol=1e-4, rtol=1e-4), err
    print("KERNEL_OK")
</pallas_src>

<mosaic_0001>
module attributes {stable_mosaic.version = 11 : i64} {
  func.func @_relu_dwconv_kernel(%arg0: i32, %arg1: memref<1x7x7x5x128xf32, #tpu.memory_space<vmem>>, %arg2: memref<5x5x5x128xf32, #tpu.memory_space<vmem>>, %arg3: memref<1x7x7x5x128xf32, #tpu.memory_space<vmem>>, %arg4: memref<7x11x5x128xf32, #tpu.memory_space<vmem>>) attributes {dimension_semantics = [#tpu.dimension_semantics<parallel>], iteration_bounds = array<i64: 1>, scalar_prefetch = 0 : i64, scratch_operands = 1 : i64, tpu.core_type = #tpu.core_type<tc>, window_params = [{transform_indices = @transform_0, window_bounds = array<i64: 1, 7, 7, 5, 128>}, {pipeline_mode = #tpu.pipeline_mode<synchronous>, transform_indices = @transform_1, window_bounds = array<i64: 5, 5, 5, 128>}, {transform_indices = @transform_2, window_bounds = array<i64: 1, 7, 7, 5, 128>}]} {
    %cst = arith.constant 0.000000e+00 : f32
    %0 = vector.broadcast %cst : f32 to vector<7x2x5x128xf32>
    %c0 = arith.constant 0 : index
    %c0_0 = arith.constant 0 : index
    %c0_1 = arith.constant 0 : index
    %c0_2 = arith.constant 0 : index
    %1 = vector.load %arg4[%c0, %c0_0, %c0_1, %c0_2] : memref<7x11x5x128xf32, #tpu.memory_space<vmem>>, vector<7x2x5x128xf32>
    tpu.vector_store %arg4[%c0, %c0_0, %c0_1, %c0_2], %0 {strides = array<i32>} : memref<7x11x5x128xf32, #tpu.memory_space<vmem>>, vector<7x2x5x128xf32>,
    %c0_3 = arith.constant 0 : index
    %c9 = arith.constant 9 : index
    %c0_4 = arith.constant 0 : index
    %c0_5 = arith.constant 0 : index
    %2 = vector.load %arg4[%c0_3, %c9, %c0_4, %c0_5] : memref<7x11x5x128xf32, #tpu.memory_space<vmem>>, vector<7x2x5x128xf32>
    tpu.vector_store %arg4[%c0_3, %c9, %c0_4, %c0_5], %0 {strides = array<i32>} : memref<7x11x5x128xf32, #tpu.memory_space<vmem>>, vector<7x2x5x128xf32>,
    %c0_6 = arith.constant 0 : index
    %c0_7 = arith.constant 0 : index
    %c0_8 = arith.constant 0 : index
    %c0_9 = arith.constant 0 : index
    %c0_10 = arith.constant 0 : index
    %3 = vector.load %arg1[%c0_6, %c0_7, %c0_8, %c0_9, %c0_10] : memref<1x7x7x5x128xf32, #tpu.memory_space<vmem>>, vector<1x7x7x5x128xf32>
    %4 = vector.shape_cast %3 : vector<1x7x7x5x128xf32> to vector<7x7x5x128xf32>
    %cst_11 = arith.constant 0.000000e+00 : f32
    %5 = vector.broadcast %cst_11 : f32 to vector<7x7x5x128xf32>
    %6 = arith.maximumf %4, %5 : vector<7x7x5x128xf32>
    %c0_12 = arith.constant 0 : index
    %c2 = arith.constant 2 : index
    %c0_13 = arith.constant 0 : index
    %c0_14 = arith.constant 0 : index
    %7 = vector.load %arg4[%c0_12, %c2, %c0_13, %c0_14] : memref<7x11x5x128xf32, #tpu.memory_space<vmem>>, vector<7x7x5x128xf32>
    tpu.vector_store %arg4[%c0_12, %c2, %c0_13, %c0_14], %6 {strides = array<i32>} : memref<7x11x5x128xf32, #tpu.memory_space<vmem>>, vector<7x7x5x128xf32>,
    %cst_15 = arith.constant 0.000000e+00 : f32
    %8 = vector.broadcast %cst_15 : f32 to vector<7x5x128xf32>
    %c2_16 = arith.constant 2 : index
    %c0_17 = arith.constant 0 : index
    %c0_18 = arith.constant 0 : index
    %c0_19 = arith.constant 0 : index
    %9 = vector.load %arg2[%c2_16, %c0_17, %c0_18, %c0_19] : memref<5x5x5x128xf32, #tpu.memory_space<vmem>>, vector<1x5x5x128xf32>
    %10 = vector.shape_cast %9 : vector<1x5x5x128xf32> to vector<5x5x128xf32>
    %c0_20 = arith.constant 0 : index
    %c0_21 = arith.constant 0 : index
    %c0_22 = arith.constant 0 : index
    %c0_23 = arith.constant 0 : index
    %11 = vector.load %arg4[%c0_20, %c0_21, %c0_22, %c0_23] : memref<7x11x5x128xf32, #tpu.memory_space<vmem>>, vector<1x11x5x128xf32>
    %12 = vector.shape_cast %11 : vector<1x11x5x128xf32> to vector<11x5x128xf32>
    %13 = vector.extract_strided_slice %12 {offsets = [0, 0, 0], sizes = [7, 5, 128], strides = [1, 1, 1]} : vector<11x5x128xf32> to vector<7x5x128xf32>
    %14 = vector.extract_strided_slice %10 {offsets = [0, 0, 0], sizes = [1, 5, 128], strides = [1, 1, 1]} : vector<5x5x128xf32> to vector<1x5x128xf32>
    %15 = vector.shape_cast %14 : vector<1x5x128xf32> to vector<5x128xf32>
    %16 = vector.shape_cast %15 : vector<5x128xf32> to vector<1x5x128xf32>
    %17 = vector.broadcast %16 : vector<1x5x128xf32> to vector<7x5x128xf32>
    %18 = arith.mulf %13, %17 : vector<7x5x128xf32>
    %19 = arith.addf %8, %18 : vector<7x5x128xf32>
    %20 = vector.extract_strided_slice %12 {offsets = [1, 0, 0], sizes = [7, 5, 128], strides = [1, 1, 1]} : vector<11x5x128xf32> to vector<7x5x128xf32>
    %21 = vector.extract_strided_slice %10 {offsets = [1, 0, 0], sizes = [1, 5, 128], strides = [1, 1, 1]} : vector<5x5x128xf32> to vector<1x5x128xf32>
    %22 = vector.shape_cast %21 : vector<1x5x128xf32> to vector<5x128xf32>
    %23 = vector.shape_cast %22 : vector<5x128xf32> to vector<1x5x128xf32>
    %24 = vector.broadcast %23 : vector<1x5x128xf32> to vector<7x5x128xf32>
    %25 = arith.mulf %20, %24 : vector<7x5x128xf32>
    %26 = arith.addf %19, %25 : vector<7x5x128xf32>
    %27 = vector.extract_strided_slice %12 {offsets = [2, 0, 0], sizes = [7, 5, 128], strides = [1, 1, 1]} : vector<11x5x128xf32> to vector<7x5x128xf32>
    %28 = vector.extract_strided_slice %10 {offsets = [2, 0, 0], sizes = [1, 5, 128], strides = [1, 1, 1]} : vector<5x5x128xf32> to vector<1x5x128xf32>
    %29 = vector.shape_cast %28 : vector<1x5x128xf32> to vector<5x128xf32>
    %30 = vector.shape_cast %29 : vector<5x128xf32> to vector<1x5x128xf32>
    %31 = vector.broadcast %30 : vector<1x5x128xf32> to vector<7x5x128xf32>
    %32 = arith.mulf %27, %31 : vector<7x5x128xf32>
    %33 = arith.addf %26, %32 : vector<7x5x128xf32>
    %34 = vector.extract_strided_slice %12 {offsets = [3, 0, 0], sizes = [7, 5, 128], strides = [1, 1, 1]} : vector<11x5x128xf32> to vector<7x5x128xf32>
    %35 = vector.extract_strided_slice %10 {offsets = [3, 0, 0], sizes = [1, 5, 128], strides = [1, 1, 1]} : vector<5x5x128xf32> to vector<1x5x128xf32>
    %36 = vector.shape_cast %35 : vector<1x5x128xf32> to vector<5x128xf32>
    %37 = vector.shape_cast %36 : vector<5x128xf32> to vector<1x5x128xf32>
    %38 = vector.broadcast %37 : vector<1x5x128xf32> to vector<7x5x128xf32>
    %39 = arith.mulf %34, %38 : vector<7x5x128xf32>
    %40 = arith.addf %33, %39 : vector<7x5x128xf32>
    %41 = vector.extract_strided_slice %12 {offsets = [4, 0, 0], sizes = [7, 5, 128], strides = [1, 1, 1]} : vector<11x5x128xf32> to vector<7x5x128xf32>
    %42 = vector.extract_strided_slice %10 {offsets = [4, 0, 0], sizes = [1, 5, 128], strides = [1, 1, 1]} : vector<5x5x128xf32> to vector<1x5x128xf32>
    %43 = vector.shape_cast %42 : vector<1x5x128xf32> to vector<5x128xf32>
    %44 = vector.shape_cast %43 : vector<5x128xf32> to vector<1x5x128xf32>
    %45 = vector.broadcast %44 : vector<1x5x128xf32> to vector<7x5x128xf32>
    %46 = arith.mulf %41, %45 : vector<7x5x128xf32>
    %47 = arith.addf %40, %46 : vector<7x5x128xf32>
    %c3 = arith.constant 3 : index
    %c0_24 = arith.constant 0 : index
    %c0_25 = arith.constant 0 : index
    %c0_26 = arith.constant 0 : index
    %48 = vector.load %arg2[%c3, %c0_24, %c0_25, %c0_26] : memref<5x5x5x128xf32, #tpu.memory_space<vmem>>, vector<1x5x5x128xf32>
    %49 = vector.shape_cast %48 : vector<1x5x5x128xf32> to vector<5x5x128xf32>
    %c1 = arith.constant 1 : index
    %c0_27 = arith.constant 0 : index
    %c0_28 = arith.constant 0 : index
    %c0_29 = arith.constant 0 : index
    %50 = vector.load %arg4[%c1, %c0_27, %c0_28, %c0_29] : memref<7x11x5x128xf32, #tpu.memory_space<vmem>>, vector<1x11x5x128xf32>
    %51 = vector.shape_cast %50 : vector<1x11x5x128xf32> to vector<11x5x128xf32>
    %52 = vector.extract_strided_slice %51 {offsets = [0, 0, 0], sizes = [7, 5, 128], strides = [1, 1, 1]} : vector<11x5x128xf32> to vector<7x5x128xf32>
    %53 = vector.extract_strided_slice %49 {offsets = [0, 0, 0], sizes = [1, 5, 128], strides = [1, 1, 1]} : vector<5x5x128xf32> to vector<1x5x128xf32>
    %54 = vector.shape_cast %53 : vector<1x5x128xf32> to vector<5x128xf32>
    %55 = vector.shape_cast %54 : vector<5x128xf32> to vector<1x5x128xf32>
    %56 = vector.broadcast %55 : vector<1x5x128xf32> to vector<7x5x128xf32>
    %57 = arith.mulf %52, %56 : vector<7x5x128xf32>
    %58 = arith.addf %47, %57 : vector<7x5x128xf32>
    %59 = vector.extract_strided_slice %51 {offsets = [1, 0, 0], sizes = [7, 5, 128], strides = [1, 1, 1]} : vector<11x5x128xf32> to vector<7x5x128xf32>
    %60 = vector.extract_strided_slice %49 {offsets = [1, 0, 0], sizes = [1, 5, 128], strides = [1, 1, 1]} : vector<5x5x128xf32> to vector<1x5x128xf32>
    %61 = vector.shape_cast %60 : vector<1x5x128xf32> to vector<5x128xf32>
    %62 = vector.shape_cast %61 : vector<5x128xf32> to vector<1x5x128xf32>
    %63 = vector.broadcast %62 : vector<1x5x128xf32> to vector<7x5x128xf32>
    %64 = arith.mulf %59, %63 : vector<7x5x128xf32>
    %65 = arith.addf %58, %64 : vector<7x5x128xf32>
    %66 = vector.extract_strided_slice %51 {offsets = [2, 0, 0], sizes = [7, 5, 128], strides = [1, 1, 1]} : vector<11x5x128xf32> to vector<7x5x128xf32>
    %67 = vector.extract_strided_slice %49 {offsets = [2, 0, 0], sizes = [1, 5, 128], strides = [1, 1, 1]} : vector<5x5x128xf32> to vector<1x5x128xf32>
    %68 = vector.shape_cast %67 : vector<1x5x128xf32> to vector<5x128xf32>
    %69 = vector.shape_cast %68 : vector<5x128xf32> to vector<1x5x128xf32>
    %70 = vector.broadcast %69 : vector<1x5x128xf32> to vector<7x5x128xf32>
    %71 = arith.mulf %66, %70 : vector<7x5x128xf32>
    %72 = arith.addf %65, %71 : vector<7x5x128xf32>
    %73 = vector.extract_strided_slice %51 {offsets = [3, 0, 0], sizes = [7, 5, 128], strides = [1, 1, 1]} : vector<11x5x128xf32> to vector<7x5x128xf32>
    %74 = vector.extract_strided_slice %49 {offsets = [3, 0, 0], sizes = [1, 5, 128], strides = [1, 1, 1]} : vector<5x5x128xf32> to vector<1x5x128xf32>
    %75 = vector.shape_cast %74 : vector<1x5x128xf32> to vector<5x128xf32>
    %76 = vector.shape_cast %75 : vector<5x128xf32> to vector<1x5x128xf32>
    %77 = vector.broadcast %76 : vector<1x5x128xf32> to vector<7x5x128xf32>
    %78 = arith.mulf %73, %77 : vector<7x5x128xf32>
    %79 = arith.addf %72, %78 : vector<7x5x128xf32>
    %80 = vector.extract_strided_slice %51 {offsets = [4, 0, 0], sizes = [7, 5, 128], strides = [1, 1, 1]} : vector<11x5x128xf32> to vector<7x5x128xf32>
    %81 = vector.extract_strided_slice %49 {offsets = [4, 0, 0], sizes = [1, 5, 128], strides = [1, 1, 1]} : vector<5x5x128xf32> to vector<1x5x128xf32>
    %82 = vector.shape_cast %81 : vector<1x5x128xf32> to vector<5x128xf32>
    %83 = vector.shape_cast %82 : vector<5x128xf32> to vector<1x5x128xf32>
    %84 = vector.broadcast %83 : vector<1x5x128xf32> to vector<7x5x128xf32>
    %85 = arith.mulf %80, %84 : vector<7x5x128xf32>
    %86 = arith.addf %79, %85 : vector<7x5x128xf32>
    %c4 = arith.constant 4 : index
    %c0_30 = arith.constant 0 : index
    %c0_31 = arith.constant 0 : index
    %c0_32 = arith.constant 0 : index
    %87 = vector.load %arg2[%c4, %c0_30, %c0_31, %c0_32] : memref<5x5x5x128xf32, #tpu.memory_space<vmem>>, vector<1x5x5x128xf32>
    %88 = vector.shape_cast %87 : vector<1x5x5x128xf32> to vector<5x5x128xf32>
    %c2_33 = arith.constant 2 : index
    %c0_34 = arith.constant 0 : index
    %c0_35 = arith.constant 0 : index
    %c0_36 = arith.constant 0 : index
    %89 = vector.load %arg4[%c2_33, %c0_34, %c0_35, %c0_36] : memref<7x11x5x128xf32, #tpu.memory_space<vmem>>, vector<1x11x5x128xf32>
    %90 = vector.shape_cast %89 : vector<1x11x5x128xf32> to vector<11x5x128xf32>
    %91 = vector.extract_strided_slice %90 {offsets = [0, 0, 0], sizes = [7, 5, 128], strides = [1, 1, 1]} : vector<11x5x128xf32> to vector<7x5x128xf32>
    %92 = vector.extract_strided_slice %88 {offsets = [0, 0, 0], sizes = [1, 5, 128], strides = [1, 1, 1]} : vector<5x5x128xf32> to vector<1x5x128xf32>
    %93 = vector.shape_cast %92 : vector<1x5x128xf32> to vector<5x128xf32>
    %94 = vector.shape_cast %93 : vector<5x128xf32> to vector<1x5x128xf32>
    %95 = vector.broadcast %94 : vector<1x5x128xf32> to vector<7x5x128xf32>
    %96 = arith.mulf %91, %95 : vector<7x5x128xf32>
    %97 = arith.addf %86, %96 : vector<7x5x128xf32>
    %98 = vector.extract_strided_slice %90 {offsets = [1, 0, 0], sizes = [7, 5, 128], strides = [1, 1, 1]} : vector<11x5x128xf32> to vector<7x5x128xf32>
    %99 = vector.extract_strided_slice %88 {offsets = [1, 0, 0], sizes = [1, 5, 128], strides = [1, 1, 1]} : vector<5x5x128xf32> to vector<1x5x128xf32>
    %100 = vector.shape_cast %99 : vector<1x5x128xf32> to vector<5x128xf32>
    %101 = vector.shape_cast %100 : vector<5x128xf32> to vector<1x5x128xf32>
    %102 = vector.broadcast %101 : vector<1x5x128xf32> to vector<7x5x128xf32>
    %103 = arith.mulf %98, %102 : vector<7x5x128xf32>
    %104 = arith.addf %97, %103 : vector<7x5x128xf32>
    %105 = vector.extract_strided_slice %90 {offsets = [2, 0, 0], sizes = [7, 5, 128], strides = [1, 1, 1]} : vector<11x5x128xf32> to vector<7x5x128xf32>
    %106 = vector.extract_strided_slice %88 {offsets = [2, 0, 0], sizes = [1, 5, 128], strides = [1, 1, 1]} : vector<5x5x128xf32> to vector<1x5x128xf32>
    %107 = vector.shape_cast %106 : vector<1x5x128xf32> to vector<5x128xf32>
    %108 = vector.shape_cast %107 : vector<5x128xf32> to vector<1x5x128xf32>
    %109 = vector.broadcast %108 : vector<1x5x128xf32> to vector<7x5x128xf32>
    %110 = arith.mulf %105, %109 : vector<7x5x128xf32>
    %111 = arith.addf %104, %110 : vector<7x5x128xf32>
    %112 = vector.extract_strided_slice %90 {offsets = [3, 0, 0], sizes = [7, 5, 128], strides = [1, 1, 1]} : vector<11x5x128xf32> to vector<7x5x128xf32>
    %113 = vector.extract_strided_slice %88 {offsets = [3, 0, 0], sizes = [1, 5, 128], strides = [1, 1, 1]} : vector<5x5x128xf32> to vector<1x5x128xf32>
    %114 = vector.shape_cast %113 : vector<1x5x128xf32> to vector<5x128xf32>
    %115 = vector.shape_cast %114 : vector<5x128xf32> to vector<1x5x128xf32>
    %116 = vector.broadcast %115 : vector<1x5x128xf32> to vector<7x5x128xf32>
    %117 = arith.mulf %112, %116 : vector<7x5x128xf32>
    %118 = arith.addf %111, %117 : vector<7x5x128xf32>
    %119 = vector.extract_strided_slice %90 {offsets = [4, 0, 0], sizes = [7, 5, 128], strides = [1, 1, 1]} : vector<11x5x128xf32> to vector<7x5x128xf32>
    %120 = vector.extract_strided_slice %88 {offsets = [4, 0, 0], sizes = [1, 5, 128], strides = [1, 1, 1]} : vector<5x5x128xf32> to vector<1x5x128xf32>
    %121 = vector.shape_cast %120 : vector<1x5x128xf32> to vector<5x128xf32>
    %122 = vector.shape_cast %121 : vector<5x128xf32> to vector<1x5x128xf32>
    %123 = vector.broadcast %122 : vector<1x5x128xf32> to vector<7x5x128xf32>
    %124 = arith.mulf %119, %123 : vector<7x5x128xf32>
    %125 = arith.addf %118, %124 : vector<7x5x128xf32>
    %c0_37 = arith.constant 0 : index
    %c0_38 = arith.constant 0 : index
    %c0_39 = arith.constant 0 : index
    %c0_40 = arith.constant 0 : index
    %c0_41 = arith.constant 0 : index
    %126 = vector.load %arg3[%c0_37, %c0_38, %c0_39, %c0_40, %c0_41] : memref<1x7x7x5x128xf32, #tpu.memory_space<vmem>>, vector<1x1x7x5x128xf32>
    %127 = vector.shape_cast %126 : vector<1x1x7x5x128xf32> to vector<7x5x128xf32>
    %128 = vector.shape_cast %125 : vector<7x5x128xf32> to vector<1x1x7x5x128xf32>
    tpu.vector_store %arg3[%c0_37, %c0_38, %c0_39, %c0_40, %c0_41], %128 {strides = array<i32>} : memref<1x7x7x5x128xf32, #tpu.memory_space<vmem>>, vector<1x1x7x5x128xf32>,
    %cst_42 = arith.constant 0.000000e+00 : f32
    %129 = vector.broadcast %cst_42 : f32 to vector<7x5x128xf32>
    %c1_43 = arith.constant 1 : index
    %c0_44 = arith.constant 0 : index
    %c0_45 = arith.constant 0 : index
    %c0_46 = arith.constant 0 : index
    %130 = vector.load %arg2[%c1_43, %c0_44, %c0_45, %c0_46] : memref<5x5x5x128xf32, #tpu.memory_space<vmem>>, vector<1x5x5x128xf32>
    %131 = vector.shape_cast %130 : vector<1x5x5x128xf32> to vector<5x5x128xf32>
    %c0_47 = arith.constant 0 : index
    %c0_48 = arith.constant 0 : index
    %c0_49 = arith.constant 0 : index
    %c0_50 = arith.constant 0 : index
    %132 = vector.load %arg4[%c0_47, %c0_48, %c0_49, %c0_50] : memref<7x11x5x128xf32, #tpu.memory_space<vmem>>, vector<1x11x5x128xf32>
    %133 = vector.shape_cast %132 : vector<1x11x5x128xf32> to vector<11x5x128xf32>
    %134 = vector.extract_strided_slice %133 {offsets = [0, 0, 0], sizes = [7, 5, 128], strides = [1, 1, 1]} : vector<11x5x128xf32> to vector<7x5x128xf32>
    %135 = vector.extract_strided_slice %131 {offsets = [0, 0, 0], sizes = [1, 5, 128], strides = [1, 1, 1]} : vector<5x5x128xf32> to vector<1x5x128xf32>
    %136 = vector.shape_cast %135 : vector<1x5x128xf32> to vector<5x128xf32>
    %137 = vector.shape_cast %136 : vector<5x128xf32> to vector<1x5x128xf32>
    %138 = vector.broadcast %137 : vector<1x5x128xf32> to vector<7x5x128xf32>
    %139 = arith.mulf %134, %138 : vector<7x5x128xf32>
    %140 = arith.addf %129, %139 : vector<7x5x128xf32>
    %141 = vector.extract_strided_slice %133 {offsets = [1, 0, 0], sizes = [7, 5, 128], strides = [1, 1, 1]} : vector<11x5x128xf32> to vector<7x5x128xf32>
    %142 = vector.extract_strided_slice %131 {offsets = [1, 0, 0], sizes = [1, 5, 128], strides = [1, 1, 1]} : vector<5x5x128xf32> to vector<1x5x128xf32>
    %143 = vector.shape_cast %142 : vector<1x5x128xf32> to vector<5x128xf32>
    %144 = vector.shape_cast %143 : vector<5x128xf32> to vector<1x5x128xf32>
    %145 = vector.broadcast %144 : vector<1x5x128xf32> to vector<7x5x128xf32>
    %146 = arith.mulf %141, %145 : vector<7x5x128xf32>
    %147 = arith.addf %140, %146 : vector<7x5x128xf32>
    %148 = vector.extract_strided_slice %133 {offsets = [2, 0, 0], sizes = [7, 5, 128], strides = [1, 1, 1]} : vector<11x5x128xf32> to vector<7x5x128xf32>
    %149 = vector.extract_strided_slice %131 {offsets = [2, 0, 0], sizes = [1, 5, 128], strides = [1, 1, 1]} : vector<5x5x128xf32> to vector<1x5x128xf32>
    %150 = vector.shape_cast %149 : vector<1x5x128xf32> to vector<5x128xf32>
    %151 = vector.shape_cast %150 : vector<5x128xf32> to vector<1x5x128xf32>
    %152 = vector.broadcast %151 : vector<1x5x128xf32> to vector<7x5x128xf32>
    %153 = arith.mulf %148, %152 : vector<7x5x128xf32>
    %154 = arith.addf %147, %153 : vector<7x5x128xf32>
    %155 = vector.extract_strided_slice %133 {offsets = [3, 0, 0], sizes = [7, 5, 128], strides = [1, 1, 1]} : vector<11x5x128xf32> to vector<7x5x128xf32>
    %156 = vector.extract_strided_slice %131 {offsets = [3, 0, 0], sizes = [1, 5, 128], strides = [1, 1, 1]} : vector<5x5x128xf32> to vector<1x5x128xf32>
    %157 = vector.shape_cast %156 : vector<1x5x128xf32> to vector<5x128xf32>
    %158 = vector.shape_cast %157 : vector<5x128xf32> to vector<1x5x128xf32>
    %159 = vector.broadcast %158 : vector<1x5x128xf32> to vector<7x5x128xf32>
    %160 = arith.mulf %155, %159 : vector<7x5x128xf32>
    %161 = arith.addf %154, %160 : vector<7x5x128xf32>
    %162 = vector.extract_strided_slice %133 {offsets = [4, 0, 0], sizes = [7, 5, 128], strides = [1, 1, 1]} : vector<11x5x128xf32> to vector<7x5x128xf32>
    %163 = vector.extract_strided_slice %131 {offsets = [4, 0, 0], sizes = [1, 5, 128], strides = [1, 1, 1]} : vector<5x5x128xf32> to vector<1x5x128xf32>
    %164 = vector.shape_cast %163 : vector<1x5x128xf32> to vector<5x128xf32>
    %165 = vector.shape_cast %164 : vector<5x128xf32> to vector<1x5x128xf32>
    %166 = vector.broadcast %165 : vector<1x5x128xf32> to vector<7x5x128xf32>
    %167 = arith.mulf %162, %166 : vector<7x5x128xf32>
    %168 = arith.addf %161, %167 : vector<7x5x128xf32>
    %c2_51 = arith.constant 2 : index
    %c0_52 = arith.constant 0 : index
    %c0_53 = arith.constant 0 : index
    %c0_54 = arith.constant 0 : index
    %169 = vector.load %arg2[%c2_51, %c0_52, %c0_53, %c0_54] : memref<5x5x5x128xf32, #tpu.memory_space<vmem>>, vector<1x5x5x128xf32>
    %170 = vector.shape_cast %169 : vector<1x5x5x128xf32> to vector<5x5x128xf32>
    %c1_55 = arith.constant 1 : index
    %c0_56 = arith.constant 0 : index
    %c0_57 = arith.constant 0 : index
    %c0_58 = arith.constant 0 : index
    %171 = vector.load %arg4[%c1_55, %c0_56, %c0_57, %c0_58] : memref<7x11x5x128xf32, #tpu.memory_space<vmem>>, vector<1x11x5x128xf32>
    %172 = vector.shape_cast %171 : vector<1x11x5x128xf32> to vector<11x5x128xf32>
    %173 = vector.extract_strided_slice %172 {offsets = [0, 0, 0], sizes = [7, 5, 128], strides = [1, 1, 1]} : vector<11x5x128xf32> to vector<7x5x128xf32>
    %174 = vector.extract_strided_slice %170 {offsets = [0, 0, 0], sizes = [1, 5, 128], strides = [1, 1, 1]} : vector<5x5x128xf32> to vector<1x5x128xf32>
    %175 = vector.shape_cast %174 : vector<1x5x128xf32> to vector<5x128xf32>
    %176 = vector.shape_cast %175 : vector<5x128xf32> to vector<1x5x128xf32>
    %177 = vector.broadcast %176 : vector<1x5x128xf32> to vector<7x5x128xf32>
    %178 = arith.mulf %173, %177 : vector<7x5x128xf32>
    %179 = arith.addf %168, %178 : vector<7x5x128xf32>
    %180 = vector.extract_strided_slice %172 {offsets = [1, 0, 0], sizes = [7, 5, 128], strides = [1, 1, 1]} : vector<11x5x128xf32> to vector<7x5x128xf32>
    %181 = vector.extract_strided_slice %170 {offsets = [1, 0, 0], sizes = [1, 5, 128], strides = [1, 1, 1]} : vector<5x5x128xf32> to vector<1x5x128xf32>
    %182 = vector.shape_cast %181 : vector<1x5x128xf32> to vector<5x128xf32>
    %183 = vector.shape_cast %182 : vector<5x128xf32> to vector<1x5x128xf32>
    %184 = vector.broadcast %183 : vector<1x5x128xf32> to vector<7x5x128xf32>
    %185 = arith.mulf %180, %184 : vector<7x5x128xf32>
    %186 = arith.addf %179, %185 : vector<7x5x128xf32>
    %187 = vector.extract_strided_slice %172 {offsets = [2, 0, 0], sizes = [7, 5, 128], strides = [1, 1, 1]} : vector<11x5x128xf32> to vector<7x5x128xf32>
    %188 = vector.extract_strided_slice %170 {offsets = [2, 0, 0], sizes = [1, 5, 128], strides = [1, 1, 1]} : vector<5x5x128xf32> to vector<1x5x128xf32>
    %189 = vector.shape_cast %188 : vector<1x5x128xf32> to vector<5x128xf32>
    %190 = vector.shape_cast %189 : vector<5x128xf32> to vector<1x5x128xf32>
    %191 = vector.broadcast %190 : vector<1x5x128xf32> to vector<7x5x128xf32>
    %192 = arith.mulf %187, %191 : vector<7x5x128xf32>
    %193 = arith.addf %186, %192 : vector<7x5x128xf32>
    %194 = vector.extract_strided_slice %172 {offsets = [3, 0, 0], sizes = [7, 5, 128], strides = [1, 1, 1]} : vector<11x5x128xf32> to vector<7x5x128xf32>
    %195 = vector.extract_strided_slice %170 {offsets = [3, 0, 0], sizes = [1, 5, 128], strides = [1, 1, 1]} : vector<5x5x128xf32> to vector<1x5x128xf32>
    %196 = vector.shape_cast %195 : vector<1x5x128xf32> to vector<5x128xf32>
    %197 = vector.shape_cast %196 : vector<5x128xf32> to vector<1x5x128xf32>
    %198 = vector.broadcast %197 : vector<1x5x128xf32> to vector<7x5x128xf32>
    %199 = arith.mulf %194, %198 : vector<7x5x128xf32>
    %200 = arith.addf %193, %199 : vector<7x5x128xf32>
    %201 = vector.extract_strided_slice %172 {offsets = [4, 0, 0], sizes = [7, 5, 128], strides = [1, 1, 1]} : vector<11x5x128xf32> to vector<7x5x128xf32>
    %202 = vector.extract_strided_slice %170 {offsets = [4, 0, 0], sizes = [1, 5, 128], strides = [1, 1, 1]} : vector<5x5x128xf32> to vector<1x5x128xf32>
    %203 = vector.shape_cast %202 : vector<1x5x128xf32> to vector<5x128xf32>
    %204 = vector.shape_cast %203 : vector<5x128xf32> to vector<1x5x128xf32>
    %205 = vector.broadcast %204 : vector<1x5x128xf32> to vector<7x5x128xf32>
    %206 = arith.mulf %201, %205 : vector<7x5x128xf32>
    %207 = arith.addf %200, %206 : vector<7x5x128xf32>
    %c3_59 = arith.constant 3 : index
    %c0_60 = arith.constant 0 : index
    %c0_61 = arith.constant 0 : index
    %c0_62 = arith.constant 0 : index
    %208 = vector.load %arg2[%c3_59, %c0_60, %c0_61, %c0_62] : memref<5x5x5x128xf32, #tpu.memory_space<vmem>>, vector<1x5x5x128xf32>
    %209 = vector.shape_cast %208 : vector<1x5x5x128xf32> to vector<5x5x128xf32>
    %c2_63 = arith.constant 2 : index
    %c0_64 = arith.constant 0 : index
    %c0_65 = arith.constant 0 : index
    %c0_66 = arith.constant 0 : index
    %210 = vector.load %arg4[%c2_63, %c0_64, %c0_65, %c0_66] : memref<7x11x5x128xf32, #tpu.memory_space<vmem>>, vector<1x11x5x128xf32>
    %211 = vector.shape_cast %210 : vector<1x11x5x128xf32> to vector<11x5x128xf32>
    %212 = vector.extract_strided_slice %211 {offsets = [0, 0, 0], sizes = [7, 5, 128], strides = [1, 1, 1]} : vector<11x5x128xf32> to vector<7x5x128xf32>
    %213 = vector.extract_strided_slice %209 {offsets = [0, 0, 0], sizes = [1, 5, 128], strides = [1, 1, 1]} : vector<5x5x128xf32> to vector<1x5x128xf32>
    %214 = vector.shape_cast %213 : vector<1x5x128xf32> to vector<5x128xf32>
    %215 = vector.shape_cast %214 : vector<5x128xf32> to vector<1x5x128xf32>
    %216 = vector.broadcast %215 : vector<1x5x128xf32> to vector<7x5x128xf32>
    %217 = arith.mulf %212, %216 : vector<7x5x128xf32>
    %218 = arith.addf %207, %217 : vector<7x5x128xf32>
    %219 = vector.extract_strided_slice %211 {offsets = [1, 0, 0], sizes = [7, 5, 128], strides = [1, 1, 1]} : vector<11x5x128xf32> to vector<7x5x128xf32>
    %220 = vector.extract_strided_slice %209 {offsets = [1, 0, 0], sizes = [1, 5, 128], strides = [1, 1, 1]} : vector<5x5x128xf32> to vector<1x5x128xf32>
    %221 = vector.shape_cast %220 : vector<1x5x128xf32> to vector<5x128xf32>
    %222 = vector.shape_cast %221 : vector<5x128xf32> to vector<1x5x128xf32>
    %223 = vector.broadcast %222 : vector<1x5x128xf32> to vector<7x5x128xf32>
    %224 = arith.mulf %219, %223 : vector<7x5x128xf32>
    %225 = arith.addf %218, %224 : vector<7x5x128xf32>
    %226 = vector.extract_strided_slice %211 {offsets = [2, 0, 0], sizes = [7, 5, 128], strides = [1, 1, 1]} : vector<11x5x128xf32> to vector<7x5x128xf32>
    %227 = vector.extract_strided_slice %209 {offsets = [2, 0, 0], sizes = [1, 5, 128], strides = [1, 1, 1]} : vector<5x5x128xf32> to vector<1x5x128xf32>
    %228 = vector.shape_cast %227 : vector<1x5x128xf32> to vector<5x128xf32>
    %229 = vector.shape_cast %228 : vector<5x128xf32> to vector<1x5x128xf32>
    %230 = vector.broadcast %229 : vector<1x5x128xf32> to vector<7x5x128xf32>
    %231 = arith.mulf %226, %230 : vector<7x5x128xf32>
    %232 = arith.addf %225, %231 : vector<7x5x128xf32>
    %233 = vector.extract_strided_slice %211 {offsets = [3, 0, 0], sizes = [7, 5, 128], strides = [1, 1, 1]} : vector<11x5x128xf32> to vector<7x5x128xf32>
    %234 = vector.extract_strided_slice %209 {offsets = [3, 0, 0], sizes = [1, 5, 128], strides = [1, 1, 1]} : vector<5x5x128xf32> to vector<1x5x128xf32>
    %235 = vector.shape_cast %234 : vector<1x5x128xf32> to vector<5x128xf32>
    %236 = vector.shape_cast %235 : vector<5x128xf32> to vector<1x5x128xf32>
    %237 = vector.broadcast %236 : vector<1x5x128xf32> to vector<7x5x128xf32>
    %238 = arith.mulf %233, %237 : vector<7x5x128xf32>
    %239 = arith.addf %232, %238 : vector<7x5x128xf32>
    %240 = vector.extract_strided_slice %211 {offsets = [4, 0, 0], sizes = [7, 5, 128], strides = [1, 1, 1]} : vector<11x5x128xf32> to vector<7x5x128xf32>
    %241 = vector.extract_strided_slice %209 {offsets = [4, 0, 0], sizes = [1, 5, 128], strides = [1, 1, 1]} : vector<5x5x128xf32> to vector<1x5x128xf32>
    %242 = vector.shape_cast %241 : vector<1x5x128xf32> to vector<5x128xf32>
    %243 = vector.shape_cast %242 : vector<5x128xf32> to vector<1x5x128xf32>
    %244 = vector.broadcast %243 : vector<1x5x128xf32> to vector<7x5x128xf32>
    %245 = arith.mulf %240, %244 : vector<7x5x128xf32>
    %246 = arith.addf %239, %245 : vector<7x5x128xf32>
    %c4_67 = arith.constant 4 : index
    %c0_68 = arith.constant 0 : index
    %c0_69 = arith.constant 0 : index
    %c0_70 = arith.constant 0 : index
    %247 = vector.load %arg2[%c4_67, %c0_68, %c0_69, %c0_70] : memref<5x5x5x128xf32, #tpu.memory_space<vmem>>, vector<1x5x5x128xf32>
    %248 = vector.shape_cast %247 : vector<1x5x5x128xf32> to vector<5x5x128xf32>
    %c3_71 = arith.constant 3 : index
    %c0_72 = arith.constant 0 : index
    %c0_73 = arith.constant 0 : index
    %c0_74 = arith.constant 0 : index
    %249 = vector.load %arg4[%c3_71, %c0_72, %c0_73, %c0_74] : memref<7x11x5x128xf32, #tpu.memory_space<vmem>>, vector<1x11x5x128xf32>
    %250 = vector.shape_cast %249 : vector<1x11x5x128xf32> to vector<11x5x128xf32>
    %251 = vector.extract_strided_slice %250 {offsets = [0, 0, 0], sizes = [7, 5, 128], strides = [1, 1, 1]} : vector<11x5x128xf32> to vector<7x5x128xf32>
    %252 = vector.extract_strided_slice %248 {offsets = [0, 0, 0], sizes = [1, 5, 128], strides = [1, 1, 1]} : vector<5x5x128xf32> to vector<1x5x128xf32>
    %253 = vector.shape_cast %252 : vector<1x5x128xf32> to vector<5x128xf32>
    %254 = vector.shape_cast %253 : vector<5x128xf32> to vector<1x5x128xf32>
    %255 = vector.broadcast %254 : vector<1x5x128xf32> to vector<7x5x128xf32>
    %256 = arith.mulf %251, %255 : vector<7x5x128xf32>
    %257 = arith.addf %246, %256 : vector<7x5x128xf32>
    %258 = vector.extract_strided_slice %250 {offsets = [1, 0, 0], sizes = [7, 5, 128], strides = [1, 1, 1]} : vector<11x5x128xf32> to vector<7x5x128xf32>
    %259 = vector.extract_strided_slice %248 {offsets = [1, 0, 0], sizes = [1, 5, 128], strides = [1, 1, 1]} : vector<5x5x128xf32> to vector<1x5x128xf32>
    %260 = vector.shape_cast %259 : vector<1x5x128xf32> to vector<5x128xf32>
    %261 = vector.shape_cast %260 : vector<5x128xf32> to vector<1x5x128xf32>
    %262 = vector.broadcast %261 : vector<1x5x128xf32> to vector<7x5x128xf32>
    %263 = arith.mulf %258, %262 : vector<7x5x128xf32>
    %264 = arith.addf %257, %263 : vector<7x5x128xf32>
    %265 = vector.extract_strided_slice %250 {offsets = [2, 0, 0], sizes = [7, 5, 128], strides = [1, 1, 1]} : vector<11x5x128xf32> to vector<7x5x128xf32>
    %266 = vector.extract_strided_slice %248 {offsets = [2, 0, 0], sizes = [1, 5, 128], strides = [1, 1, 1]} : vector<5x5x128xf32> to vector<1x5x128xf32>
    %267 = vector.shape_cast %266 : vector<1x5x128xf32> to vector<5x128xf32>
    %268 = vector.shape_cast %267 : vector<5x128xf32> to vector<1x5x128xf32>
    %269 = vector.broadcast %268 : vector<1x5x128xf32> to vector<7x5x128xf32>
    %270 = arith.mulf %265, %269 : vector<7x5x128xf32>
    %271 = arith.addf %264, %270 : vector<7x5x128xf32>
    %272 = vector.extract_strided_slice %250 {offsets = [3, 0, 0], sizes = [7, 5, 128], strides = [1, 1, 1]} : vector<11x5x128xf32> to vector<7x5x128xf32>
    %273 = vector.extract_strided_slice %248 {offsets = [3, 0, 0], sizes = [1, 5, 128], strides = [1, 1, 1]} : vector<5x5x128xf32> to vector<1x5x128xf32>
    %274 = vector.shape_cast %273 : vector<1x5x128xf32> to vector<5x128xf32>
    %275 = vector.shape_cast %274 : vector<5x128xf32> to vector<1x5x128xf32>
    %276 = vector.broadcast %275 : vector<1x5x128xf32> to vector<7x5x128xf32>
    %277 = arith.mulf %272, %276 : vector<7x5x128xf32>
    %278 = arith.addf %271, %277 : vector<7x5x128xf32>
    %279 = vector.extract_strided_slice %250 {offsets = [4, 0, 0], sizes = [7, 5, 128], strides = [1, 1, 1]} : vector<11x5x128xf32> to vector<7x5x128xf32>
    %280 = vector.extract_strided_slice %248 {offsets = [4, 0, 0], sizes = [1, 5, 128], strides = [1, 1, 1]} : vector<5x5x128xf32> to vector<1x5x128xf32>
    %281 = vector.shape_cast %280 : vector<1x5x128xf32> to vector<5x128xf32>
    %282 = vector.shape_cast %281 : vector<5x128xf32> to vector<1x5x128xf32>
    %283 = vector.broadcast %282 : vector<1x5x128xf32> to vector<7x5x128xf32>
    %284 = arith.mulf %279, %283 : vector<7x5x128xf32>
    %285 = arith.addf %278, %284 : vector<7x5x128xf32>
    %c0_75 = arith.constant 0 : index
    %c1_76 = arith.constant 1 : index
    %c0_77 = arith.constant 0 : index
    %c0_78 = arith.constant 0 : index
    %c0_79 = arith.constant 0 : index
    %286 = vector.load %arg3[%c0_75, %c1_76, %c0_77, %c0_78, %c0_79] : memref<1x7x7x5x128xf32, #tpu.memory_space<vmem>>, vector<1x1x7x5x128xf32>
    %287 = vector.shape_cast %286 : vector<1x1x7x5x128xf32> to vector<7x5x128xf32>
    %288 = vector.shape_cast %285 : vector<7x5x128xf32> to vector<1x1x7x5x128xf32>
    tpu.vector_store %arg3[%c0_75, %c1_76, %c0_77, %c0_78, %c0_79], %288 {strides = array<i32>} : memref<1x7x7x5x128xf32, #tpu.memory_space<vmem>>, vector<1x1x7x5x128xf32>,
    %cst_80 = arith.constant 0.000000e+00 : f32
    %289 = vector.broadcast %cst_80 : f32 to vector<7x5x128xf32>
    %c0_81 = arith.constant 0 : index
    %c0_82 = arith.constant 0 : index
    %c0_83 = arith.constant 0 : index
    %c0_84 = arith.constant 0 : index
    %290 = vector.load %arg2[%c0_81, %c0_82, %c0_83, %c0_84] : memref<5x5x5x128xf32, #tpu.memory_space<vmem>>, vector<1x5x5x128xf32>
    %291 = vector.shape_cast %290 : vector<1x5x5x128xf32> to vector<5x5x128xf32>
    %c0_85 = arith.constant 0 : index
    %c0_86 = arith.constant 0 : index
    %c0_87 = arith.constant 0 : index
    %c0_88 = arith.constant 0 : index
    %292 = vector.load %arg4[%c0_85, %c0_86, %c0_87, %c0_88] : memref<7x11x5x128xf32, #tpu.memory_space<vmem>>, vector<1x11x5x128xf32>
    %293 = vector.shape_cast %292 : vector<1x11x5x128xf32> to vector<11x5x128xf32>
    %294 = vector.extract_strided_slice %293 {offsets = [0, 0, 0], sizes = [7, 5, 128], strides = [1, 1, 1]} : vector<11x5x128xf32> to vector<7x5x128xf32>
    %295 = vector.extract_strided_slice %291 {offsets = [0, 0, 0], sizes = [1, 5, 128], strides = [1, 1, 1]} : vector<5x5x128xf32> to vector<1x5x128xf32>
    %296 = vector.shape_cast %295 : vector<1x5x128xf32> to vector<5x128xf32>
    %297 = vector.shape_cast %296 : vector<5x128xf32> to vector<1x5x128xf32>
    %298 = vector.broadcast %297 : vector<1x5x128xf32> to vector<7x5x128xf32>
    %299 = arith.mulf %294, %298 : vector<7x5x128xf32>
    %300 = arith.addf %289, %299 : vector<7x5x128xf32>
    %301 = vector.extract_strided_slice %293 {offsets = [1, 0, 0], sizes = [7, 5, 128], strides = [1, 1, 1]} : vector<11x5x128xf32> to vector<7x5x128xf32>
    %302 = vector.extract_strided_slice %291 {offsets = [1, 0, 0], sizes = [1, 5, 128], strides = [1, 1, 1]} : vector<5x5x128xf32> to vector<1x5x128xf32>
    %303 = vector.shape_cast %302 : vector<1x5x128xf32> to vector<5x128xf32>
    %304 = vector.shape_cast %303 : vector<5x128xf32> to vector<1x5x128xf32>
    %305 = vector.broadcast %304 : vector<1x5x128xf32> to vector<7x5x128xf32>
    %306 = arith.mulf %301, %305 : vector<7x5x128xf32>
    %307 = arith.addf %300, %306 : vector<7x5x128xf32>
    %308 = vector.extract_strided_slice %293 {offsets = [2, 0, 0], sizes = [7, 5, 128], strides = [1, 1, 1]} : vector<11x5x128xf32> to vector<7x5x128xf32>
    %309 = vector.extract_strided_slice %291 {offsets = [2, 0, 0], sizes = [1, 5, 128], strides = [1, 1, 1]} : vector<5x5x128xf32> to vector<1x5x128xf32>
    %310 = vector.shape_cast %309 : vector<1x5x128xf32> to vector<5x128xf32>
    %311 = vector.shape_cast %310 : vector<5x128xf32> to vector<1x5x128xf32>
    %312 = vector.broadcast %311 : vector<1x5x128xf32> to vector<7x5x128xf32>
    %313 = arith.mulf %308, %312 : vector<7x5x128xf32>
    %314 = arith.addf %307, %313 : vector<7x5x128xf32>
    %315 = vector.extract_strided_slice %293 {offsets = [3, 0, 0], sizes = [7, 5, 128], strides = [1, 1, 1]} : vector<11x5x128xf32> to vector<7x5x128xf32>
    %316 = vector.extract_strided_slice %291 {offsets = [3, 0, 0], sizes = [1, 5, 128], strides = [1, 1, 1]} : vector<5x5x128xf32> to vector<1x5x128xf32>
    %317 = vector.shape_cast %316 : vector<1x5x128xf32> to vector<5x128xf32>
    %318 = vector.shape_cast %317 : vector<5x128xf32> to vector<1x5x128xf32>
    %319 = vector.broadcast %318 : vector<1x5x128xf32> to vector<7x5x128xf32>
    %320 = arith.mulf %315, %319 : vector<7x5x128xf32>
    %321 = arith.addf %314, %320 : vector<7x5x128xf32>
    %322 = vector.extract_strided_slice %293 {offsets = [4, 0, 0], sizes = [7, 5, 128], strides = [1, 1, 1]} : vector<11x5x128xf32> to vector<7x5x128xf32>
    %323 = vector.extract_strided_slice %291 {offsets = [4, 0, 0], sizes = [1, 5, 128], strides = [1, 1, 1]} : vector<5x5x128xf32> to vector<1x5x128xf32>
    %324 = vector.shape_cast %323 : vector<1x5x128xf32> to vector<5x128xf32>
    %325 = vector.shape_cast %324 : vector<5x128xf32> to vector<1x5x128xf32>
    %326 = vector.broadcast %325 : vector<1x5x128xf32> to vector<7x5x128xf32>
    %327 = arith.mulf %322, %326 : vector<7x5x128xf32>
    %328 = arith.addf %321, %327 : vector<7x5x128xf32>
    %c1_89 = arith.constant 1 : index
    %c0_90 = arith.constant 0 : index
    %c0_91 = arith.constant 0 : index
    %c0_92 = arith.constant 0 : index
    %329 = vector.load %arg2[%c1_89, %c0_90, %c0_91, %c0_92] : memref<5x5x5x128xf32, #tpu.memory_space<vmem>>, vector<1x5x5x128xf32>
    %330 = vector.shape_cast %329 : vector<1x5x5x128xf32> to vector<5x5x128xf32>
    %c1_93 = arith.constant 1 : index
    %c0_94 = arith.constant 0 : index
    %c0_95 = arith.constant 0 : index
    %c0_96 = arith.constant 0 : index
    %331 = vector.load %arg4[%c1_93, %c0_94, %c0_95, %c0_96] : memref<7x11x5x128xf32, #tpu.memory_space<vmem>>, vector<1x11x5x128xf32>
    %332 = vector.shape_cast %331 : vector<1x11x5x128xf32> to vector<11x5x128xf32>
    %333 = vector.extract_strided_slice %332 {offsets = [0, 0, 0], sizes = [7, 5, 128], strides = [1, 1, 1]} : vector<11x5x128xf32> to vector<7x5x128xf32>
    %334 = vector.extract_strided_slice %330 {offsets = [0, 0, 0], sizes = [1, 5, 128], strides = [1, 1, 1]} : vector<5x5x128xf32> to vector<1x5x128xf32>
    %335 = vector.shape_cast %334 : vector<1x5x128xf32> to vector<5x128xf32>
    %336 = vector.shape_cast %335 : vector<5x128xf32> to vector<1x5x128xf32>
    %337 = vector.broadcast %336 : vector<1x5x128xf32> to vector<7x5x128xf32>
    %338 = arith.mulf %333, %337 : vector<7x5x128xf32>
    %339 = arith.addf %328, %338 : vector<7x5x128xf32>
    %340 = vector.extract_strided_slice %332 {offsets = [1, 0, 0], sizes = [7, 5, 128], strides = [1, 1, 1]} : vector<11x5x128xf32> to vector<7x5x128xf32>
    %341 = vector.extract_strided_slice %330 {offsets = [1, 0, 0], sizes = [1, 5, 128], strides = [1, 1, 1]} : vector<5x5x128xf32> to vector<1x5x128xf32>
    %342 = vector.shape_cast %341 : vector<1x5x128xf32> to vector<5x128xf32>
    %343 = vector.shape_cast %342 : vector<5x128xf32> to vector<1x5x128xf32>
    %344 = vector.broadcast %343 : vector<1x5x128xf32> to vector<7x5x128xf32>
    %345 = arith.mulf %340, %344 : vector<7x5x128xf32>
    %346 = arith.addf %339, %345 : vector<7x5x128xf32>
    %347 = vector.extract_strided_slice %332 {offsets = [2, 0, 0], sizes = [7, 5, 128], strides = [1, 1, 1]} : vector<11x5x128xf32> to vector<7x5x128xf32>
    %348 = vector.extract_strided_slice %330 {offsets = [2, 0, 0], sizes = [1, 5, 128], strides = [1, 1, 1]} : vector<5x5x128xf32> to vector<1x5x128xf32>
    %349 = vector.shape_cast %348 : vector<1x5x128xf32> to vector<5x128xf32>
    %350 = vector.shape_cast %349 : vector<5x128xf32> to vector<1x5x128xf32>
    %351 = vector.broadcast %350 : vector<1x5x128xf32> to vector<7x5x128xf32>
    %352 = arith.mulf %347, %351 : vector<7x5x128xf32>
    %353 = arith.addf %346, %352 : vector<7x5x128xf32>
    %354 = vector.extract_strided_slice %332 {offsets = [3, 0, 0], sizes = [7, 5, 128], strides = [1, 1, 1]} : vector<11x5x128xf32> to vector<7x5x128xf32>
    %355 = vector.extract_strided_slice %330 {offsets = [3, 0, 0], sizes = [1, 5, 128], strides = [1, 1, 1]} : vector<5x5x128xf32> to vector<1x5x128xf32>
    %356 = vector.shape_cast %355 : vector<1x5x128xf32> to vector<5x128xf32>
    %357 = vector.shape_cast %356 : vector<5x128xf32> to vector<1x5x128xf32>
    %358 = vector.broadcast %357 : vector<1x5x128xf32> to vector<7x5x128xf32>
    %359 = arith.mulf %354, %358 : vector<7x5x128xf32>
    %360 = arith.addf %353, %359 : vector<7x5x128xf32>
    %361 = vector.extract_strided_slice %332 {offsets = [4, 0, 0], sizes = [7, 5, 128], strides = [1, 1, 1]} : vector<11x5x128xf32> to vector<7x5x128xf32>
    %362 = vector.extract_strided_slice %330 {offsets = [4, 0, 0], sizes = [1, 5, 128], strides = [1, 1, 1]} : vector<5x5x128xf32> to vector<1x5x128xf32>
    %363 = vector.shape_cast %362 : vector<1x5x128xf32> to vector<5x128xf32>
    %364 = vector.shape_cast %363 : vector<5x128xf32> to vector<1x5x128xf32>
    %365 = vector.broadcast %364 : vector<1x5x128xf32> to vector<7x5x128xf32>
    %366 = arith.mulf %361, %365 : vector<7x5x128xf32>
    %367 = arith.addf %360, %366 : vector<7x5x128xf32>
    %c2_97 = arith.constant 2 : index
    %c0_98 = arith.constant 0 : index
    %c0_99 = arith.constant 0 : index
    %c0_100 = arith.constant 0 : index
    %368 = vector.load %arg2[%c2_97, %c0_98, %c0_99, %c0_100] : memref<5x5x5x128xf32, #tpu.memory_space<vmem>>, vector<1x5x5x128xf32>
    %369 = vector.shape_cast %368 : vector<1x5x5x128xf32> to vector<5x5x128xf32>
    %c2_101 = arith.constant 2 : index
    %c0_102 = arith.constant 0 : index
    %c0_103 = arith.constant 0 : index
    %c0_104 = arith.constant 0 : index
    %370 = vector.load %arg4[%c2_101, %c0_102, %c0_103, %c0_104] : memref<7x11x5x128xf32, #tpu.memory_space<vmem>>, vector<1x11x5x128xf32>
    %371 = vector.shape_cast %370 : vector<1x11x5x128xf32> to vector<11x5x128xf32>
    %372 = vector.extract_strided_slice %371 {offsets = [0, 0, 0], sizes = [7, 5, 128], strides = [1, 1, 1]} : vector<11x5x128xf32> to vector<7x5x128xf32>
    %373 = vector.extract_strided_slice %369 {offsets = [0, 0, 0], sizes = [1, 5, 128], strides = [1, 1, 1]} : vector<5x5x128xf32> to vector<1x5x128xf32>
    %374 = vector.shape_cast %373 : vector<1x5x128xf32> to vector<5x128xf32>
    %375 = vector.shape_cast %374 : vector<5x128xf32> to vector<1x5x128xf32>
    %376 = vector.broadcast %375 : vector<1x5x128xf32> to vector<7x5x128xf32>
    %377 = arith.mulf %372, %376 : vector<7x5x128xf32>
    %378 = arith.addf %367, %377 : vector<7x5x128xf32>
    %379 = vector.extract_strided_slice %371 {offsets = [1, 0, 0], sizes = [7, 5, 128], strides = [1, 1, 1]} : vector<11x5x128xf32> to vector<7x5x128xf32>
    %380 = vector.extract_strided_slice %369 {offsets = [1, 0, 0], sizes = [1, 5, 128], strides = [1, 1, 1]} : vector<5x5x128xf32> to vector<1x5x128xf32>
    %381 = vector.shape_cast %380 : vector<1x5x128xf32> to vector<5x128xf32>
    %382 = vector.shape_cast %381 : vector<5x128xf32> to vector<1x5x128xf32>
    %383 = vector.broadcast %382 : vector<1x5x128xf32> to vector<7x5x128xf32>
    %384 = arith.mulf %379, %383 : vector<7x5x128xf32>
    %385 = arith.addf %378, %384 : vector<7x5x128xf32>
    %386 = vector.extract_strided_slice %371 {offsets = [2, 0, 0], sizes = [7, 5, 128], strides = [1, 1, 1]} : vector<11x5x128xf32> to vector<7x5x128xf32>
    %387 = vector.extract_strided_slice %369 {offsets = [2, 0, 0], sizes = [1, 5, 128], strides = [1, 1, 1]} : vector<5x5x128xf32> to vector<1x5x128xf32>
    %388 = vector.shape_cast %387 : vector<1x5x128xf32> to vector<5x128xf32>
    %389 = vector.shape_cast %388 : vector<5x128xf32> to vector<1x5x128xf32>
    %390 = vector.broadcast %389 : vector<1x5x128xf32> to vector<7x5x128xf32>
    %391 = arith.mulf %386, %390 : vector<7x5x128xf32>
    %392 = arith.addf %385, %391 : vector<7x5x128xf32>
    %393 = vector.extract_strided_slice %371 {offsets = [3, 0, 0], sizes = [7, 5, 128], strides = [1, 1, 1]} : vector<11x5x128xf32> to vector<7x5x128xf32>
    %394 = vector.extract_strided_slice %369 {offsets = [3, 0, 0], sizes = [1, 5, 128], strides = [1, 1, 1]} : vector<5x5x128xf32> to vector<1x5x128xf32>
    %395 = vector.shape_cast %394 : vector<1x5x128xf32> to vector<5x128xf32>
    %396 = vector.shape_cast %395 : vector<5x128xf32> to vector<1x5x128xf32>
    %397 = vector.broadcast %396 : vector<1x5x128xf32> to vector<7x5x128xf32>
    %398 = arith.mulf %393, %397 : vector<7x5x128xf32>
    %399 = arith.addf %392, %398 : vector<7x5x128xf32>
    %400 = vector.extract_strided_slice %371 {offsets = [4, 0, 0], sizes = [7, 5, 128], strides = [1, 1, 1]} : vector<11x5x128xf32> to vector<7x5x128xf32>
    %401 = vector.extract_strided_slice %369 {offsets = [4, 0, 0], sizes = [1, 5, 128], strides = [1, 1, 1]} : vector<5x5x128xf32> to vector<1x5x128xf32>
    %402 = vector.shape_cast %401 : vector<1x5x128xf32> to vector<5x128xf32>
    %403 = vector.shape_cast %402 : vector<5x128xf32> to vector<1x5x128xf32>
    %404 = vector.broadcast %403 : vector<1x5x128xf32> to vector<7x5x128xf32>
    %405 = arith.mulf %400, %404 : vector<7x5x128xf32>
    %406 = arith.addf %399, %405 : vector<7x5x128xf32>
    %c3_105 = arith.constant 3 : index
    %c0_106 = arith.constant 0 : index
    %c0_107 = arith.constant 0 : index
    %c0_108 = arith.constant 0 : index
    %407 = vector.load %arg2[%c3_105, %c0_106, %c0_107, %c0_108] : memref<5x5x5x128xf32, #tpu.memory_space<vmem>>, vector<1x5x5x128xf32>
    %408 = vector.shape_cast %407 : vector<1x5x5x128xf32> to vector<5x5x128xf32>
    %c3_109 = arith.constant 3 : index
    %c0_110 = arith.constant 0 : index
    %c0_111 = arith.constant 0 : index
    %c0_112 = arith.constant 0 : index
    %409 = vector.load %arg4[%c3_109, %c0_110, %c0_111, %c0_112] : memref<7x11x5x128xf32, #tpu.memory_space<vmem>>, vector<1x11x5x128xf32>
    %410 = vector.shape_cast %409 : vector<1x11x5x128xf32> to vector<11x5x128xf32>
    %411 = vector.extract_strided_slice %410 {offsets = [0, 0, 0], sizes = [7, 5, 128], strides = [1, 1, 1]} : vector<11x5x128xf32> to vector<7x5x128xf32>
    %412 = vector.extract_strided_slice %408 {offsets = [0, 0, 0], sizes = [1, 5, 128], strides = [1, 1, 1]} : vector<5x5x128xf32> to vector<1x5x128xf32>
    %413 = vector.shape_cast %412 : vector<1x5x128xf32> to vector<5x128xf32>
    %414 = vector.shape_cast %413 : vector<5x128xf32> to vector<1x5x128xf32>
    %415 = vector.broadcast %414 : vector<1x5x128xf32> to vector<7x5x128xf32>
    %416 = arith.mulf %411, %415 : vector<7x5x128xf32>
    %417 = arith.addf %406, %416 : vector<7x5x128xf32>
    %418 = vector.extract_strided_slice %410 {offsets = [1, 0, 0], sizes = [7, 5, 128], strides = [1, 1, 1]} : vector<11x5x128xf32> to vector<7x5x128xf32>
    %419 = vector.extract_strided_slice %408 {offsets = [1, 0, 0], sizes = [1, 5, 128], strides = [1, 1, 1]} : vector<5x5x128xf32> to vector<1x5x128xf32>
    %420 = vector.shape_cast %419 : vector<1x5x128xf32> to vector<5x128xf32>
    %421 = vector.shape_cast %420 : vector<5x128xf32> to vector<1x5x128xf32>
    %422 = vector.broadcast %421 : vector<1x5x128xf32> to vector<7x5x128xf32>
    %423 = arith.mulf %418, %422 : vector<7x5x128xf32>
    %424 = arith.addf %417, %423 : vector<7x5x128xf32>
    %425 = vector.extract_strided_slice %410 {offsets = [2, 0, 0], sizes = [7, 5, 128], strides = [1, 1, 1]} : vector<11x5x128xf32> to vector<7x5x128xf32>
    %426 = vector.extract_strided_slice %408 {offsets = [2, 0, 0], sizes = [1, 5, 128], strides = [1, 1, 1]} : vector<5x5x128xf32> to vector<1x5x128xf32>
    %427 = vector.shape_cast %426 : vector<1x5x128xf32> to vector<5x128xf32>
    %428 = vector.shape_cast %427 : vector<5x128xf32> to vector<1x5x128xf32>
    %429 = vector.broadcast %428 : vector<1x5x128xf32> to vector<7x5x128xf32>
    %430 = arith.mulf %425, %429 : vector<7x5x128xf32>
    %431 = arith.addf %424, %430 : vector<7x5x128xf32>
    %432 = vector.extract_strided_slice %410 {offsets = [3, 0, 0], sizes = [7, 5, 128], strides = [1, 1, 1]} : vector<11x5x128xf32> to vector<7x5x128xf32>
    %433 = vector.extract_strided_slice %408 {offsets = [3, 0, 0], sizes = [1, 5, 128], strides = [1, 1, 1]} : vector<5x5x128xf32> to vector<1x5x128xf32>
    %434 = vector.shape_cast %433 : vector<1x5x128xf32> to vector<5x128xf32>
    %435 = vector.shape_cast %434 : vector<5x128xf32> to vector<1x5x128xf32>
    %436 = vector.broadcast %435 : vector<1x5x128xf32> to vector<7x5x128xf32>
    %437 = arith.mulf %432, %436 : vector<7x5x128xf32>
    %438 = arith.addf %431, %437 : vector<7x5x128xf32>
    %439 = vector.extract_strided_slice %410 {offsets = [4, 0, 0], sizes = [7, 5, 128], strides = [1, 1, 1]} : vector<11x5x128xf32> to vector<7x5x128xf32>
    %440 = vector.extract_strided_slice %408 {offsets = [4, 0, 0], sizes = [1, 5, 128], strides = [1, 1, 1]} : vector<5x5x128xf32> to vector<1x5x128xf32>
    %441 = vector.shape_cast %440 : vector<1x5x128xf32> to vector<5x128xf32>
    %442 = vector.shape_cast %441 : vector<5x128xf32> to vector<1x5x128xf32>
    %443 = vector.broadcast %442 : vector<1x5x128xf32> to vector<7x5x128xf32>
    %444 = arith.mulf %439, %443 : vector<7x5x128xf32>
    %445 = arith.addf %438, %444 : vector<7x5x128xf32>
    %c4_113 = arith.constant 4 : index
    %c0_114 = arith.constant 0 : index
    %c0_115 = arith.constant 0 : index
    %c0_116 = arith.constant 0 : index
    %446 = vector.load %arg2[%c4_113, %c0_114, %c0_115, %c0_116] : memref<5x5x5x128xf32, #tpu.memory_space<vmem>>, vector<1x5x5x128xf32>
    %447 = vector.shape_cast %446 : vector<1x5x5x128xf32> to vector<5x5x128xf32>
    %c4_117 = arith.constant 4 : index
    %c0_118 = arith.constant 0 : index
    %c0_119 = arith.constant 0 : index
    %c0_120 = arith.constant 0 : index
    %448 = vector.load %arg4[%c4_117, %c0_118, %c0_119, %c0_120] : memref<7x11x5x128xf32, #tpu.memory_space<vmem>>, vector<1x11x5x128xf32>
    %449 = vector.shape_cast %448 : vector<1x11x5x128xf32> to vector<11x5x128xf32>
    %450 = vector.extract_strided_slice %449 {offsets = [0, 0, 0], sizes = [7, 5, 128], strides = [1, 1, 1]} : vector<11x5x128xf32> to vector<7x5x128xf32>
    %451 = vector.extract_strided_slice %447 {offsets = [0, 0, 0], sizes = [1, 5, 128], strides = [1, 1, 1]} : vector<5x5x128xf32> to vector<1x5x128xf32>
    %452 = vector.shape_cast %451 : vector<1x5x128xf32> to vector<5x128xf32>
    %453 = vector.shape_cast %452 : vector<5x128xf32> to vector<1x5x128xf32>
    %454 = vector.broadcast %453 : vector<1x5x128xf32> to vector<7x5x128xf32>
    %455 = arith.mulf %450, %454 : vector<7x5x128xf32>
    %456 = arith.addf %445, %455 : vector<7x5x128xf32>
    %457 = vector.extract_strided_slice %449 {offsets = [1, 0, 0], sizes = [7, 5, 128], strides = [1, 1, 1]} : vector<11x5x128xf32> to vector<7x5x128xf32>
    %458 = vector.extract_strided_slice %447 {offsets = [1, 0, 0], sizes = [1, 5, 128], strides = [1, 1, 1]} : vector<5x5x128xf32> to vector<1x5x128xf32>
    %459 = vector.shape_cast %458 : vector<1x5x128xf32> to vector<5x128xf32>
    %460 = vector.shape_cast %459 : vector<5x128xf32> to vector<1x5x128xf32>
    %461 = vector.broadcast %460 : vector<1x5x128xf32> to vector<7x5x128xf32>
    %462 = arith.mulf %457, %461 : vector<7x5x128xf32>
    %463 = arith.addf %456, %462 : vector<7x5x128xf32>
    %464 = vector.extract_strided_slice %449 {offsets = [2, 0, 0], sizes = [7, 5, 128], strides = [1, 1, 1]} : vector<11x5x128xf32> to vector<7x5x128xf32>
    %465 = vector.extract_strided_slice %447 {offsets = [2, 0, 0], sizes = [1, 5, 128], strides = [1, 1, 1]} : vector<5x5x128xf32> to vector<1x5x128xf32>
    %466 = vector.shape_cast %465 : vector<1x5x128xf32> to vector<5x128xf32>
    %467 = vector.shape_cast %466 : vector<5x128xf32> to vector<1x5x128xf32>
    %468 = vector.broadcast %467 : vector<1x5x128xf32> to vector<7x5x128xf32>
    %469 = arith.mulf %464, %468 : vector<7x5x128xf32>
    %470 = arith.addf %463, %469 : vector<7x5x128xf32>
    %471 = vector.extract_strided_slice %449 {offsets = [3, 0, 0], sizes = [7, 5, 128], strides = [1, 1, 1]} : vector<11x5x128xf32> to vector<7x5x128xf32>
    %472 = vector.extract_strided_slice %447 {offsets = [3, 0, 0], sizes = [1, 5, 128], strides = [1, 1, 1]} : vector<5x5x128xf32> to vector<1x5x128xf32>
    %473 = vector.shape_cast %472 : vector<1x5x128xf32> to vector<5x128xf32>
    %474 = vector.shape_cast %473 : vector<5x128xf32> to vector<1x5x128xf32>
    %475 = vector.broadcast %474 : vector<1x5x128xf32> to vector<7x5x128xf32>
    %476 = arith.mulf %471, %475 : vector<7x5x128xf32>
    %477 = arith.addf %470, %476 : vector<7x5x128xf32>
    %478 = vector.extract_strided_slice %449 {offsets = [4, 0, 0], sizes = [7, 5, 128], strides = [1, 1, 1]} : vector<11x5x128xf32> to vector<7x5x128xf32>
    %479 = vector.extract_strided_slice %447 {offsets = [4, 0, 0], sizes = [1, 5, 128], strides = [1, 1, 1]} : vector<5x5x128xf32> to vector<1x5x128xf32>
    %480 = vector.shape_cast %479 : vector<1x5x128xf32> to vector<5x128xf32>
    %481 = vector.shape_cast %480 : vector<5x128xf32> to vector<1x5x128xf32>
    %482 = vector.broadcast %481 : vector<1x5x128xf32> to vector<7x5x128xf32>
    %483 = arith.mulf %478, %482 : vector<7x5x128xf32>
    %484 = arith.addf %477, %483 : vector<7x5x128xf32>
    %c0_121 = arith.constant 0 : index
    %c2_122 = arith.constant 2 : index
    %c0_123 = arith.constant 0 : index
    %c0_124 = arith.constant 0 : index
    %c0_125 = arith.constant 0 : index
    %485 = vector.load %arg3[%c0_121, %c2_122, %c0_123, %c0_124, %c0_125] : memref<1x7x7x5x128xf32, #tpu.memory_space<vmem>>, vector<1x1x7x5x128xf32>
    %486 = vector.shape_cast %485 : vector<1x1x7x5x128xf32> to vector<7x5x128xf32>
    %487 = vector.shape_cast %484 : vector<7x5x128xf32> to vector<1x1x7x5x128xf32>
    tpu.vector_store %arg3[%c0_121, %c2_122, %c0_123, %c0_124, %c0_125], %487 {strides = array<i32>} : memref<1x7x7x5x128xf32, #tpu.memory_space<vmem>>, vector<1x1x7x5x128xf32>,
    %cst_126 = arith.constant 0.000000e+00 : f32
    %488 = vector.broadcast %cst_126 : f32 to vector<7x5x128xf32>
    %c0_127 = arith.constant 0 : index
    %c0_128 = arith.constant 0 : index
    %c0_129 = arith.constant 0 : index
    %c0_130 = arith.constant 0 : index
    %489 = vector.load %arg2[%c0_127, %c0_128, %c0_129, %c0_130] : memref<5x5x5x128xf32, #tpu.memory_space<vmem>>, vector<1x5x5x128xf32>
    %490 = vector.shape_cast %489 : vector<1x5x5x128xf32> to vector<5x5x128xf32>
    %c1_131 = arith.constant 1 : index
    %c0_132 = arith.constant 0 : index
    %c0_133 = arith.constant 0 : index
    %c0_134 = arith.constant 0 : index
    %491 = vector.load %arg4[%c1_131, %c0_132, %c0_133, %c0_134] : memref<7x11x5x128xf32, #tpu.memory_space<vmem>>, vector<1x11x5x128xf32>
    %492 = vector.shape_cast %491 : vector<1x11x5x128xf32> to vector<11x5x128xf32>
    %493 = vector.extract_strided_slice %492 {offsets = [0, 0, 0], sizes = [7, 5, 128], strides = [1, 1, 1]} : vector<11x5x128xf32> to vector<7x5x128xf32>
    %494 = vector.extract_strided_slice %490 {offsets = [0, 0, 0], sizes = [1, 5, 128], strides = [1, 1, 1]} : vector<5x5x128xf32> to vector<1x5x128xf32>
    %495 = vector.shape_cast %494 : vector<1x5x128xf32> to vector<5x128xf32>
    %496 = vector.shape_cast %495 : vector<5x128xf32> to vector<1x5x128xf32>
    %497 = vector.broadcast %496 : vector<1x5x128xf32> to vector<7x5x128xf32>
    %498 = arith.mulf %493, %497 : vector<7x5x128xf32>
    %499 = arith.addf %488, %498 : vector<7x5x128xf32>
    %500 = vector.extract_strided_slice %492 {offsets = [1, 0, 0], sizes = [7, 5, 128], strides = [1, 1, 1]} : vector<11x5x128xf32> to vector<7x5x128xf32>
    %501 = vector.extract_strided_slice %490 {offsets = [1, 0, 0], sizes = [1, 5, 128], strides = [1, 1, 1]} : vector<5x5x128xf32> to vector<1x5x128xf32>
    %502 = vector.shape_cast %501 : vector<1x5x128xf32> to vector<5x128xf32>
    %503 = vector.shape_cast %502 : vector<5x128xf32> to vector<1x5x128xf32>
    %504 = vector.broadcast %503 : vector<1x5x128xf32> to vector<7x5x128xf32>
    %505 = arith.mulf %500, %504 : vector<7x5x128xf32>
    %506 = arith.addf %499, %505 : vector<7x5x128xf32>
    %507 = vector.extract_strided_slice %492 {offsets = [2, 0, 0], sizes = [7, 5, 128], strides = [1, 1, 1]} : vector<11x5x128xf32> to vector<7x5x128xf32>
    %508 = vector.extract_strided_slice %490 {offsets = [2, 0, 0], sizes = [1, 5, 128], strides = [1, 1, 1]} : vector<5x5x128xf32> to vector<1x5x128xf32>
    %509 = vector.shape_cast %508 : vector<1x5x128xf32> to vector<5x128xf32>
    %510 = vector.shape_cast %509 : vector<5x128xf32> to vector<1x5x128xf32>
    %511 = vector.broadcast %510 : vector<1x5x128xf32> to vector<7x5x128xf32>
    %512 = arith.mulf %507, %511 : vector<7x5x128xf32>
    %513 = arith.addf %506, %512 : vector<7x5x128xf32>
    %514 = vector.extract_strided_slice %492 {offsets = [3, 0, 0], sizes = [7, 5, 128], strides = [1, 1, 1]} : vector<11x5x128xf32> to vector<7x5x128xf32>
    %515 = vector.extract_strided_slice %490 {offsets = [3, 0, 0], sizes = [1, 5, 128], strides = [1, 1, 1]} : vector<5x5x128xf32> to vector<1x5x128xf32>
    %516 = vector.shape_cast %515 : vector<1x5x128xf32> to vector<5x128xf32>
    %517 = vector.shape_cast %516 : vector<5x128xf32> to vector<1x5x128xf32>
    %518 = vector.broadcast %517 : vector<1x5x128xf32> to vector<7x5x128xf32>
    %519 = arith.mulf %514, %518 : vector<7x5x128xf32>
    %520 = arith.addf %513, %519 : vector<7x5x128xf32>
    %521 = vector.extract_strided_slice %492 {offsets = [4, 0, 0], sizes = [7, 5, 128], strides = [1, 1, 1]} : vector<11x5x128xf32> to vector<7x5x128xf32>
    %522 = vector.extract_strided_slice %490 {offsets = [4, 0, 0], sizes = [1, 5, 128], strides = [1, 1, 1]} : vector<5x5x128xf32> to vector<1x5x128xf32>
    %523 = vector.shape_cast %522 : vector<1x5x128xf32> to vector<5x128xf32>
    %524 = vector.shape_cast %523 : vector<5x128xf32> to vector<1x5x128xf32>
    %525 = vector.broadcast %524 : vector<1x5x128xf32> to vector<7x5x128xf32>
    %526 = arith.mulf %521, %525 : vector<7x5x128xf32>
    %527 = arith.addf %520, %526 : vector<7x5x128xf32>
    %c1_135 = arith.constant 1 : index
    %c0_136 = arith.constant 0 : index
    %c0_137 = arith.constant 0 : index
    %c0_138 = arith.constant 0 : index
    %528 = vector.load %arg2[%c1_135, %c0_136, %c0_137, %c0_138] : memref<5x5x5x128xf32, #tpu.memory_space<vmem>>, vector<1x5x5x128xf32>
    %529 = vector.shape_cast %528 : vector<1x5x5x128xf32> to vector<5x5x128xf32>
    %c2_139 = arith.constant 2 : index
    %c0_140 = arith.constant 0 : index
    %c0_141 = arith.constant 0 : index
    %c0_142 = arith.constant 0 : index
    %530 = vector.load %arg4[%c2_139, %c0_140, %c0_141, %c0_142] : memref<7x11x5x128xf32, #tpu.memory_space<vmem>>, vector<1x11x5x128xf32>
    %531 = vector.shape_cast %530 : vector<1x11x5x128xf32> to vector<11x5x128xf32>
    %532 = vector.extract_strided_slice %531 {offsets = [0, 0, 0], sizes = [7, 5, 128], strides = [1, 1, 1]} : vector<11x5x128xf32> to vector<7x5x128xf32>
    %533 = vector.extract_strided_slice %529 {offsets = [0, 0, 0], sizes = [1, 5, 128], strides = [1, 1, 1]} : vector<5x5x128xf32> to vector<1x5x128xf32>
    %534 = vector.shape_cast %533 : vector<1x5x128xf32> to vector<5x128xf32>
    %535 = vector.shape_cast %534 : vector<5x128xf32> to vector<1x5x128xf32>
    %536 = vector.broadcast %535 : vector<1x5x128xf32> to vector<7x5x128xf32>
    %537 = arith.mulf %532, %536 : vector<7x5x128xf32>
    %538 = arith.addf %527, %537 : vector<7x5x128xf32>
    %539 = vector.extract_strided_slice %531 {offsets = [1, 0, 0], sizes = [7, 5, 128], strides = [1, 1, 1]} : vector<11x5x128xf32> to vector<7x5x128xf32>
    %540 = vector.extract_strided_slice %529 {offsets = [1, 0, 0], sizes = [1, 5, 128], strides = [1, 1, 1]} : vector<5x5x128xf32> to vector<1x5x128xf32>
    %541 = vector.shape_cast %540 : vector<1x5x128xf32> to vector<5x128xf32>
    %542 = vector.shape_cast %541 : vector<5x128xf32> to vector<1x5x128xf32>
    %543 = vector.broadcast %542 : vector<1x5x128xf32> to vector<7x5x128xf32>
    %544 = arith.mulf %539, %543 : vector<7x5x128xf32>
    %545 = arith.addf %538, %544 : vector<7x5x128xf32>
    %546 = vector.extract_strided_slice %531 {offsets = [2, 0, 0], sizes = [7, 5, 128], strides = [1, 1, 1]} : vector<11x5x128xf32> to vector<7x5x128xf32>
    %547 = vector.extract_strided_slice %529 {offsets = [2, 0, 0], sizes = [1, 5, 128], strides = [1, 1, 1]} : vector<5x5x128xf32> to vector<1x5x128xf32>
    %548 = vector.shape_cast %547 : vector<1x5x128xf32> to vector<5x128xf32>
    %549 = vector.shape_cast %548 : vector<5x128xf32> to vector<1x5x128xf32>
    %550 = vector.broadcast %549 : vector<1x5x128xf32> to vector<7x5x128xf32>
    %551 = arith.mulf %546, %550 : vector<7x5x128xf32>
    %552 = arith.addf %545, %551 : vector<7x5x128xf32>
    %553 = vector.extract_strided_slice %531 {offsets = [3, 0, 0], sizes = [7, 5, 128], strides = [1, 1, 1]} : vector<11x5x128xf32> to vector<7x5x128xf32>
    %554 = vector.extract_strided_slice %529 {offsets = [3, 0, 0], sizes = [1, 5, 128], strides = [1, 1, 1]} : vector<5x5x128xf32> to vector<1x5x128xf32>
    %555 = vector.shape_cast %554 : vector<1x5x128xf32> to vector<5x128xf32>
    %556 = vector.shape_cast %555 : vector<5x128xf32> to vector<1x5x128xf32>
    %557 = vector.broadcast %556 : vector<1x5x128xf32> to vector<7x5x128xf32>
    %558 = arith.mulf %553, %557 : vector<7x5x128xf32>
    %559 = arith.addf %552, %558 : vector<7x5x128xf32>
    %560 = vector.extract_strided_slice %531 {offsets = [4, 0, 0], sizes = [7, 5, 128], strides = [1, 1, 1]} : vector<11x5x128xf32> to vector<7x5x128xf32>
    %561 = vector.extract_strided_slice %529 {offsets = [4, 0, 0], sizes = [1, 5, 128], strides = [1, 1, 1]} : vector<5x5x128xf32> to vector<1x5x128xf32>
    %562 = vector.shape_cast %561 : vector<1x5x128xf32> to vector<5x128xf32>
    %563 = vector.shape_cast %562 : vector<5x128xf32> to vector<1x5x128xf32>
    %564 = vector.broadcast %563 : vector<1x5x128xf32> to vector<7x5x128xf32>
    %565 = arith.mulf %560, %564 : vector<7x5x128xf32>
    %566 = arith.addf %559, %565 : vector<7x5x128xf32>
    %c2_143 = arith.constant 2 : index
    %c0_144 = arith.constant 0 : index
    %c0_145 = arith.constant 0 : index
    %c0_146 = arith.constant 0 : index
    %567 = vector.load %arg2[%c2_143, %c0_144, %c0_145, %c0_146] : memref<5x5x5x128xf32, #tpu.memory_space<vmem>>, vector<1x5x5x128xf32>
    %568 = vector.shape_cast %567 : vector<1x5x5x128xf32> to vector<5x5x128xf32>
    %c3_147 = arith.constant 3 : index
    %c0_148 = arith.constant 0 : index
    %c0_149 = arith.constant 0 : index
    %c0_150 = arith.constant 0 : index
    %569 = vector.load %arg4[%c3_147, %c0_148, %c0_149, %c0_150] : memref<7x11x5x128xf32, #tpu.memory_space<vmem>>, vector<1x11x5x128xf32>
    %570 = vector.shape_cast %569 : vector<1x11x5x128xf32> to vector<11x5x128xf32>
    %571 = vector.extract_strided_slice %570 {offsets = [0, 0, 0], sizes = [7, 5, 128], strides = [1, 1, 1]} : vector<11x5x128xf32> to vector<7x5x128xf32>
    %572 = vector.extract_strided_slice %568 {offsets = [0, 0, 0], sizes = [1, 5, 128], strides = [1, 1, 1]} : vector<5x5x128xf32> to vector<1x5x128xf32>
    %573 = vector.shape_cast %572 : vector<1x5x128xf32> to vector<5x128xf32>
    %574 = vector.shape_cast %573 : vector<5x128xf32> to vector<1x5x128xf32>
    %575 = vector.broadcast %574 : vector<1x5x128xf32> to vector<7x5x128xf32>
    %576 = arith.mulf %571, %575 : vector<7x5x128xf32>
    %577 = arith.addf %566, %576 : vector<7x5x128xf32>
    %578 = vector.extract_strided_slice %570 {offsets = [1, 0, 0], sizes = [7, 5, 128], strides = [1, 1, 1]} : vector<11x5x128xf32> to vector<7x5x128xf32>
    %579 = vector.extract_strided_slice %568 {offsets = [1, 0, 0], sizes = [1, 5, 128], strides = [1, 1, 1]} : vector<5x5x128xf32> to vector<1x5x128xf32>
    %580 = vector.shape_cast %579 : vector<1x5x128xf32> to vector<5x128xf32>
    %581 = vector.shape_cast %580 : vector<5x128xf32> to vector<1x5x128xf32>
    %582 = vector.broadcast %581 : vector<1x5x128xf32> to vector<7x5x128xf32>
    %583 = arith.mulf %578, %582 : vector<7x5x128xf32>
    %584 = arith.addf %577, %583 : vector<7x5x128xf32>
    %585 = vector.extract_strided_slice %570 {offsets = [2, 0, 0], sizes = [7, 5, 128], strides = [1, 1, 1]} : vector<11x5x128xf32> to vector<7x5x128xf32>
    %586 = vector.extract_strided_slice %568 {offsets = [2, 0, 0], sizes = [1, 5, 128], strides = [1, 1, 1]} : vector<5x5x128xf32> to vector<1x5x128xf32>
    %587 = vector.shape_cast %586 : vector<1x5x128xf32> to vector<5x128xf32>
    %588 = vector.shape_cast %587 : vector<5x128xf32> to vector<1x5x128xf32>
    %589 = vector.broadcast %588 : vector<1x5x128xf32> to vector<7x5x128xf32>
    %590 = arith.mulf %585, %589 : vector<7x5x128xf32>
    %591 = arith.addf %584, %590 : vector<7x5x128xf32>
    %592 = vector.extract_strided_slice %570 {offsets = [3, 0, 0], sizes = [7, 5, 128], strides = [1, 1, 1]} : vector<11x5x128xf32> to vector<7x5x128xf32>
    %593 = vector.extract_strided_slice %568 {offsets = [3, 0, 0], sizes = [1, 5, 128], strides = [1, 1, 1]} : vector<5x5x128xf32> to vector<1x5x128xf32>
    %594 = vector.shape_cast %593 : vector<1x5x128xf32> to vector<5x128xf32>
    %595 = vector.shape_cast %594 : vector<5x128xf32> to vector<1x5x128xf32>
    %596 = vector.broadcast %595 : vector<1x5x128xf32> to vector<7x5x128xf32>
    %597 = arith.mulf %592, %596 : vector<7x5x128xf32>
    %598 = arith.addf %591, %597 : vector<7x5x128xf32>
    %599 = vector.extract_strided_slice %570 {offsets = [4, 0, 0], sizes = [7, 5, 128], strides = [1, 1, 1]} : vector<11x5x128xf32> to vector<7x5x128xf32>
    %600 = vector.extract_strided_slice %568 {offsets = [4, 0, 0], sizes = [1, 5, 128], strides = [1, 1, 1]} : vector<5x5x128xf32> to vector<1x5x128xf32>
    %601 = vector.shape_cast %600 : vector<1x5x128xf32> to vector<5x128xf32>
    %602 = vector.shape_cast %601 : vector<5x128xf32> to vector<1x5x128xf32>
    %603 = vector.broadcast %602 : vector<1x5x128xf32> to vector<7x5x128xf32>
    %604 = arith.mulf %599, %603 : vector<7x5x128xf32>
    %605 = arith.addf %598, %604 : vector<7x5x128xf32>
    %c3_151 = arith.constant 3 : index
    %c0_152 = arith.constant 0 : index
    %c0_153 = arith.constant 0 : index
    %c0_154 = arith.constant 0 : index
    %606 = vector.load %arg2[%c3_151, %c0_152, %c0_153, %c0_154] : memref<5x5x5x128xf32, #tpu.memory_space<vmem>>, vector<1x5x5x128xf32>
    %607 = vector.shape_cast %606 : vector<1x5x5x128xf32> to vector<5x5x128xf32>
    %c4_155 = arith.constant 4 : index
    %c0_156 = arith.constant 0 : index
    %c0_157 = arith.constant 0 : index
    %c0_158 = arith.constant 0 : index
    %608 = vector.load %arg4[%c4_155, %c0_156, %c0_157, %c0_158] : memref<7x11x5x128xf32, #tpu.memory_space<vmem>>, vector<1x11x5x128xf32>
    %609 = vector.shape_cast %608 : vector<1x11x5x128xf32> to vector<11x5x128xf32>
    %610 = vector.extract_strided_slice %609 {offsets = [0, 0, 0], sizes = [7, 5, 128], strides = [1, 1, 1]} : vector<11x5x128xf32> to vector<7x5x128xf32>
    %611 = vector.extract_strided_slice %607 {offsets = [0, 0, 0], sizes = [1, 5, 128], strides = [1, 1, 1]} : vector<5x5x128xf32> to vector<1x5x128xf32>
    %612 = vector.shape_cast %611 : vector<1x5x128xf32> to vector<5x128xf32>
    %613 = vector.shape_cast %612 : vector<5x128xf32> to vector<1x5x128xf32>
    %614 = vector.broadcast %613 : vector<1x5x128xf32> to vector<7x5x128xf32>
    %615 = arith.mulf %610, %614 : vector<7x5x128xf32>
    %616 = arith.addf %605, %615 : vector<7x5x128xf32>
    %617 = vector.extract_strided_slice %609 {offsets = [1, 0, 0], sizes = [7, 5, 128], strides = [1, 1, 1]} : vector<11x5x128xf32> to vector<7x5x128xf32>
    %618 = vector.extract_strided_slice %607 {offsets = [1, 0, 0], sizes = [1, 5, 128], strides = [1, 1, 1]} : vector<5x5x128xf32> to vector<1x5x128xf32>
    %619 = vector.shape_cast %618 : vector<1x5x128xf32> to vector<5x128xf32>
    %620 = vector.shape_cast %619 : vector<5x128xf32> to vector<1x5x128xf32>
    %621 = vector.broadcast %620 : vector<1x5x128xf32> to vector<7x5x128xf32>
    %622 = arith.mulf %617, %621 : vector<7x5x128xf32>
    %623 = arith.addf %616, %622 : vector<7x5x128xf32>
    %624 = vector.extract_strided_slice %609 {offsets = [2, 0, 0], sizes = [7, 5, 128], strides = [1, 1, 1]} : vector<11x5x128xf32> to vector<7x5x128xf32>
    %625 = vector.extract_strided_slice %607 {offsets = [2, 0, 0], sizes = [1, 5, 128], strides = [1, 1, 1]} : vector<5x5x128xf32> to vector<1x5x128xf32>
    %626 = vector.shape_cast %625 : vector<1x5x128xf32> to vector<5x128xf32>
    %627 = vector.shape_cast %626 : vector<5x128xf32> to vector<1x5x128xf32>
    %628 = vector.broadcast %627 : vector<1x5x128xf32> to vector<7x5x128xf32>
    %629 = arith.mulf %624, %628 : vector<7x5x128xf32>
    %630 = arith.addf %623, %629 : vector<7x5x128xf32>
    %631 = vector.extract_strided_slice %609 {offsets = [3, 0, 0], sizes = [7, 5, 128], strides = [1, 1, 1]} : vector<11x5x128xf32> to vector<7x5x128xf32>
    %632 = vector.extract_strided_slice %607 {offsets = [3, 0, 0], sizes = [1, 5, 128], strides = [1, 1, 1]} : vector<5x5x128xf32> to vector<1x5x128xf32>
    %633 = vector.shape_cast %632 : vector<1x5x128xf32> to vector<5x128xf32>
    %634 = vector.shape_cast %633 : vector<5x128xf32> to vector<1x5x128xf32>
    %635 = vector.broadcast %634 : vector<1x5x128xf32> to vector<7x5x128xf32>
    %636 = arith.mulf %631, %635 : vector<7x5x128xf32>
    %637 = arith.addf %630, %636 : vector<7x5x128xf32>
    %638 = vector.extract_strided_slice %609 {offsets = [4, 0, 0], sizes = [7, 5, 128], strides = [1, 1, 1]} : vector<11x5x128xf32> to vector<7x5x128xf32>
    %639 = vector.extract_strided_slice %607 {offsets = [4, 0, 0], sizes = [1, 5, 128], strides = [1, 1, 1]} : vector<5x5x128xf32> to vector<1x5x128xf32>
    %640 = vector.shape_cast %639 : vector<1x5x128xf32> to vector<5x128xf32>
    %641 = vector.shape_cast %640 : vector<5x128xf32> to vector<1x5x128xf32>
    %642 = vector.broadcast %641 : vector<1x5x128xf32> to vector<7x5x128xf32>
    %643 = arith.mulf %638, %642 : vector<7x5x128xf32>
    %644 = arith.addf %637, %643 : vector<7x5x128xf32>
    %c4_159 = arith.constant 4 : index
    %c0_160 = arith.constant 0 : index
    %c0_161 = arith.constant 0 : index
    %c0_162 = arith.constant 0 : index
    %645 = vector.load %arg2[%c4_159, %c0_160, %c0_161, %c0_162] : memref<5x5x5x128xf32, #tpu.memory_space<vmem>>, vector<1x5x5x128xf32>
    %646 = vector.shape_cast %645 : vector<1x5x5x128xf32> to vector<5x5x128xf32>
    %c5 = arith.constant 5 : index
    %c0_163 = arith.constant 0 : index
    %c0_164 = arith.constant 0 : index
    %c0_165 = arith.constant 0 : index
    %647 = vector.load %arg4[%c5, %c0_163, %c0_164, %c0_165] : memref<7x11x5x128xf32, #tpu.memory_space<vmem>>, vector<1x11x5x128xf32>
    %648 = vector.shape_cast %647 : vector<1x11x5x128xf32> to vector<11x5x128xf32>
    %649 = vector.extract_strided_slice %648 {offsets = [0, 0, 0], sizes = [7, 5, 128], strides = [1, 1, 1]} : vector<11x5x128xf32> to vector<7x5x128xf32>
    %650 = vector.extract_strided_slice %646 {offsets = [0, 0, 0], sizes = [1, 5, 128], strides = [1, 1, 1]} : vector<5x5x128xf32> to vector<1x5x128xf32>
    %651 = vector.shape_cast %650 : vector<1x5x128xf32> to vector<5x128xf32>
    %652 = vector.shape_cast %651 : vector<5x128xf32> to vector<1x5x128xf32>
    %653 = vector.broadcast %652 : vector<1x5x128xf32> to vector<7x5x128xf32>
    %654 = arith.mulf %649, %653 : vector<7x5x128xf32>
    %655 = arith.addf %644, %654 : vector<7x5x128xf32>
    %656 = vector.extract_strided_slice %648 {offsets = [1, 0, 0], sizes = [7, 5, 128], strides = [1, 1, 1]} : vector<11x5x128xf32> to vector<7x5x128xf32>
    %657 = vector.extract_strided_slice %646 {offsets = [1, 0, 0], sizes = [1, 5, 128], strides = [1, 1, 1]} : vector<5x5x128xf32> to vector<1x5x128xf32>
    %658 = vector.shape_cast %657 : vector<1x5x128xf32> to vector<5x128xf32>
    %659 = vector.shape_cast %658 : vector<5x128xf32> to vector<1x5x128xf32>
    %660 = vector.broadcast %659 : vector<1x5x128xf32> to vector<7x5x128xf32>
    %661 = arith.mulf %656, %660 : vector<7x5x128xf32>
    %662 = arith.addf %655, %661 : vector<7x5x128xf32>
    %663 = vector.extract_strided_slice %648 {offsets = [2, 0, 0], sizes = [7, 5, 128], strides = [1, 1, 1]} : vector<11x5x128xf32> to vector<7x5x128xf32>
    %664 = vector.extract_strided_slice %646 {offsets = [2, 0, 0], sizes = [1, 5, 128], strides = [1, 1, 1]} : vector<5x5x128xf32> to vector<1x5x128xf32>
    %665 = vector.shape_cast %664 : vector<1x5x128xf32> to vector<5x128xf32>
    %666 = vector.shape_cast %665 : vector<5x128xf32> to vector<1x5x128xf32>
    %667 = vector.broadcast %666 : vector<1x5x128xf32> to vector<7x5x128xf32>
    %668 = arith.mulf %663, %667 : vector<7x5x128xf32>
    %669 = arith.addf %662, %668 : vector<7x5x128xf32>
    %670 = vector.extract_strided_slice %648 {offsets = [3, 0, 0], sizes = [7, 5, 128], strides = [1, 1, 1]} : vector<11x5x128xf32> to vector<7x5x128xf32>
    %671 = vector.extract_strided_slice %646 {offsets = [3, 0, 0], sizes = [1, 5, 128], strides = [1, 1, 1]} : vector<5x5x128xf32> to vector<1x5x128xf32>
    %672 = vector.shape_cast %671 : vector<1x5x128xf32> to vector<5x128xf32>
    %673 = vector.shape_cast %672 : vector<5x128xf32> to vector<1x5x128xf32>
    %674 = vector.broadcast %673 : vector<1x5x128xf32> to vector<7x5x128xf32>
    %675 = arith.mulf %670, %674 : vector<7x5x128xf32>
    %676 = arith.addf %669, %675 : vector<7x5x128xf32>
    %677 = vector.extract_strided_slice %648 {offsets = [4, 0, 0], sizes = [7, 5, 128], strides = [1, 1, 1]} : vector<11x5x128xf32> to vector<7x5x128xf32>
    %678 = vector.extract_strided_slice %646 {offsets = [4, 0, 0], sizes = [1, 5, 128], strides = [1, 1, 1]} : vector<5x5x128xf32> to vector<1x5x128xf32>
    %679 = vector.shape_cast %678 : vector<1x5x128xf32> to vector<5x128xf32>
    %680 = vector.shape_cast %679 : vector<5x128xf32> to vector<1x5x128xf32>
    %681 = vector.broadcast %680 : vector<1x5x128xf32> to vector<7x5x128xf32>
    %682 = arith.mulf %677, %681 : vector<7x5x128xf32>
    %683 = arith.addf %676, %682 : vector<7x5x128xf32>
    %c0_166 = arith.constant 0 : index
    %c3_167 = arith.constant 3 : index
    %c0_168 = arith.constant 0 : index
    %c0_169 = arith.constant 0 : index
    %c0_170 = arith.constant 0 : index
    %684 = vector.load %arg3[%c0_166, %c3_167, %c0_168, %c0_169, %c0_170] : memref<1x7x7x5x128xf32, #tpu.memory_space<vmem>>, vector<1x1x7x5x128xf32>
    %685 = vector.shape_cast %684 : vector<1x1x7x5x128xf32> to vector<7x5x128xf32>
    %686 = vector.shape_cast %683 : vector<7x5x128xf32> to vector<1x1x7x5x128xf32>
    tpu.vector_store %arg3[%c0_166, %c3_167, %c0_168, %c0_169, %c0_170], %686 {strides = array<i32>} : memref<1x7x7x5x128xf32, #tpu.memory_space<vmem>>, vector<1x1x7x5x128xf32>,
    %cst_171 = arith.constant 0.000000e+00 : f32
    %687 = vector.broadcast %cst_171 : f32 to vector<7x5x128xf32>
    %c0_172 = arith.constant 0 : index
    %c0_173 = arith.constant 0 : index
    %c0_174 = arith.constant 0 : index
    %c0_175 = arith.constant 0 : index
    %688 = vector.load %arg2[%c0_172, %c0_173, %c0_174, %c0_175] : memref<5x5x5x128xf32, #tpu.memory_space<vmem>>, vector<1x5x5x128xf32>
    %689 = vector.shape_cast %688 : vector<1x5x5x128xf32> to vector<5x5x128xf32>
    %c2_176 = arith.constant 2 : index
    %c0_177 = arith.constant 0 : index
    %c0_178 = arith.constant 0 : index
    %c0_179 = arith.constant 0 : index
    %690 = vector.load %arg4[%c2_176, %c0_177, %c0_178, %c0_179] : memref<7x11x5x128xf32, #tpu.memory_space<vmem>>, vector<1x11x5x128xf32>
    %691 = vector.shape_cast %690 : vector<1x11x5x128xf32> to vector<11x5x128xf32>
    %692 = vector.extract_strided_slice %691 {offsets = [0, 0, 0], sizes = [7, 5, 128], strides = [1, 1, 1]} : vector<11x5x128xf32> to vector<7x5x128xf32>
    %693 = vector.extract_strided_slice %689 {offsets = [0, 0, 0], sizes = [1, 5, 128], strides = [1, 1, 1]} : vector<5x5x128xf32> to vector<1x5x128xf32>
    %694 = vector.shape_cast %693 : vector<1x5x128xf32> to vector<5x128xf32>
    %695 = vector.shape_cast %694 : vector<5x128xf32> to vector<1x5x128xf32>
    %696 = vector.broadcast %695 : vector<1x5x128xf32> to vector<7x5x128xf32>
    %697 = arith.mulf %692, %696 : vector<7x5x128xf32>
    %698 = arith.addf %687, %697 : vector<7x5x128xf32>
    %699 = vector.extract_strided_slice %691 {offsets = [1, 0, 0], sizes = [7, 5, 128], strides = [1, 1, 1]} : vector<11x5x128xf32> to vector<7x5x128xf32>
    %700 = vector.extract_strided_slice %689 {offsets = [1, 0, 0], sizes = [1, 5, 128], strides = [1, 1, 1]} : vector<5x5x128xf32> to vector<1x5x128xf32>
    %701 = vector.shape_cast %700 : vector<1x5x128xf32> to vector<5x128xf32>
    %702 = vector.shape_cast %701 : vector<5x128xf32> to vector<1x5x128xf32>
    %703 = vector.broadcast %702 : vector<1x5x128xf32> to vector<7x5x128xf32>
    %704 = arith.mulf %699, %703 : vector<7x5x128xf32>
    %705 = arith.addf %698, %704 : vector<7x5x128xf32>
    %706 = vector.extract_strided_slice %691 {offsets = [2, 0, 0], sizes = [7, 5, 128], strides = [1, 1, 1]} : vector<11x5x128xf32> to vector<7x5x128xf32>
    %707 = vector.extract_strided_slice %689 {offsets = [2, 0, 0], sizes = [1, 5, 128], strides = [1, 1, 1]} : vector<5x5x128xf32> to vector<1x5x128xf32>
    %708 = vector.shape_cast %707 : vector<1x5x128xf32> to vector<5x128xf32>
    %709 = vector.shape_cast %708 : vector<5x128xf32> to vector<1x5x128xf32>
    %710 = vector.broadcast %709 : vector<1x5x128xf32> to vector<7x5x128xf32>
    %711 = arith.mulf %706, %710 : vector<7x5x128xf32>
    %712 = arith.addf %705, %711 : vector<7x5x128xf32>
    %713 = vector.extract_strided_slice %691 {offsets = [3, 0, 0], sizes = [7, 5, 128], strides = [1, 1, 1]} : vector<11x5x128xf32> to vector<7x5x128xf32>
    %714 = vector.extract_strided_slice %689 {offsets = [3, 0, 0], sizes = [1, 5, 128], strides = [1, 1, 1]} : vector<5x5x128xf32> to vector<1x5x128xf32>
    %715 = vector.shape_cast %714 : vector<1x5x128xf32> to vector<5x128xf32>
    %716 = vector.shape_cast %715 : vector<5x128xf32> to vector<1x5x128xf32>
    %717 = vector.broadcast %716 : vector<1x5x128xf32> to vector<7x5x128xf32>
    %718 = arith.mulf %713, %717 : vector<7x5x128xf32>
    %719 = arith.addf %712, %718 : vector<7x5x128xf32>
    %720 = vector.extract_strided_slice %691 {offsets = [4, 0, 0], sizes = [7, 5, 128], strides = [1, 1, 1]} : vector<11x5x128xf32> to vector<7x5x128xf32>
    %721 = vector.extract_strided_slice %689 {offsets = [4, 0, 0], sizes = [1, 5, 128], strides = [1, 1, 1]} : vector<5x5x128xf32> to vector<1x5x128xf32>
    %722 = vector.shape_cast %721 : vector<1x5x128xf32> to vector<5x128xf32>
    %723 = vector.shape_cast %722 : vector<5x128xf32> to vector<1x5x128xf32>
    %724 = vector.broadcast %723 : vector<1x5x128xf32> to vector<7x5x128xf32>
    %725 = arith.mulf %720, %724 : vector<7x5x128xf32>
    %726 = arith.addf %719, %725 : vector<7x5x128xf32>
    %c1_180 = arith.constant 1 : index
    %c0_181 = arith.constant 0 : index
    %c0_182 = arith.constant 0 : index
    %c0_183 = arith.constant 0 : index
    %727 = vector.load %arg2[%c1_180, %c0_181, %c0_182, %c0_183] : memref<5x5x5x128xf32, #tpu.memory_space<vmem>>, vector<1x5x5x128xf32>
    %728 = vector.shape_cast %727 : vector<1x5x5x128xf32> to vector<5x5x128xf32>
    %c3_184 = arith.constant 3 : index
    %c0_185 = arith.constant 0 : index
    %c0_186 = arith.constant 0 : index
    %c0_187 = arith.constant 0 : index
    %729 = vector.load %arg4[%c3_184, %c0_185, %c0_186, %c0_187] : memref<7x11x5x128xf32, #tpu.memory_space<vmem>>, vector<1x11x5x128xf32>
    %730 = vector.shape_cast %729 : vector<1x11x5x128xf32> to vector<11x5x128xf32>
    %731 = vector.extract_strided_slice %730 {offsets = [0, 0, 0], sizes = [7, 5, 128], strides = [1, 1, 1]} : vector<11x5x128xf32> to vector<7x5x128xf32>
    %732 = vector.extract_strided_slice %728 {offsets = [0, 0, 0], sizes = [1, 5, 128], strides = [1, 1, 1]} : vector<5x5x128xf32> to vector<1x5x128xf32>
    %733 = vector.shape_cast %732 : vector<1x5x128xf32> to vector<5x128xf32>
    %734 = vector.shape_cast %733 : vector<5x128xf32> to vector<1x5x128xf32>
    %735 = vector.broadcast %734 : vector<1x5x128xf32> to vector<7x5x128xf32>
    %736 = arith.mulf %731, %735 : vector<7x5x128xf32>
    %737 = arith.addf %726, %736 : vector<7x5x128xf32>
    %738 = vector.extract_strided_slice %730 {offsets = [1, 0, 0], sizes = [7, 5, 128], strides = [1, 1, 1]} : vector<11x5x128xf32> to vector<7x5x128xf32>
    %739 = vector.extract_strided_slice %728 {offsets = [1, 0, 0], sizes = [1, 5, 128], strides = [1, 1, 1]} : vector<5x5x128xf32> to vector<1x5x128xf32>
    %740 = vector.shape_cast %739 : vector<1x5x128xf32> to vector<5x128xf32>
    %741 = vector.shape_cast %740 : vector<5x128xf32> to vector<1x5x128xf32>
    %742 = vector.broadcast %741 : vector<1x5x128xf32> to vector<7x5x128xf32>
    %743 = arith.mulf %738, %742 : vector<7x5x128xf32>
    %744 = arith.addf %737, %743 : vector<7x5x128xf32>
    %745 = vector.extract_strided_slice %730 {offsets = [2, 0, 0], sizes = [7, 5, 128], strides = [1, 1, 1]} : vector<11x5x128xf32> to vector<7x5x128xf32>
    %746 = vector.extract_strided_slice %728 {offsets = [2, 0, 0], sizes = [1, 5, 128], strides = [1, 1, 1]} : vector<5x5x128xf32> to vector<1x5x128xf32>
    %747 = vector.shape_cast %746 : vector<1x5x128xf32> to vector<5x128xf32>
    %748 = vector.shape_cast %747 : vector<5x128xf32> to vector<1x5x128xf32>
    %749 = vector.broadcast %748 : vector<1x5x128xf32> to vector<7x5x128xf32>
    %750 = arith.mulf %745, %749 : vector<7x5x128xf32>
    %751 = arith.addf %744, %750 : vector<7x5x128xf32>
    %752 = vector.extract_strided_slice %730 {offsets = [3, 0, 0], sizes = [7, 5, 128], strides = [1, 1, 1]} : vector<11x5x128xf32> to vector<7x5x128xf32>
    %753 = vector.extract_strided_slice %728 {offsets = [3, 0, 0], sizes = [1, 5, 128], strides = [1, 1, 1]} : vector<5x5x128xf32> to vector<1x5x128xf32>
    %754 = vector.shape_cast %753 : vector<1x5x128xf32> to vector<5x128xf32>
    %755 = vector.shape_cast %754 : vector<5x128xf32> to vector<1x5x128xf32>
    %756 = vector.broadcast %755 : vector<1x5x128xf32> to vector<7x5x128xf32>
    %757 = arith.mulf %752, %756 : vector<7x5x128xf32>
    %758 = arith.addf %751, %757 : vector<7x5x128xf32>
    %759 = vector.extract_strided_slice %730 {offsets = [4, 0, 0], sizes = [7, 5, 128], strides = [1, 1, 1]} : vector<11x5x128xf32> to vector<7x5x128xf32>
    %760 = vector.extract_strided_slice %728 {offsets = [4, 0, 0], sizes = [1, 5, 128], strides = [1, 1, 1]} : vector<5x5x128xf32> to vector<1x5x128xf32>
    %761 = vector.shape_cast %760 : vector<1x5x128xf32> to vector<5x128xf32>
    %762 = vector.shape_cast %761 : vector<5x128xf32> to vector<1x5x128xf32>
    %763 = vector.broadcast %762 : vector<1x5x128xf32> to vector<7x5x128xf32>
    %764 = arith.mulf %759, %763 : vector<7x5x128xf32>
    %765 = arith.addf %758, %764 : vector<7x5x128xf32>
    %c2_188 = arith.constant 2 : index
    %c0_189 = arith.constant 0 : index
    %c0_190 = arith.constant 0 : index
    %c0_191 = arith.constant 0 : index
    %766 = vector.load %arg2[%c2_188, %c0_189, %c0_190, %c0_191] : memref<5x5x5x128xf32, #tpu.memory_space<vmem>>, vector<1x5x5x128xf32>
    %767 = vector.shape_cast %766 : vector<1x5x5x128xf32> to vector<5x5x128xf32>
    %c4_192 = arith.constant 4 : index
    %c0_193 = arith.constant 0 : index
    %c0_194 = arith.constant 0 : index
    %c0_195 = arith.constant 0 : index
    %768 = vector.load %arg4[%c4_192, %c0_193, %c0_194, %c0_195] : memref<7x11x5x128xf32, #tpu.memory_space<vmem>>, vector<1x11x5x128xf32>
    %769 = vector.shape_cast %768 : vector<1x11x5x128xf32> to vector<11x5x128xf32>
    %770 = vector.extract_strided_slice %769 {offsets = [0, 0, 0], sizes = [7, 5, 128], strides = [1, 1, 1]} : vector<11x5x128xf32> to vector<7x5x128xf32>
    %771 = vector.extract_strided_slice %767 {offsets = [0, 0, 0], sizes = [1, 5, 128], strides = [1, 1, 1]} : vector<5x5x128xf32> to vector<1x5x128xf32>
    %772 = vector.shape_cast %771 : vector<1x5x128xf32> to vector<5x128xf32>
    %773 = vector.shape_cast %772 : vector<5x128xf32> to vector<1x5x128xf32>
    %774 = vector.broadcast %773 : vector<1x5x128xf32> to vector<7x5x128xf32>
    %775 = arith.mulf %770, %774 : vector<7x5x128xf32>
    %776 = arith.addf %765, %775 : vector<7x5x128xf32>
    %777 = vector.extract_strided_slice %769 {offsets = [1, 0, 0], sizes = [7, 5, 128], strides = [1, 1, 1]} : vector<11x5x128xf32> to vector<7x5x128xf32>
    %778 = vector.extract_strided_slice %767 {offsets = [1, 0, 0], sizes = [1, 5, 128], strides = [1, 1, 1]} : vector<5x5x128xf32> to vector<1x5x128xf32>
    %779 = vector.shape_cast %778 : vector<1x5x128xf32> to vector<5x128xf32>
    %780 = vector.shape_cast %779 : vector<5x128xf32> to vector<1x5x128xf32>
    %781 = vector.broadcast %780 : vector<1x5x128xf32> to vector<7x5x128xf32>
    %782 = arith.mulf %777, %781 : vector<7x5x128xf32>
    %783 = arith.addf %776, %782 : vector<7x5x128xf32>
    %784 = vector.extract_strided_slice %769 {offsets = [2, 0, 0], sizes = [7, 5, 128], strides = [1, 1, 1]} : vector<11x5x128xf32> to vector<7x5x128xf32>
    %785 = vector.extract_strided_slice %767 {offsets = [2, 0, 0], sizes = [1, 5, 128], strides = [1, 1, 1]} : vector<5x5x128xf32> to vector<1x5x128xf32>
    %786 = vector.shape_cast %785 : vector<1x5x128xf32> to vector<5x128xf32>
    %787 = vector.shape_cast %786 : vector<5x128xf32> to vector<1x5x128xf32>
    %788 = vector.broadcast %787 : vector<1x5x128xf32> to vector<7x5x128xf32>
    %789 = arith.mulf %784, %788 : vector<7x5x128xf32>
    %790 = arith.addf %783, %789 : vector<7x5x128xf32>
    %791 = vector.extract_strided_slice %769 {offsets = [3, 0, 0], sizes = [7, 5, 128], strides = [1, 1, 1]} : vector<11x5x128xf32> to vector<7x5x128xf32>
    %792 = vector.extract_strided_slice %767 {offsets = [3, 0, 0], sizes = [1, 5, 128], strides = [1, 1, 1]} : vector<5x5x128xf32> to vector<1x5x128xf32>
    %793 = vector.shape_cast %792 : vector<1x5x128xf32> to vector<5x128xf32>
    %794 = vector.shape_cast %793 : vector<5x128xf32> to vector<1x5x128xf32>
    %795 = vector.broadcast %794 : vector<1x5x128xf32> to vector<7x5x128xf32>
    %796 = arith.mulf %791, %795 : vector<7x5x128xf32>
    %797 = arith.addf %790, %796 : vector<7x5x128xf32>
    %798 = vector.extract_strided_slice %769 {offsets = [4, 0, 0], sizes = [7, 5, 128], strides = [1, 1, 1]} : vector<11x5x128xf32> to vector<7x5x128xf32>
    %799 = vector.extract_strided_slice %767 {offsets = [4, 0, 0], sizes = [1, 5, 128], strides = [1, 1, 1]} : vector<5x5x128xf32> to vector<1x5x128xf32>
    %800 = vector.shape_cast %799 : vector<1x5x128xf32> to vector<5x128xf32>
    %801 = vector.shape_cast %800 : vector<5x128xf32> to vector<1x5x128xf32>
    %802 = vector.broadcast %801 : vector<1x5x128xf32> to vector<7x5x128xf32>
    %803 = arith.mulf %798, %802 : vector<7x5x128xf32>
    %804 = arith.addf %797, %803 : vector<7x5x128xf32>
    %c3_196 = arith.constant 3 : index
    %c0_197 = arith.constant 0 : index
    %c0_198 = arith.constant 0 : index
    %c0_199 = arith.constant 0 : index
    %805 = vector.load %arg2[%c3_196, %c0_197, %c0_198, %c0_199] : memref<5x5x5x128xf32, #tpu.memory_space<vmem>>, vector<1x5x5x128xf32>
    %806 = vector.shape_cast %805 : vector<1x5x5x128xf32> to vector<5x5x128xf32>
    %c5_200 = arith.constant 5 : index
    %c0_201 = arith.constant 0 : index
    %c0_202 = arith.constant 0 : index
    %c0_203 = arith.constant 0 : index
    %807 = vector.load %arg4[%c5_200, %c0_201, %c0_202, %c0_203] : memref<7x11x5x128xf32, #tpu.memory_space<vmem>>, vector<1x11x5x128xf32>
    %808 = vector.shape_cast %807 : vector<1x11x5x128xf32> to vector<11x5x128xf32>
    %809 = vector.extract_strided_slice %808 {offsets = [0, 0, 0], sizes = [7, 5, 128], strides = [1, 1, 1]} : vector<11x5x128xf32> to vector<7x5x128xf32>
    %810 = vector.extract_strided_slice %806 {offsets = [0, 0, 0], sizes = [1, 5, 128], strides = [1, 1, 1]} : vector<5x5x128xf32> to vector<1x5x128xf32>
    %811 = vector.shape_cast %810 : vector<1x5x128xf32> to vector<5x128xf32>
    %812 = vector.shape_cast %811 : vector<5x128xf32> to vector<1x5x128xf32>
    %813 = vector.broadcast %812 : vector<1x5x128xf32> to vector<7x5x128xf32>
    %814 = arith.mulf %809, %813 : vector<7x5x128xf32>
    %815 = arith.addf %804, %814 : vector<7x5x128xf32>
    %816 = vector.extract_strided_slice %808 {offsets = [1, 0, 0], sizes = [7, 5, 128], strides = [1, 1, 1]} : vector<11x5x128xf32> to vector<7x5x128xf32>
    %817 = vector.extract_strided_slice %806 {offsets = [1, 0, 0], sizes = [1, 5, 128], strides = [1, 1, 1]} : vector<5x5x128xf32> to vector<1x5x128xf32>
    %818 = vector.shape_cast %817 : vector<1x5x128xf32> to vector<5x128xf32>
    %819 = vector.shape_cast %818 : vector<5x128xf32> to vector<1x5x128xf32>
    %820 = vector.broadcast %819 : vector<1x5x128xf32> to vector<7x5x128xf32>
    %821 = arith.mulf %816, %820 : vector<7x5x128xf32>
    %822 = arith.addf %815, %821 : vector<7x5x128xf32>
    %823 = vector.extract_strided_slice %808 {offsets = [2, 0, 0], sizes = [7, 5, 128], strides = [1, 1, 1]} : vector<11x5x128xf32> to vector<7x5x128xf32>
    %824 = vector.extract_strided_slice %806 {offsets = [2, 0, 0], sizes = [1, 5, 128], strides = [1, 1, 1]} : vector<5x5x128xf32> to vector<1x5x128xf32>
    %825 = vector.shape_cast %824 : vector<1x5x128xf32> to vector<5x128xf32>
    %826 = vector.shape_cast %825 : vector<5x128xf32> to vector<1x5x128xf32>
    %827 = vector.broadcast %826 : vector<1x5x128xf32> to vector<7x5x128xf32>
    %828 = arith.mulf %823, %827 : vector<7x5x128xf32>
    %829 = arith.addf %822, %828 : vector<7x5x128xf32>
    %830 = vector.extract_strided_slice %808 {offsets = [3, 0, 0], sizes = [7, 5, 128], strides = [1, 1, 1]} : vector<11x5x128xf32> to vector<7x5x128xf32>
    %831 = vector.extract_strided_slice %806 {offsets = [3, 0, 0], sizes = [1, 5, 128], strides = [1, 1, 1]} : vector<5x5x128xf32> to vector<1x5x128xf32>
    %832 = vector.shape_cast %831 : vector<1x5x128xf32> to vector<5x128xf32>
    %833 = vector.shape_cast %832 : vector<5x128xf32> to vector<1x5x128xf32>
    %834 = vector.broadcast %833 : vector<1x5x128xf32> to vector<7x5x128xf32>
    %835 = arith.mulf %830, %834 : vector<7x5x128xf32>
    %836 = arith.addf %829, %835 : vector<7x5x128xf32>
    %837 = vector.extract_strided_slice %808 {offsets = [4, 0, 0], sizes = [7, 5, 128], strides = [1, 1, 1]} : vector<11x5x128xf32> to vector<7x5x128xf32>
    %838 = vector.extract_strided_slice %806 {offsets = [4, 0, 0], sizes = [1, 5, 128], strides = [1, 1, 1]} : vector<5x5x128xf32> to vector<1x5x128xf32>
    %839 = vector.shape_cast %838 : vector<1x5x128xf32> to vector<5x128xf32>
    %840 = vector.shape_cast %839 : vector<5x128xf32> to vector<1x5x128xf32>
    %841 = vector.broadcast %840 : vector<1x5x128xf32> to vector<7x5x128xf32>
    %842 = arith.mulf %837, %841 : vector<7x5x128xf32>
    %843 = arith.addf %836, %842 : vector<7x5x128xf32>
    %c4_204 = arith.constant 4 : index
    %c0_205 = arith.constant 0 : index
    %c0_206 = arith.constant 0 : index
    %c0_207 = arith.constant 0 : index
    %844 = vector.load %arg2[%c4_204, %c0_205, %c0_206, %c0_207] : memref<5x5x5x128xf32, #tpu.memory_space<vmem>>, vector<1x5x5x128xf32>
    %845 = vector.shape_cast %844 : vector<1x5x5x128xf32> to vector<5x5x128xf32>
    %c6 = arith.constant 6 : index
    %c0_208 = arith.constant 0 : index
    %c0_209 = arith.constant 0 : index
    %c0_210 = arith.constant 0 : index
    %846 = vector.load %arg4[%c6, %c0_208, %c0_209, %c0_210] : memref<7x11x5x128xf32, #tpu.memory_space<vmem>>, vector<1x11x5x128xf32>
    %847 = vector.shape_cast %846 : vector<1x11x5x128xf32> to vector<11x5x128xf32>
    %848 = vector.extract_strided_slice %847 {offsets = [0, 0, 0], sizes = [7, 5, 128], strides = [1, 1, 1]} : vector<11x5x128xf32> to vector<7x5x128xf32>
    %849 = vector.extract_strided_slice %845 {offsets = [0, 0, 0], sizes = [1, 5, 128], strides = [1, 1, 1]} : vector<5x5x128xf32> to vector<1x5x128xf32>
    %850 = vector.shape_cast %849 : vector<1x5x128xf32> to vector<5x128xf32>
    %851 = vector.shape_cast %850 : vector<5x128xf32> to vector<1x5x128xf32>
    %852 = vector.broadcast %851 : vector<1x5x128xf32> to vector<7x5x128xf32>
    %853 = arith.mulf %848, %852 : vector<7x5x128xf32>
    %854 = arith.addf %843, %853 : vector<7x5x128xf32>
    %855 = vector.extract_strided_slice %847 {offsets = [1, 0, 0], sizes = [7, 5, 128], strides = [1, 1, 1]} : vector<11x5x128xf32> to vector<7x5x128xf32>
    %856 = vector.extract_strided_slice %845 {offsets = [1, 0, 0], sizes = [1, 5, 128], strides = [1, 1, 1]} : vector<5x5x128xf32> to vector<1x5x128xf32>
    %857 = vector.shape_cast %856 : vector<1x5x128xf32> to vector<5x128xf32>
    %858 = vector.shape_cast %857 : vector<5x128xf32> to vector<1x5x128xf32>
    %859 = vector.broadcast %858 : vector<1x5x128xf32> to vector<7x5x128xf32>
    %860 = arith.mulf %855, %859 : vector<7x5x128xf32>
    %861 = arith.addf %854, %860 : vector<7x5x128xf32>
    %862 = vector.extract_strided_slice %847 {offsets = [2, 0, 0], sizes = [7, 5, 128], strides = [1, 1, 1]} : vector<11x5x128xf32> to vector<7x5x128xf32>
    %863 = vector.extract_strided_slice %845 {offsets = [2, 0, 0], sizes = [1, 5, 128], strides = [1, 1, 1]} : vector<5x5x128xf32> to vector<1x5x128xf32>
    %864 = vector.shape_cast %863 : vector<1x5x128xf32> to vector<5x128xf32>
    %865 = vector.shape_cast %864 : vector<5x128xf32> to vector<1x5x128xf32>
    %866 = vector.broadcast %865 : vector<1x5x128xf32> to vector<7x5x128xf32>
    %867 = arith.mulf %862, %866 : vector<7x5x128xf32>
    %868 = arith.addf %861, %867 : vector<7x5x128xf32>
    %869 = vector.extract_strided_slice %847 {offsets = [3, 0, 0], sizes = [7, 5, 128], strides = [1, 1, 1]} : vector<11x5x128xf32> to vector<7x5x128xf32>
    %870 = vector.extract_strided_slice %845 {offsets = [3, 0, 0], sizes = [1, 5, 128], strides = [1, 1, 1]} : vector<5x5x128xf32> to vector<1x5x128xf32>
    %871 = vector.shape_cast %870 : vector<1x5x128xf32> to vector<5x128xf32>
    %872 = vector.shape_cast %871 : vector<5x128xf32> to vector<1x5x128xf32>
    %873 = vector.broadcast %872 : vector<1x5x128xf32> to vector<7x5x128xf32>
    %874 = arith.mulf %869, %873 : vector<7x5x128xf32>
    %875 = arith.addf %868, %874 : vector<7x5x128xf32>
    %876 = vector.extract_strided_slice %847 {offsets = [4, 0, 0], sizes = [7, 5, 128], strides = [1, 1, 1]} : vector<11x5x128xf32> to vector<7x5x128xf32>
    %877 = vector.extract_strided_slice %845 {offsets = [4, 0, 0], sizes = [1, 5, 128], strides = [1, 1, 1]} : vector<5x5x128xf32> to vector<1x5x128xf32>
    %878 = vector.shape_cast %877 : vector<1x5x128xf32> to vector<5x128xf32>
    %879 = vector.shape_cast %878 : vector<5x128xf32> to vector<1x5x128xf32>
    %880 = vector.broadcast %879 : vector<1x5x128xf32> to vector<7x5x128xf32>
    %881 = arith.mulf %876, %880 : vector<7x5x128xf32>
    %882 = arith.addf %875, %881 : vector<7x5x128xf32>
    %c0_211 = arith.constant 0 : index
    %c4_212 = arith.constant 4 : index
    %c0_213 = arith.constant 0 : index
    %c0_214 = arith.constant 0 : index
    %c0_215 = arith.constant 0 : index
    %883 = vector.load %arg3[%c0_211, %c4_212, %c0_213, %c0_214, %c0_215] : memref<1x7x7x5x128xf32, #tpu.memory_space<vmem>>, vector<1x1x7x5x128xf32>
    %884 = vector.shape_cast %883 : vector<1x1x7x5x128xf32> to vector<7x5x128xf32>
    %885 = vector.shape_cast %882 : vector<7x5x128xf32> to vector<1x1x7x5x128xf32>
    tpu.vector_store %arg3[%c0_211, %c4_212, %c0_213, %c0_214, %c0_215], %885 {strides = array<i32>} : memref<1x7x7x5x128xf32, #tpu.memory_space<vmem>>, vector<1x1x7x5x128xf32>,
    %cst_216 = arith.constant 0.000000e+00 : f32
    %886 = vector.broadcast %cst_216 : f32 to vector<7x5x128xf32>
    %c0_217 = arith.constant 0 : index
    %c0_218 = arith.constant 0 : index
    %c0_219 = arith.constant 0 : index
    %c0_220 = arith.constant 0 : index
    %887 = vector.load %arg2[%c0_217, %c0_218, %c0_219, %c0_220] : memref<5x5x5x128xf32, #tpu.memory_space<vmem>>, vector<1x5x5x128xf32>
    %888 = vector.shape_cast %887 : vector<1x5x5x128xf32> to vector<5x5x128xf32>
    %c3_221 = arith.constant 3 : index
    %c0_222 = arith.constant 0 : index
    %c0_223 = arith.constant 0 : index
    %c0_224 = arith.constant 0 : index
    %889 = vector.load %arg4[%c3_221, %c0_222, %c0_223, %c0_224] : memref<7x11x5x128xf32, #tpu.memory_space<vmem>>, vector<1x11x5x128xf32>
    %890 = vector.shape_cast %889 : vector<1x11x5x128xf32> to vector<11x5x128xf32>
    %891 = vector.extract_strided_slice %890 {offsets = [0, 0, 0], sizes = [7, 5, 128], strides = [1, 1, 1]} : vector<11x5x128xf32> to vector<7x5x128xf32>
    %892 = vector.extract_strided_slice %888 {offsets = [0, 0, 0], sizes = [1, 5, 128], strides = [1, 1, 1]} : vector<5x5x128xf32> to vector<1x5x128xf32>
    %893 = vector.shape_cast %892 : vector<1x5x128xf32> to vector<5x128xf32>
    %894 = vector.shape_cast %893 : vector<5x128xf32> to vector<1x5x128xf32>
    %895 = vector.broadcast %894 : vector<1x5x128xf32> to vector<7x5x128xf32>
    %896 = arith.mulf %891, %895 : vector<7x5x128xf32>
    %897 = arith.addf %886, %896 : vector<7x5x128xf32>
    %898 = vector.extract_strided_slice %890 {offsets = [1, 0, 0], sizes = [7, 5, 128], strides = [1, 1, 1]} : vector<11x5x128xf32> to vector<7x5x128xf32>
    %899 = vector.extract_strided_slice %888 {offsets = [1, 0, 0], sizes = [1, 5, 128], strides = [1, 1, 1]} : vector<5x5x128xf32> to vector<1x5x128xf32>
    %900 = vector.shape_cast %899 : vector<1x5x128xf32> to vector<5x128xf32>
    %901 = vector.shape_cast %900 : vector<5x128xf32> to vector<1x5x128xf32>
    %902 = vector.broadcast %901 : vector<1x5x128xf32> to vector<7x5x128xf32>
    %903 = arith.mulf %898, %902 : vector<7x5x128xf32>
    %904 = arith.addf %897, %903 : vector<7x5x128xf32>
    %905 = vector.extract_strided_slice %890 {offsets = [2, 0, 0], sizes = [7, 5, 128], strides = [1, 1, 1]} : vector<11x5x128xf32> to vector<7x5x128xf32>
    %906 = vector.extract_strided_slice %888 {offsets = [2, 0, 0], sizes = [1, 5, 128], strides = [1, 1, 1]} : vector<5x5x128xf32> to vector<1x5x128xf32>
    %907 = vector.shape_cast %906 : vector<1x5x128xf32> to vector<5x128xf32>
    %908 = vector.shape_cast %907 : vector<5x128xf32> to vector<1x5x128xf32>
    %909 = vector.broadcast %908 : vector<1x5x128xf32> to vector<7x5x128xf32>
    %910 = arith.mulf %905, %909 : vector<7x5x128xf32>
    %911 = arith.addf %904, %910 : vector<7x5x128xf32>
    %912 = vector.extract_strided_slice %890 {offsets = [3, 0, 0], sizes = [7, 5, 128], strides = [1, 1, 1]} : vector<11x5x128xf32> to vector<7x5x128xf32>
    %913 = vector.extract_strided_slice %888 {offsets = [3, 0, 0], sizes = [1, 5, 128], strides = [1, 1, 1]} : vector<5x5x128xf32> to vector<1x5x128xf32>
    %914 = vector.shape_cast %913 : vector<1x5x128xf32> to vector<5x128xf32>
    %915 = vector.shape_cast %914 : vector<5x128xf32> to vector<1x5x128xf32>
    %916 = vector.broadcast %915 : vector<1x5x128xf32> to vector<7x5x128xf32>
    %917 = arith.mulf %912, %916 : vector<7x5x128xf32>
    %918 = arith.addf %911, %917 : vector<7x5x128xf32>
    %919 = vector.extract_strided_slice %890 {offsets = [4, 0, 0], sizes = [7, 5, 128], strides = [1, 1, 1]} : vector<11x5x128xf32> to vector<7x5x128xf32>
    %920 = vector.extract_strided_slice %888 {offsets = [4, 0, 0], sizes = [1, 5, 128], strides = [1, 1, 1]} : vector<5x5x128xf32> to vector<1x5x128xf32>
    %921 = vector.shape_cast %920 : vector<1x5x128xf32> to vector<5x128xf32>
    %922 = vector.shape_cast %921 : vector<5x128xf32> to vector<1x5x128xf32>
    %923 = vector.broadcast %922 : vector<1x5x128xf32> to vector<7x5x128xf32>
    %924 = arith.mulf %919, %923 : vector<7x5x128xf32>
    %925 = arith.addf %918, %924 : vector<7x5x128xf32>
    %c1_225 = arith.constant 1 : index
    %c0_226 = arith.constant 0 : index
    %c0_227 = arith.constant 0 : index
    %c0_228 = arith.constant 0 : index
    %926 = vector.load %arg2[%c1_225, %c0_226, %c0_227, %c0_228] : memref<5x5x5x128xf32, #tpu.memory_space<vmem>>, vector<1x5x5x128xf32>
    %927 = vector.shape_cast %926 : vector<1x5x5x128xf32> to vector<5x5x128xf32>
    %c4_229 = arith.constant 4 : index
    %c0_230 = arith.constant 0 : index
    %c0_231 = arith.constant 0 : index
    %c0_232 = arith.constant 0 : index
    %928 = vector.load %arg4[%c4_229, %c0_230, %c0_231, %c0_232] : memref<7x11x5x128xf32, #tpu.memory_space<vmem>>, vector<1x11x5x128xf32>
    %929 = vector.shape_cast %928 : vector<1x11x5x128xf32> to vector<11x5x128xf32>
    %930 = vector.extract_strided_slice %929 {offsets = [0, 0, 0], sizes = [7, 5, 128], strides = [1, 1, 1]} : vector<11x5x128xf32> to vector<7x5x128xf32>
    %931 = vector.extract_strided_slice %927 {offsets = [0, 0, 0], sizes = [1, 5, 128], strides = [1, 1, 1]} : vector<5x5x128xf32> to vector<1x5x128xf32>
    %932 = vector.shape_cast %931 : vector<1x5x128xf32> to vector<5x128xf32>
    %933 = vector.shape_cast %932 : vector<5x128xf32> to vector<1x5x128xf32>
    %934 = vector.broadcast %933 : vector<1x5x128xf32> to vector<7x5x128xf32>
    %935 = arith.mulf %930, %934 : vector<7x5x128xf32>
    %936 = arith.addf %925, %935 : vector<7x5x128xf32>
    %937 = vector.extract_strided_slice %929 {offsets = [1, 0, 0], sizes = [7, 5, 128], strides = [1, 1, 1]} : vector<11x5x128xf32> to vector<7x5x128xf32>
    %938 = vector.extract_strided_slice %927 {offsets = [1, 0, 0], sizes = [1, 5, 128], strides = [1, 1, 1]} : vector<5x5x128xf32> to vector<1x5x128xf32>
    %939 = vector.shape_cast %938 : vector<1x5x128xf32> to vector<5x128xf32>
    %940 = vector.shape_cast %939 : vector<5x128xf32> to vector<1x5x128xf32>
    %941 = vector.broadcast %940 : vector<1x5x128xf32> to vector<7x5x128xf32>
    %942 = arith.mulf %937, %941 : vector<7x5x128xf32>
    %943 = arith.addf %936, %942 : vector<7x5x128xf32>
    %944 = vector.extract_strided_slice %929 {offsets = [2, 0, 0], sizes = [7, 5, 128], strides = [1, 1, 1]} : vector<11x5x128xf32> to vector<7x5x128xf32>
    %945 = vector.extract_strided_slice %927 {offsets = [2, 0, 0], sizes = [1, 5, 128], strides = [1, 1, 1]} : vector<5x5x128xf32> to vector<1x5x128xf32>
    %946 = vector.shape_cast %945 : vector<1x5x128xf32> to vector<5x128xf32>
    %947 = vector.shape_cast %946 : vector<5x128xf32> to vector<1x5x128xf32>
    %948 = vector.broadcast %947 : vector<1x5x128xf32> to vector<7x5x128xf32>
    %949 = arith.mulf %944, %948 : vector<7x5x128xf32>
    %950 = arith.addf %943, %949 : vector<7x5x128xf32>
    %951 = vector.extract_strided_slice %929 {offsets = [3, 0, 0], sizes = [7, 5, 128], strides = [1, 1, 1]} : vector<11x5x128xf32> to vector<7x5x128xf32>
    %952 = vector.extract_strided_slice %927 {offsets = [3, 0, 0], sizes = [1, 5, 128], strides = [1, 1, 1]} : vector<5x5x128xf32> to vector<1x5x128xf32>
    %953 = vector.shape_cast %952 : vector<1x5x128xf32> to vector<5x128xf32>
    %954 = vector.shape_cast %953 : vector<5x128xf32> to vector<1x5x128xf32>
    %955 = vector.broadcast %954 : vector<1x5x128xf32> to vector<7x5x128xf32>
    %956 = arith.mulf %951, %955 : vector<7x5x128xf32>
    %957 = arith.addf %950, %956 : vector<7x5x128xf32>
    %958 = vector.extract_strided_slice %929 {offsets = [4, 0, 0], sizes = [7, 5, 128], strides = [1, 1, 1]} : vector<11x5x128xf32> to vector<7x5x128xf32>
    %959 = vector.extract_strided_slice %927 {offsets = [4, 0, 0], sizes = [1, 5, 128], strides = [1, 1, 1]} : vector<5x5x128xf32> to vector<1x5x128xf32>
    %960 = vector.shape_cast %959 : vector<1x5x128xf32> to vector<5x128xf32>
    %961 = vector.shape_cast %960 : vector<5x128xf32> to vector<1x5x128xf32>
    %962 = vector.broadcast %961 : vector<1x5x128xf32> to vector<7x5x128xf32>
    %963 = arith.mulf %958, %962 : vector<7x5x128xf32>
    %964 = arith.addf %957, %963 : vector<7x5x128xf32>
    %c2_233 = arith.constant 2 : index
    %c0_234 = arith.constant 0 : index
    %c0_235 = arith.constant 0 : index
    %c0_236 = arith.constant 0 : index
    %965 = vector.load %arg2[%c2_233, %c0_234, %c0_235, %c0_236] : memref<5x5x5x128xf32, #tpu.memory_space<vmem>>, vector<1x5x5x128xf32>
    %966 = vector.shape_cast %965 : vector<1x5x5x128xf32> to vector<5x5x128xf32>
    %c5_237 = arith.constant 5 : index
    %c0_238 = arith.constant 0 : index
    %c0_239 = arith.constant 0 : index
    %c0_240 = arith.constant 0 : index
    %967 = vector.load %arg4[%c5_237, %c0_238, %c0_239, %c0_240] : memref<7x11x5x128xf32, #tpu.memory_space<vmem>>, vector<1x11x5x128xf32>
    %968 = vector.shape_cast %967 : vector<1x11x5x128xf32> to vector<11x5x128xf32>
    %969 = vector.extract_strided_slice %968 {offsets = [0, 0, 0], sizes = [7, 5, 128], strides = [1, 1, 1]} : vector<11x5x128xf32> to vector<7x5x128xf32>
    %970 = vector.extract_strided_slice %966 {offsets = [0, 0, 0], sizes = [1, 5, 128], strides = [1, 1, 1]} : vector<5x5x128xf32> to vector<1x5x128xf32>
    %971 = vector.shape_cast %970 : vector<1x5x128xf32> to vector<5x128xf32>
    %972 = vector.shape_cast %971 : vector<5x128xf32> to vector<1x5x128xf32>
    %973 = vector.broadcast %972 : vector<1x5x128xf32> to vector<7x5x128xf32>
    %974 = arith.mulf %969, %973 : vector<7x5x128xf32>
    %975 = arith.addf %964, %974 : vector<7x5x128xf32>
    %976 = vector.extract_strided_slice %968 {offsets = [1, 0, 0], sizes = [7, 5, 128], strides = [1, 1, 1]} : vector<11x5x128xf32> to vector<7x5x128xf32>
    %977 = vector.extract_strided_slice %966 {offsets = [1, 0, 0], sizes = [1, 5, 128], strides = [1, 1, 1]} : vector<5x5x128xf32> to vector<1x5x128xf32>
    %978 = vector.shape_cast %977 : vector<1x5x128xf32> to vector<5x128xf32>
    %979 = vector.shape_cast %978 : vector<5x128xf32> to vector<1x5x128xf32>
    %980 = vector.broadcast %979 : vector<1x5x128xf32> to vector<7x5x128xf32>
    %981 = arith.mulf %976, %980 : vector<7x5x128xf32>
    %982 = arith.addf %975, %981 : vector<7x5x128xf32>
    %983 = vector.extract_strided_slice %968 {offsets = [2, 0, 0], sizes = [7, 5, 128], strides = [1, 1, 1]} : vector<11x5x128xf32> to vector<7x5x128xf32>
    %984 = vector.extract_strided_slice %966 {offsets = [2, 0, 0], sizes = [1, 5, 128], strides = [1, 1, 1]} : vector<5x5x128xf32> to vector<1x5x128xf32>
    %985 = vector.shape_cast %984 : vector<1x5x128xf32> to vector<5x128xf32>
    %986 = vector.shape_cast %985 : vector<5x128xf32> to vector<1x5x128xf32>
    %987 = vector.broadcast %986 : vector<1x5x128xf32> to vector<7x5x128xf32>
    %988 = arith.mulf %983, %987 : vector<7x5x128xf32>
    %989 = arith.addf %982, %988 : vector<7x5x128xf32>
    %990 = vector.extract_strided_slice %968 {offsets = [3, 0, 0], sizes = [7, 5, 128], strides = [1, 1, 1]} : vector<11x5x128xf32> to vector<7x5x128xf32>
    %991 = vector.extract_strided_slice %966 {offsets = [3, 0, 0], sizes = [1, 5, 128], strides = [1, 1, 1]} : vector<5x5x128xf32> to vector<1x5x128xf32>
    %992 = vector.shape_cast %991 : vector<1x5x128xf32> to vector<5x128xf32>
    %993 = vector.shape_cast %992 : vector<5x128xf32> to vector<1x5x128xf32>
    %994 = vector.broadcast %993 : vector<1x5x128xf32> to vector<7x5x128xf32>
    %995 = arith.mulf %990, %994 : vector<7x5x128xf32>
    %996 = arith.addf %989, %995 : vector<7x5x128xf32>
    %997 = vector.extract_strided_slice %968 {offsets = [4, 0, 0], sizes = [7, 5, 128], strides = [1, 1, 1]} : vector<11x5x128xf32> to vector<7x5x128xf32>
    %998 = vector.extract_strided_slice %966 {offsets = [4, 0, 0], sizes = [1, 5, 128], strides = [1, 1, 1]} : vector<5x5x128xf32> to vector<1x5x128xf32>
    %999 = vector.shape_cast %998 : vector<1x5x128xf32> to vector<5x128xf32>
    %1000 = vector.shape_cast %999 : vector<5x128xf32> to vector<1x5x128xf32>
    %1001 = vector.broadcast %1000 : vector<1x5x128xf32> to vector<7x5x128xf32>
    %1002 = arith.mulf %997, %1001 : vector<7x5x128xf32>
    %1003 = arith.addf %996, %1002 : vector<7x5x128xf32>
    %c3_241 = arith.constant 3 : index
    %c0_242 = arith.constant 0 : index
    %c0_243 = arith.constant 0 : index
    %c0_244 = arith.constant 0 : index
    %1004 = vector.load %arg2[%c3_241, %c0_242, %c0_243, %c0_244] : memref<5x5x5x128xf32, #tpu.memory_space<vmem>>, vector<1x5x5x128xf32>
    %1005 = vector.shape_cast %1004 : vector<1x5x5x128xf32> to vector<5x5x128xf32>
    %c6_245 = arith.constant 6 : index
    %c0_246 = arith.constant 0 : index
    %c0_247 = arith.constant 0 : index
    %c0_248 = arith.constant 0 : index
    %1006 = vector.load %arg4[%c6_245, %c0_246, %c0_247, %c0_248] : memref<7x11x5x128xf32, #tpu.memory_space<vmem>>, vector<1x11x5x128xf32>
    %1007 = vector.shape_cast %1006 : vector<1x11x5x128xf32> to vector<11x5x128xf32>
    %1008 = vector.extract_strided_slice %1007 {offsets = [0, 0, 0], sizes = [7, 5, 128], strides = [1, 1, 1]} : vector<11x5x128xf32> to vector<7x5x128xf32>
    %1009 = vector.extract_strided_slice %1005 {offsets = [0, 0, 0], sizes = [1, 5, 128], strides = [1, 1, 1]} : vector<5x5x128xf32> to vector<1x5x128xf32>
    %1010 = vector.shape_cast %1009 : vector<1x5x128xf32> to vector<5x128xf32>
    %1011 = vector.shape_cast %1010 : vector<5x128xf32> to vector<1x5x128xf32>
    %1012 = vector.broadcast %1011 : vector<1x5x128xf32> to vector<7x5x128xf32>
    %1013 = arith.mulf %1008, %1012 : vector<7x5x128xf32>
    %1014 = arith.addf %1003, %1013 : vector<7x5x128xf32>
    %1015 = vector.extract_strided_slice %1007 {offsets = [1, 0, 0], sizes = [7, 5, 128], strides = [1, 1, 1]} : vector<11x5x128xf32> to vector<7x5x128xf32>
    %1016 = vector.extract_strided_slice %1005 {offsets = [1, 0, 0], sizes = [1, 5, 128], strides = [1, 1, 1]} : vector<5x5x128xf32> to vector<1x5x128xf32>
    %1017 = vector.shape_cast %1016 : vector<1x5x128xf32> to vector<5x128xf32>
    %1018 = vector.shape_cast %1017 : vector<5x128xf32> to vector<1x5x128xf32>
    %1019 = vector.broadcast %1018 : vector<1x5x128xf32> to vector<7x5x128xf32>
    %1020 = arith.mulf %1015, %1019 : vector<7x5x128xf32>
    %1021 = arith.addf %1014, %1020 : vector<7x5x128xf32>
    %1022 = vector.extract_strided_slice %1007 {offsets = [2, 0, 0], sizes = [7, 5, 128], strides = [1, 1, 1]} : vector<11x5x128xf32> to vector<7x5x128xf32>
    %1023 = vector.extract_strided_slice %1005 {offsets = [2, 0, 0], sizes = [1, 5, 128], strides = [1, 1, 1]} : vector<5x5x128xf32> to vector<1x5x128xf32>
    %1024 = vector.shape_cast %1023 : vector<1x5x128xf32> to vector<5x128xf32>
    %1025 = vector.shape_cast %1024 : vector<5x128xf32> to vector<1x5x128xf32>
    %1026 = vector.broadcast %1025 : vector<1x5x128xf32> to vector<7x5x128xf32>
    %1027 = arith.mulf %1022, %1026 : vector<7x5x128xf32>
    %1028 = arith.addf %1021, %1027 : vector<7x5x128xf32>
    %1029 = vector.extract_strided_slice %1007 {offsets = [3, 0, 0], sizes = [7, 5, 128], strides = [1, 1, 1]} : vector<11x5x128xf32> to vector<7x5x128xf32>
    %1030 = vector.extract_strided_slice %1005 {offsets = [3, 0, 0], sizes = [1, 5, 128], strides = [1, 1, 1]} : vector<5x5x128xf32> to vector<1x5x128xf32>
    %1031 = vector.shape_cast %1030 : vector<1x5x128xf32> to vector<5x128xf32>
    %1032 = vector.shape_cast %1031 : vector<5x128xf32> to vector<1x5x128xf32>
    %1033 = vector.broadcast %1032 : vector<1x5x128xf32> to vector<7x5x128xf32>
    %1034 = arith.mulf %1029, %1033 : vector<7x5x128xf32>
    %1035 = arith.addf %1028, %1034 : vector<7x5x128xf32>
    %1036 = vector.extract_strided_slice %1007 {offsets = [4, 0, 0], sizes = [7, 5, 128], strides = [1, 1, 1]} : vector<11x5x128xf32> to vector<7x5x128xf32>
    %1037 = vector.extract_strided_slice %1005 {offsets = [4, 0, 0], sizes = [1, 5, 128], strides = [1, 1, 1]} : vector<5x5x128xf32> to vector<1x5x128xf32>
    %1038 = vector.shape_cast %1037 : vector<1x5x128xf32> to vector<5x128xf32>
    %1039 = vector.shape_cast %1038 : vector<5x128xf32> to vector<1x5x128xf32>
    %1040 = vector.broadcast %1039 : vector<1x5x128xf32> to vector<7x5x128xf32>
    %1041 = arith.mulf %1036, %1040 : vector<7x5x128xf32>
    %1042 = arith.addf %1035, %1041 : vector<7x5x128xf32>
    %c0_249 = arith.constant 0 : index
    %c5_250 = arith.constant 5 : index
    %c0_251 = arith.constant 0 : index
    %c0_252 = arith.constant 0 : index
    %c0_253 = arith.constant 0 : index
    %1043 = vector.load %arg3[%c0_249, %c5_250, %c0_251, %c0_252, %c0_253] : memref<1x7x7x5x128xf32, #tpu.memory_space<vmem>>, vector<1x1x7x5x128xf32>
    %1044 = vector.shape_cast %1043 : vector<1x1x7x5x128xf32> to vector<7x5x128xf32>
    %1045 = vector.shape_cast %1042 : vector<7x5x128xf32> to vector<1x1x7x5x128xf32>
    tpu.vector_store %arg3[%c0_249, %c5_250, %c0_251, %c0_252, %c0_253], %1045 {strides = array<i32>} : memref<1x7x7x5x128xf32, #tpu.memory_space<vmem>>, vector<1x1x7x5x128xf32>,
    %cst_254 = arith.constant 0.000000e+00 : f32
    %1046 = vector.broadcast %cst_254 : f32 to vector<7x5x128xf32>
    %c0_255 = arith.constant 0 : index
    %c0_256 = arith.constant 0 : index
    %c0_257 = arith.constant 0 : index
    %c0_258 = arith.constant 0 : index
    %1047 = vector.load %arg2[%c0_255, %c0_256, %c0_257, %c0_258] : memref<5x5x5x128xf32, #tpu.memory_space<vmem>>, vector<1x5x5x128xf32>
    %1048 = vector.shape_cast %1047 : vector<1x5x5x128xf32> to vector<5x5x128xf32>
    %c4_259 = arith.constant 4 : index
    %c0_260 = arith.constant 0 : index
    %c0_261 = arith.constant 0 : index
    %c0_262 = arith.constant 0 : index
    %1049 = vector.load %arg4[%c4_259, %c0_260, %c0_261, %c0_262] : memref<7x11x5x128xf32, #tpu.memory_space<vmem>>, vector<1x11x5x128xf32>
    %1050 = vector.shape_cast %1049 : vector<1x11x5x128xf32> to vector<11x5x128xf32>
    %1051 = vector.extract_strided_slice %1050 {offsets = [0, 0, 0], sizes = [7, 5, 128], strides = [1, 1, 1]} : vector<11x5x128xf32> to vector<7x5x128xf32>
    %1052 = vector.extract_strided_slice %1048 {offsets = [0, 0, 0], sizes = [1, 5, 128], strides = [1, 1, 1]} : vector<5x5x128xf32> to vector<1x5x128xf32>
    %1053 = vector.shape_cast %1052 : vector<1x5x128xf32> to vector<5x128xf32>
    %1054 = vector.shape_cast %1053 : vector<5x128xf32> to vector<1x5x128xf32>
    %1055 = vector.broadcast %1054 : vector<1x5x128xf32> to vector<7x5x128xf32>
    %1056 = arith.mulf %1051, %1055 : vector<7x5x128xf32>
    %1057 = arith.addf %1046, %1056 : vector<7x5x128xf32>
    %1058 = vector.extract_strided_slice %1050 {offsets = [1, 0, 0], sizes = [7, 5, 128], strides = [1, 1, 1]} : vector<11x5x128xf32> to vector<7x5x128xf32>
    %1059 = vector.extract_strided_slice %1048 {offsets = [1, 0, 0], sizes = [1, 5, 128], strides = [1, 1, 1]} : vector<5x5x128xf32> to vector<1x5x128xf32>
    %1060 = vector.shape_cast %1059 : vector<1x5x128xf32> to vector<5x128xf32>
    %1061 = vector.shape_cast %1060 : vector<5x128xf32> to vector<1x5x128xf32>
    %1062 = vector.broadcast %1061 : vector<1x5x128xf32> to vector<7x5x128xf32>
    %1063 = arith.mulf %1058, %1062 : vector<7x5x128xf32>
    %1064 = arith.addf %1057, %1063 : vector<7x5x128xf32>
    %1065 = vector.extract_strided_slice %1050 {offsets = [2, 0, 0], sizes = [7, 5, 128], strides = [1, 1, 1]} : vector<11x5x128xf32> to vector<7x5x128xf32>
    %1066 = vector.extract_strided_slice %1048 {offsets = [2, 0, 0], sizes = [1, 5, 128], strides = [1, 1, 1]} : vector<5x5x128xf32> to vector<1x5x128xf32>
    %1067 = vector.shape_cast %1066 : vector<1x5x128xf32> to vector<5x128xf32>
    %1068 = vector.shape_cast %1067 : vector<5x128xf32> to vector<1x5x128xf32>
    %1069 = vector.broadcast %1068 : vector<1x5x128xf32> to vector<7x5x128xf32>
    %1070 = arith.mulf %1065, %1069 : vector<7x5x128xf32>
    %1071 = arith.addf %1064, %1070 : vector<7x5x128xf32>
    %1072 = vector.extract_strided_slice %1050 {offsets = [3, 0, 0], sizes = [7, 5, 128], strides = [1, 1, 1]} : vector<11x5x128xf32> to vector<7x5x128xf32>
    %1073 = vector.extract_strided_slice %1048 {offsets = [3, 0, 0], sizes = [1, 5, 128], strides = [1, 1, 1]} : vector<5x5x128xf32> to vector<1x5x128xf32>
    %1074 = vector.shape_cast %1073 : vector<1x5x128xf32> to vector<5x128xf32>
    %1075 = vector.shape_cast %1074 : vector<5x128xf32> to vector<1x5x128xf32>
    %1076 = vector.broadcast %1075 : vector<1x5x128xf32> to vector<7x5x128xf32>
    %1077 = arith.mulf %1072, %1076 : vector<7x5x128xf32>
    %1078 = arith.addf %1071, %1077 : vector<7x5x128xf32>
    %1079 = vector.extract_strided_slice %1050 {offsets = [4, 0, 0], sizes = [7, 5, 128], strides = [1, 1, 1]} : vector<11x5x128xf32> to vector<7x5x128xf32>
    %1080 = vector.extract_strided_slice %1048 {offsets = [4, 0, 0], sizes = [1, 5, 128], strides = [1, 1, 1]} : vector<5x5x128xf32> to vector<1x5x128xf32>
    %1081 = vector.shape_cast %1080 : vector<1x5x128xf32> to vector<5x128xf32>
    %1082 = vector.shape_cast %1081 : vector<5x128xf32> to vector<1x5x128xf32>
    %1083 = vector.broadcast %1082 : vector<1x5x128xf32> to vector<7x5x128xf32>
    %1084 = arith.mulf %1079, %1083 : vector<7x5x128xf32>
    %1085 = arith.addf %1078, %1084 : vector<7x5x128xf32>
    %c1_263 = arith.constant 1 : index
    %c0_264 = arith.constant 0 : index
    %c0_265 = arith.constant 0 : index
    %c0_266 = arith.constant 0 : index
    %1086 = vector.load %arg2[%c1_263, %c0_264, %c0_265, %c0_266] : memref<5x5x5x128xf32, #tpu.memory_space<vmem>>, vector<1x5x5x128xf32>
    %1087 = vector.shape_cast %1086 : vector<1x5x5x128xf32> to vector<5x5x128xf32>
    %c5_267 = arith.constant 5 : index
    %c0_268 = arith.constant 0 : index
    %c0_269 = arith.constant 0 : index
    %c0_270 = arith.constant 0 : index
    %1088 = vector.load %arg4[%c5_267, %c0_268, %c0_269, %c0_270] : memref<7x11x5x128xf32, #tpu.memory_space<vmem>>, vector<1x11x5x128xf32>
    %1089 = vector.shape_cast %1088 : vector<1x11x5x128xf32> to vector<11x5x128xf32>
    %1090 = vector.extract_strided_slice %1089 {offsets = [0, 0, 0], sizes = [7, 5, 128], strides = [1, 1, 1]} : vector<11x5x128xf32> to vector<7x5x128xf32>
    %1091 = vector.extract_strided_slice %1087 {offsets = [0, 0, 0], sizes = [1, 5, 128], strides = [1, 1, 1]} : vector<5x5x128xf32> to vector<1x5x128xf32>
    %1092 = vector.shape_cast %1091 : vector<1x5x128xf32> to vector<5x128xf32>
    %1093 = vector.shape_cast %1092 : vector<5x128xf32> to vector<1x5x128xf32>
    %1094 = vector.broadcast %1093 : vector<1x5x128xf32> to vector<7x5x128xf32>
    %1095 = arith.mulf %1090, %1094 : vector<7x5x128xf32>
    %1096 = arith.addf %1085, %1095 : vector<7x5x128xf32>
    %1097 = vector.extract_strided_slice %1089 {offsets = [1, 0, 0], sizes = [7, 5, 128], strides = [1, 1, 1]} : vector<11x5x128xf32> to vector<7x5x128xf32>
    %1098 = vector.extract_strided_slice %1087 {offsets = [1, 0, 0], sizes = [1, 5, 128], strides = [1, 1, 1]} : vector<5x5x128xf32> to vector<1x5x128xf32>
    %1099 = vector.shape_cast %1098 : vector<1x5x128xf32> to vector<5x128xf32>
    %1100 = vector.shape_cast %1099 : vector<5x128xf32> to vector<1x5x128xf32>
    %1101 = vector.broadcast %1100 : vector<1x5x128xf32> to vector<7x5x128xf32>
    %1102 = arith.mulf %1097, %1101 : vector<7x5x128xf32>
    %1103 = arith.addf %1096, %1102 : vector<7x5x128xf32>
    %1104 = vector.extract_strided_slice %1089 {offsets = [2, 0, 0], sizes = [7, 5, 128], strides = [1, 1, 1]} : vector<11x5x128xf32> to vector<7x5x128xf32>
    %1105 = vector.extract_strided_slice %1087 {offsets = [2, 0, 0], sizes = [1, 5, 128], strides = [1, 1, 1]} : vector<5x5x128xf32> to vector<1x5x128xf32>
    %1106 = vector.shape_cast %1105 : vector<1x5x128xf32> to vector<5x128xf32>
    %1107 = vector.shape_cast %1106 : vector<5x128xf32> to vector<1x5x128xf32>
    %1108 = vector.broadcast %1107 : vector<1x5x128xf32> to vector<7x5x128xf32>
    %1109 = arith.mulf %1104, %1108 : vector<7x5x128xf32>
    %1110 = arith.addf %1103, %1109 : vector<7x5x128xf32>
    %1111 = vector.extract_strided_slice %1089 {offsets = [3, 0, 0], sizes = [7, 5, 128], strides = [1, 1, 1]} : vector<11x5x128xf32> to vector<7x5x128xf32>
    %1112 = vector.extract_strided_slice %1087 {offsets = [3, 0, 0], sizes = [1, 5, 128], strides = [1, 1, 1]} : vector<5x5x128xf32> to vector<1x5x128xf32>
    %1113 = vector.shape_cast %1112 : vector<1x5x128xf32> to vector<5x128xf32>
    %1114 = vector.shape_cast %1113 : vector<5x128xf32> to vector<1x5x128xf32>
    %1115 = vector.broadcast %1114 : vector<1x5x128xf32> to vector<7x5x128xf32>
    %1116 = arith.mulf %1111, %1115 : vector<7x5x128xf32>
    %1117 = arith.addf %1110, %1116 : vector<7x5x128xf32>
    %1118 = vector.extract_strided_slice %1089 {offsets = [4, 0, 0], sizes = [7, 5, 128], strides = [1, 1, 1]} : vector<11x5x128xf32> to vector<7x5x128xf32>
    %1119 = vector.extract_strided_slice %1087 {offsets = [4, 0, 0], sizes = [1, 5, 128], strides = [1, 1, 1]} : vector<5x5x128xf32> to vector<1x5x128xf32>
    %1120 = vector.shape_cast %1119 : vector<1x5x128xf32> to vector<5x128xf32>
    %1121 = vector.shape_cast %1120 : vector<5x128xf32> to vector<1x5x128xf32>
    %1122 = vector.broadcast %1121 : vector<1x5x128xf32> to vector<7x5x128xf32>
    %1123 = arith.mulf %1118, %1122 : vector<7x5x128xf32>
    %1124 = arith.addf %1117, %1123 : vector<7x5x128xf32>
    %c2_271 = arith.constant 2 : index
    %c0_272 = arith.constant 0 : index
    %c0_273 = arith.constant 0 : index
    %c0_274 = arith.constant 0 : index
    %1125 = vector.load %arg2[%c2_271, %c0_272, %c0_273, %c0_274] : memref<5x5x5x128xf32, #tpu.memory_space<vmem>>, vector<1x5x5x128xf32>
    %1126 = vector.shape_cast %1125 : vector<1x5x5x128xf32> to vector<5x5x128xf32>
    %c6_275 = arith.constant 6 : index
    %c0_276 = arith.constant 0 : index
    %c0_277 = arith.constant 0 : index
    %c0_278 = arith.constant 0 : index
    %1127 = vector.load %arg4[%c6_275, %c0_276, %c0_277, %c0_278] : memref<7x11x5x128xf32, #tpu.memory_space<vmem>>, vector<1x11x5x128xf32>
    %1128 = vector.shape_cast %1127 : vector<1x11x5x128xf32> to vector<11x5x128xf32>
    %1129 = vector.extract_strided_slice %1128 {offsets = [0, 0, 0], sizes = [7, 5, 128], strides = [1, 1, 1]} : vector<11x5x128xf32> to vector<7x5x128xf32>
    %1130 = vector.extract_strided_slice %1126 {offsets = [0, 0, 0], sizes = [1, 5, 128], strides = [1, 1, 1]} : vector<5x5x128xf32> to vector<1x5x128xf32>
    %1131 = vector.shape_cast %1130 : vector<1x5x128xf32> to vector<5x128xf32>
    %1132 = vector.shape_cast %1131 : vector<5x128xf32> to vector<1x5x128xf32>
    %1133 = vector.broadcast %1132 : vector<1x5x128xf32> to vector<7x5x128xf32>
    %1134 = arith.mulf %1129, %1133 : vector<7x5x128xf32>
    %1135 = arith.addf %1124, %1134 : vector<7x5x128xf32>
    %1136 = vector.extract_strided_slice %1128 {offsets = [1, 0, 0], sizes = [7, 5, 128], strides = [1, 1, 1]} : vector<11x5x128xf32> to vector<7x5x128xf32>
    %1137 = vector.extract_strided_slice %1126 {offsets = [1, 0, 0], sizes = [1, 5, 128], strides = [1, 1, 1]} : vector<5x5x128xf32> to vector<1x5x128xf32>
    %1138 = vector.shape_cast %1137 : vector<1x5x128xf32> to vector<5x128xf32>
    %1139 = vector.shape_cast %1138 : vector<5x128xf32> to vector<1x5x128xf32>
    %1140 = vector.broadcast %1139 : vector<1x5x128xf32> to vector<7x5x128xf32>
    %1141 = arith.mulf %1136, %1140 : vector<7x5x128xf32>
    %1142 = arith.addf %1135, %1141 : vector<7x5x128xf32>
    %1143 = vector.extract_strided_slice %1128 {offsets = [2, 0, 0], sizes = [7, 5, 128], strides = [1, 1, 1]} : vector<11x5x128xf32> to vector<7x5x128xf32>
    %1144 = vector.extract_strided_slice %1126 {offsets = [2, 0, 0], sizes = [1, 5, 128], strides = [1, 1, 1]} : vector<5x5x128xf32> to vector<1x5x128xf32>
    %1145 = vector.shape_cast %1144 : vector<1x5x128xf32> to vector<5x128xf32>
    %1146 = vector.shape_cast %1145 : vector<5x128xf32> to vector<1x5x128xf32>
    %1147 = vector.broadcast %1146 : vector<1x5x128xf32> to vector<7x5x128xf32>
    %1148 = arith.mulf %1143, %1147 : vector<7x5x128xf32>
    %1149 = arith.addf %1142, %1148 : vector<7x5x128xf32>
    %1150 = vector.extract_strided_slice %1128 {offsets = [3, 0, 0], sizes = [7, 5, 128], strides = [1, 1, 1]} : vector<11x5x128xf32> to vector<7x5x128xf32>
    %1151 = vector.extract_strided_slice %1126 {offsets = [3, 0, 0], sizes = [1, 5, 128], strides = [1, 1, 1]} : vector<5x5x128xf32> to vector<1x5x128xf32>
    %1152 = vector.shape_cast %1151 : vector<1x5x128xf32> to vector<5x128xf32>
    %1153 = vector.shape_cast %1152 : vector<5x128xf32> to vector<1x5x128xf32>
    %1154 = vector.broadcast %1153 : vector<1x5x128xf32> to vector<7x5x128xf32>
    %1155 = arith.mulf %1150, %1154 : vector<7x5x128xf32>
    %1156 = arith.addf %1149, %1155 : vector<7x5x128xf32>
    %1157 = vector.extract_strided_slice %1128 {offsets = [4, 0, 0], sizes = [7, 5, 128], strides = [1, 1, 1]} : vector<11x5x128xf32> to vector<7x5x128xf32>
    %1158 = vector.extract_strided_slice %1126 {offsets = [4, 0, 0], sizes = [1, 5, 128], strides = [1, 1, 1]} : vector<5x5x128xf32> to vector<1x5x128xf32>
    %1159 = vector.shape_cast %1158 : vector<1x5x128xf32> to vector<5x128xf32>
    %1160 = vector.shape_cast %1159 : vector<5x128xf32> to vector<1x5x128xf32>
    %1161 = vector.broadcast %1160 : vector<1x5x128xf32> to vector<7x5x128xf32>
    %1162 = arith.mulf %1157, %1161 : vector<7x5x128xf32>
    %1163 = arith.addf %1156, %1162 : vector<7x5x128xf32>
    %c0_279 = arith.constant 0 : index
    %c6_280 = arith.constant 6 : index
    %c0_281 = arith.constant 0 : index
    %c0_282 = arith.constant 0 : index
    %c0_283 = arith.constant 0 : index
    %1164 = vector.load %arg3[%c0_279, %c6_280, %c0_281, %c0_282, %c0_283] : memref<1x7x7x5x128xf32, #tpu.memory_space<vmem>>, vector<1x1x7x5x128xf32>
    %1165 = vector.shape_cast %1164 : vector<1x1x7x5x128xf32> to vector<7x5x128xf32>
    %1166 = vector.shape_cast %1163 : vector<7x5x128xf32> to vector<1x1x7x5x128xf32>
    tpu.vector_store %arg3[%c0_279, %c6_280, %c0_281, %c0_282, %c0_283], %1166 {strides = array<i32>} : memref<1x7x7x5x128xf32, #tpu.memory_space<vmem>>, vector<1x1x7x5x128xf32>,
    return
  }
  func.func @transform_0(%arg0: i32) -> (i32, i32, i32, i32, i32) {
    %c0_i32 = arith.constant 0 : i32
    %c0_i32_0 = arith.constant 0 : i32
    %c0_i32_1 = arith.constant 0 : i32
    %c0_i32_2 = arith.constant 0 : i32
    %c0_i32_3 = arith.constant 0 : i32
    return %arg0, %c0_i32, %c0_i32_0, %c0_i32_1, %c0_i32_2 : i32, i32, i32, i32, i32
  }
  func.func @transform_1(%arg0: i32) -> (i32, i32, i32, i32) {
    %c0_i32 = arith.constant 0 : i32
    %c0_i32_0 = arith.constant 0 : i32
    %c0_i32_1 = arith.constant 0 : i32
    %c0_i32_2 = arith.constant 0 : i32
    %c0_i32_3 = arith.constant 0 : i32
    return %c0_i32, %c0_i32_0, %c0_i32_1, %c0_i32_2 : i32, i32, i32, i32
  }
  func.func @transform_2(%arg0: i32) -> (i32, i32, i32, i32, i32) {
    %c0_i32 = arith.constant 0 : i32
    %c0_i32_0 = arith.constant 0 : i32
    %c0_i32_1 = arith.constant 0 : i32
    %c0_i32_2 = arith.constant 0 : i32
    %c0_i32_3 = arith.constant 0 : i32
    return %arg0, %c0_i32, %c0_i32_0, %c0_i32_1, %c0_i32_2 : i32, i32, i32, i32, i32
  }
}

</mosaic_0001>

<llo_original>
// kernel: relu_dwconv2d.1
$region0: #{relu_dwconv2d.1}
  #allocation0 [shape = 'u32[]', space=smem, size = 0x4, offset = 0x4, fixed_abs, tag = 'smem constant byte address 0x4 - core index']
  #allocation1 [shape = 'u32[144,128]{1,0:T(1,128)}', space=vmem, size = 0x12000, scoped, tag = 'internal scratch']
  #allocation2 [shape = 'f32[7,11,5,128]{3,2,1,0:T(8,128)}', space=vmem, size = 0x4d000, scoped, tag = 'scratch operand']
  %s0 = inlined_call_operand.vmem [shape: f32[1,7,7,5,128], index: 0, kind: input, shape index: {}]
  %s1 = inlined_call_operand.vmem [shape: f32[5,5,5,128], index: 1, kind: input, shape index: {}]
  %s2 = inlined_call_operand.vmem [shape: f32[1,7,7,5,128], index: 2, kind: output, shape index: {}]
  %s3 = sld [smem:[#allocation0]]
  $region18: #{relu_dwconv2d.1} parent=0
    _
  %s5 = ssub.s32 1, %s3
  %s6 = scalar_select 0, %s5, %s3
  // Predicated region
  $region2: #{relu_dwconv2d.1} parent=0 // pred_check
    _
  $region3: #{relu_dwconv2d.1} parent=0 // pred_check_branch
    %8 = sbr.rel (0) target = $region5
  $region4: #{relu_dwconv2d.1} parent=0 // pred_region
    _
  $region5: #{relu_dwconv2d.1} parent=0 // pred_fallthru
    _
  // Predicated region
  $region6: #{relu_dwconv2d.1} parent=0 // pred_check
    _
  $region7: #{relu_dwconv2d.1} parent=0 // pred_check_branch
    %10 = sbr.rel (0) target = $region9
  $region8: #{relu_dwconv2d.1} parent=0 // pred_region
    _
  $region9: #{relu_dwconv2d.1} parent=0 // pred_fallthru
    _
  %11 = vst [vmem:[#allocation2] sm:$0x1f] 0.0
  %12 = vst [vmem:[#allocation2 + $0x8] sm:$0x1f] 0.0
  %13 = vst [vmem:[#allocation2 + $0x58] sm:$0x1f] 0.0
  %14 = vst [vmem:[#allocation2 + $0x60] sm:$0x1f] 0.0
  %15 = vst [vmem:[#allocation2 + $0xb0] sm:$0x1f] 0.0
  %16 = vst [vmem:[#allocation2 + $0xb8] sm:$0x1f] 0.0
  %17 = vst [vmem:[#allocation2 + $0x108] sm:$0x1f] 0.0
  %18 = vst [vmem:[#allocation2 + $0x110] sm:$0x1f] 0.0
  %19 = vst [vmem:[#allocation2 + $0x160] sm:$0x1f] 0.0
  %20 = vst [vmem:[#allocation2 + $0x168] sm:$0x1f] 0.0
  %21 = vst [vmem:[#allocation2 + $0x1b8] sm:$0x1f] 0.0
  %22 = vst [vmem:[#allocation2 + $0x1c0] sm:$0x1f] 0.0
  %23 = vst [vmem:[#allocation2 + $0x210] sm:$0x1f] 0.0
  %24 = vst [vmem:[#allocation2 + $0x218] sm:$0x1f] 0.0
  %s25 = scalar_lea.vmem [#allocation2], 72
  %26 = vst [vmem:[%s25] sm:$0x1f] 0.0
  %27 = vst [vmem:[%s25 + $0x8] sm:$0x1f] 0.0
  %28 = vst [vmem:[%s25 + $0x58] sm:$0x1f] 0.0
  %29 = vst [vmem:[%s25 + $0x60] sm:$0x1f] 0.0
  %30 = vst [vmem:[%s25 + $0xb0] sm:$0x1f] 0.0
  %31 = vst [vmem:[%s25 + $0xb8] sm:$0x1f] 0.0
  %32 = vst [vmem:[%s25 + $0x108] sm:$0x1f] 0.0
  %33 = vst [vmem:[%s25 + $0x110] sm:$0x1f] 0.0
  %34 = vst [vmem:[%s25 + $0x160] sm:$0x1f] 0.0
  %35 = vst [vmem:[%s25 + $0x168] sm:$0x1f] 0.0
  %36 = vst [vmem:[%s25 + $0x1b8] sm:$0x1f] 0.0
  %37 = vst [vmem:[%s25 + $0x1c0] sm:$0x1f] 0.0
  %38 = vst [vmem:[%s25 + $0x210] sm:$0x1f] 0.0
  %39 = vst [vmem:[%s25 + $0x218] sm:$0x1f] 0.0
  %v40 = vld [vmem:[%s0] sm:$0x1f]
  %v41 = vld [vmem:[%s0 + $0x8] sm:$0x1f]
  %v42 = vld [vmem:[%s0 + $0x10] sm:$0x1f]
  %v43 = vld [vmem:[%s0 + $0x18] sm:$0x1f]
  %v44 = vld [vmem:[%s0 + $0x20] sm:$0x1f]
  %v45 = vld [vmem:[%s0 + $0x28] sm:$0x1f]
  %v46 = vld [vmem:[%s0 + $0x30] sm:$0x1f]
  %v47 = vld [vmem:[%s0 + $0x38] sm:$0x1f]
  %v48 = vld [vmem:[%s0 + $0x40] sm:$0x1f]
  %v49 = vld [vmem:[%s0 + $0x48] sm:$0x1f]
  %v50 = vld [vmem:[%s0 + $0x50] sm:$0x1f]
  %v51 = vld [vmem:[%s0 + $0x58] sm:$0x1f]
  %v52 = vld [vmem:[%s0 + $0x60] sm:$0x1f]
  %v53 = vld [vmem:[%s0 + $0x68] sm:$0x1f]
  %v54 = vld [vmem:[%s0 + $0x70] sm:$0x1f]
  %v55 = vld [vmem:[%s0 + $0x78] sm:$0x1f]
  %v56 = vld [vmem:[%s0 + $0x80] sm:$0x1f]
  %v57 = vld [vmem:[%s0 + $0x88] sm:$0x1f]
  %v58 = vld [vmem:[%s0 + $0x90] sm:$0x1f]
  %v59 = vld [vmem:[%s0 + $0x98] sm:$0x1f]
  %v60 = vld [vmem:[%s0 + $0xa0] sm:$0x1f]
  %v61 = vld [vmem:[%s0 + $0xa8] sm:$0x1f]
  %v62 = vld [vmem:[%s0 + $0xb0] sm:$0x1f]
  %v63 = vld [vmem:[%s0 + $0xb8] sm:$0x1f]
  %v64 = vld [vmem:[%s0 + $0xc0] sm:$0x1f]
  %v65 = vld [vmem:[%s0 + $0xc8] sm:$0x1f]
  %v66 = vld [vmem:[%s0 + $0xd0] sm:$0x1f]
  %v67 = vld [vmem:[%s0 + $0xd8] sm:$0x1f]
  %v68 = vld [vmem:[%s0 + $0xe0] sm:$0x1f]
  %v69 = vld [vmem:[%s0 + $0xe8] sm:$0x1f]
  %v70 = vld [vmem:[%s0 + $0xf0] sm:$0x1f]
  %v71 = vld [vmem:[%s0 + $0xf8] sm:$0x1f]
  %v72 = vld [vmem:[%s0 + $0x100] sm:$0x1f]
  %v73 = vld [vmem:[%s0 + $0x108] sm:$0x1f]
  %v74 = vld [vmem:[%s0 + $0x110] sm:$0x1f]
  %v75 = vld [vmem:[%s0 + $0x118] sm:$0x1f]
  %v76 = vld [vmem:[%s0 + $0x120] sm:$0x1f]
  %v77 = vld [vmem:[%s0 + $0x128] sm:$0x1f]
  %v78 = vld [vmem:[%s0 + $0x130] sm:$0x1f]
  %v79 = vld [vmem:[%s0 + $0x138] sm:$0x1f]
  %v80 = vld [vmem:[%s0 + $0x140] sm:$0x1f]
  %v81 = vld [vmem:[%s0 + $0x148] sm:$0x1f]
  %v82 = vld [vmem:[%s0 + $0x150] sm:$0x1f]
  %v83 = vld [vmem:[%s0 + $0x158] sm:$0x1f]
  %v84 = vld [vmem:[%s0 + $0x160] sm:$0x1f]
  %v85 = vld [vmem:[%s0 + $0x168] sm:$0x1f]
  %v86 = vld [vmem:[%s0 + $0x170] sm:$0x1f]
  %v87 = vld [vmem:[%s0 + $0x178] sm:$0x1f]
  %v88 = vld [vmem:[%s0 + $0x180] sm:$0x1f]
  %v89 = vmax.f32 %v40, 0.0
  %v90 = vmax.f32 %v41, 0.0
  %v91 = vmax.f32 %v42, 0.0
  %v92 = vmax.f32 %v43, 0.0
  %v93 = vmax.f32 %v44, 0.0
  %v94 = vmax.f32 %v45, 0.0
  %v95 = vmax.f32 %v46, 0.0
  %v96 = vmax.f32 %v47, 0.0
  %v97 = vmax.f32 %v48, 0.0
  %v98 = vmax.f32 %v49, 0.0
  %v99 = vmax.f32 %v50, 0.0
  %v100 = vmax.f32 %v51, 0.0
  %v101 = vmax.f32 %v52, 0.0
  %v102 = vmax.f32 %v53, 0.0
  %v103 = vmax.f32 %v54, 0.0
  %v104 = vmax.f32 %v55, 0.0
  %v105 = vmax.f32 %v56, 0.0
  %v106 = vmax.f32 %v57, 0.0
  %v107 = vmax.f32 %v58, 0.0
  %v108 = vmax.f32 %v59, 0.0
  %v109 = vmax.f32 %v60, 0.0
  %v110 = vmax.f32 %v61, 0.0
  %v111 = vmax.f32 %v62, 0.0
  %v112 = vmax.f32 %v63, 0.0
  %v113 = vmax.f32 %v64, 0.0
  %v114 = vmax.f32 %v65, 0.0
  %v115 = vmax.f32 %v66, 0.0
  %v116 = vmax.f32 %v67, 0.0
  %v117 = vmax.f32 %v68, 0.0
  %v118 = vmax.f32 %v69, 0.0
  %v119 = vmax.f32 %v70, 0.0
  %v120 = vmax.f32 %v71, 0.0
  %v121 = vmax.f32 %v72, 0.0
  %v122 = vmax.f32 %v73, 0.0
  %v123 = vmax.f32 %v74, 0.0
  %v124 = vmax.f32 %v75, 0.0
  %v125 = vmax.f32 %v76, 0.0
  %v126 = vmax.f32 %v77, 0.0
  %v127 = vmax.f32 %v78, 0.0
  %v128 = vmax.f32 %v79, 0.0
  %v129 = vmax.f32 %v80, 0.0
  %v130 = vmax.f32 %v81, 0.0
  %v131 = vmax.f32 %v82, 0.0
  %v132 = vmax.f32 %v83, 0.0
  %v133 = vmax.f32 %v84, 0.0
  %v134 = vmax.f32 %v85, 0.0
  %v135 = vmax.f32 %v86, 0.0
  %v136 = vmax.f32 %v87, 0.0
  %v137 = vmax.f32 %v88, 0.0
  %s138 = scalar_lea.vmem [#allocation2], 16
  %139 = vst [vmem:[%s138] sm:$0x1f] %v89
  %140 = vst [vmem:[%s138 + $0x8] sm:$0x1f] %v90
  %141 = vst [vmem:[%s138 + $0x10] sm:$0x1f] %v91
  %142 = vst [vmem:[%s138 + $0x18] sm:$0x1f] %v92
  %143 = vst [vmem:[%s138 + $0x20] sm:$0x1f] %v93
  %144 = vst [vmem:[%s138 + $0x28] sm:$0x1f] %v94
  %145 = vst [vmem:[%s138 + $0x30] sm:$0x1f] %v95
  %146 = vst [vmem:[%s138 + $0x58] sm:$0x1f] %v96
  %147 = vst [vmem:[%s138 + $0x60] sm:$0x1f] %v97
  %148 = vst [vmem:[%s138 + $0x68] sm:$0x1f] %v98
  %149 = vst [vmem:[%s138 + $0x70] sm:$0x1f] %v99
  %150 = vst [vmem:[%s138 + $0x78] sm:$0x1f] %v100
  %151 = vst [vmem:[%s138 + $0x80] sm:$0x1f] %v101
  %152 = vst [vmem:[%s138 + $0x88] sm:$0x1f] %v102
  %153 = vst [vmem:[%s138 + $0xb0] sm:$0x1f] %v103
  %154 = vst [vmem:[%s138 + $0xb8] sm:$0x1f] %v104
  %155 = vst [vmem:[%s138 + $0xc0] sm:$0x1f] %v105
  %156 = vst [vmem:[%s138 + $0xc8] sm:$0x1f] %v106
  %157 = vst [vmem:[%s138 + $0xd0] sm:$0x1f] %v107
  %158 = vst [vmem:[%s138 + $0xd8] sm:$0x1f] %v108
  %159 = vst [vmem:[%s138 + $0xe0] sm:$0x1f] %v109
  %160 = vst [vmem:[%s138 + $0x108] sm:$0x1f] %v110
  %161 = vst [vmem:[%s138 + $0x110] sm:$0x1f] %v111
  %162 = vst [vmem:[%s138 + $0x118] sm:$0x1f] %v112
  %163 = vst [vmem:[%s138 + $0x120] sm:$0x1f] %v113
  %164 = vst [vmem:[%s138 + $0x128] sm:$0x1f] %v114
  %165 = vst [vmem:[%s138 + $0x130] sm:$0x1f] %v115
  %166 = vst [vmem:[%s138 + $0x138] sm:$0x1f] %v116
  %167 = vst [vmem:[%s138 + $0x160] sm:$0x1f] %v117
  %168 = vst [vmem:[%s138 + $0x168] sm:$0x1f] %v118
  %169 = vst [vmem:[%s138 + $0x170] sm:$0x1f] %v119
  %170 = vst [vmem:[%s138 + $0x178] sm:$0x1f] %v120
  %171 = vst [vmem:[%s138 + $0x180] sm:$0x1f] %v121
  %172 = vst [vmem:[%s138 + $0x188] sm:$0x1f] %v122
  %173 = vst [vmem:[%s138 + $0x190] sm:$0x1f] %v123
  %174 = vst [vmem:[%s138 + $0x1b8] sm:$0x1f] %v124
  %175 = vst [vmem:[%s138 + $0x1c0] sm:$0x1f] %v125
  %176 = vst [vmem:[%s138 + $0x1c8] sm:$0x1f] %v126
  %177 = vst [vmem:[%s138 + $0x1d0] sm:$0x1f] %v127
  %178 = vst [vmem:[%s138 + $0x1d8] sm:$0x1f] %v128
  %179 = vst [vmem:[%s138 + $0x1e0] sm:$0x1f] %v129
  %180 = vst [vmem:[%s138 + $0x1e8] sm:$0x1f] %v130
  %181 = vst [vmem:[%s138 + $0x210] sm:$0x1f] %v131
  %182 = vst [vmem:[%s138 + $0x218] sm:$0x1f] %v132
  %183 = vst [vmem:[%s138 + $0x220] sm:$0x1f] %v133
  %184 = vst [vmem:[%s138 + $0x228] sm:$0x1f] %v134
  %185 = vst [vmem:[%s138 + $0x230] sm:$0x1f] %v135
  %186 = vst [vmem:[%s138 + $0x238] sm:$0x1f] %v136
  %187 = vst [vmem:[%s138 + $0x240] sm:$0x1f] %v137
  %s188 = scalar_lea.vmem %s1, 80
  %v189 = vld [vmem:[%s188] sm:$0x1f]
  %v190 = vld [vmem:[%s188 + $0x8] sm:$0x1f]
  %v191 = vld [vmem:[%s188 + $0x10] sm:$0x1f]
  %v192 = vld [vmem:[%s188 + $0x18] sm:$0x1f]
  %v193 = vld [vmem:[%s188 + $0x20] sm:$0x1f]
  %v194 = vld [vmem:[#allocation2] sm:$0x1f]
  %v195 = vld [vmem:[#allocation2 + $0x8] sm:$0x1f]
  %v196 = vld [vmem:[#allocation2 + $0x10] sm:$0x1f]
  %v197 = vld [vmem:[#allocation2 + $0x18] sm:$0x1f]
  %v198 = vld [vmem:[#allocation2 + $0x20] sm:$0x1f]
  %v199 = vld [vmem:[#allocation2 + $0x28] sm:$0x1f]
  %v200 = vld [vmem:[#allocation2 + $0x30] sm:$0x1f]
  %v201 = vld [vmem:[#allocation2 + $0x38] sm:$0x1f]
  %v202 = vld [vmem:[#allocation2 + $0x40] sm:$0x1f]
  %v203 = vld [vmem:[#allocation2 + $0x48] sm:$0x1f]
  %v204 = vld [vmem:[#allocation2 + $0x50] sm:$0x1f]
  %v205 = vmul.f32 %v194, %v189
  %v206 = vmul.f32 %v195, %v189
  %v207 = vmul.f32 %v196, %v189
  %v208 = vmul.f32 %v197, %v189
  %v209 = vmul.f32 %v198, %v189
  %v210 = vmul.f32 %v199, %v189
  %v211 = vmul.f32 %v200, %v189
  %v212 = vadd.f32 %v205, 0.0
  %v213 = vadd.f32 %v206, 0.0
  %v214 = vadd.f32 %v207, 0.0
  %v215 = vadd.f32 %v208, 0.0
  %v216 = vadd.f32 %v209, 0.0
  %v217 = vadd.f32 %v210, 0.0
  %v218 = vadd.f32 %v211, 0.0
  %v219 = vmul.f32 %v195, %v190
  %v220 = vmul.f32 %v196, %v190
  %v221 = vmul.f32 %v197, %v190
  %v222 = vmul.f32 %v198, %v190
  %v223 = vmul.f32 %v199, %v190
  %v224 = vmul.f32 %v200, %v190
  %v225 = vmul.f32 %v201, %v190
  %v226 = vadd.f32 %v212, %v219
  %v227 = vadd.f32 %v213, %v220
  %v228 = vadd.f32 %v214, %v221
  %v229 = vadd.f32 %v215, %v222
  %v230 = vadd.f32 %v216, %v223
  %v231 = vadd.f32 %v217, %v224
  %v232 = vadd.f32 %v218, %v225
  %v233 = vmul.f32 %v196, %v191
  %v234 = vmul.f32 %v197, %v191
  %v235 = vmul.f32 %v198, %v191
  %v236 = vmul.f32 %v199, %v191
  %v237 = vmul.f32 %v200, %v191
  %v238 = vmul.f32 %v201, %v191
  %v239 = vmul.f32 %v202, %v191
  %v240 = vadd.f32 %v226, %v233
  %v241 = vadd.f32 %v227, %v234
  %v242 = vadd.f32 %v228, %v235
  %v243 = vadd.f32 %v229, %v236
  %v244 = vadd.f32 %v230, %v237
  %v245 = vadd.f32 %v231, %v238
  %v246 = vadd.f32 %v232, %v239
  %v247 = vmul.f32 %v197, %v192
  %v248 = vmul.f32 %v198, %v192
  %v249 = vmul.f32 %v199, %v192
  %v250 = vmul.f32 %v200, %v192
  %v251 = vmul.f32 %v201, %v192
  %v252 = vmul.f32 %v202, %v192
  %v253 = vmul.f32 %v203, %v192
  %v254 = vadd.f32 %v240, %v247
  %v255 = vadd.f32 %v241, %v248
  %v256 = vadd.f32 %v242, %v249
  %v257 = vadd.f32 %v243, %v250
  %v258 = vadd.f32 %v244, %v251
  %v259 = vadd.f32 %v245, %v252
  %v260 = vadd.f32 %v246, %v253
  %v261 = vmul.f32 %v198, %v193
  %v262 = vmul.f32 %v199, %v193
  %v263 = vmul.f32 %v200, %v193
  %v264 = vmul.f32 %v201, %v193
  %v265 = vmul.f32 %v202, %v193
  %v266 = vmul.f32 %v203, %v193
  %v267 = vmul.f32 %v204, %v193
  %v268 = vadd.f32 %v254, %v261
  %v269 = vadd.f32 %v255, %v262
  %v270 = vadd.f32 %v256, %v263
  %v271 = vadd.f32 %v257, %v264
  %v272 = vadd.f32 %v258, %v265
  %v273 = vadd.f32 %v259, %v266
  %v274 = vadd.f32 %v260, %v267
  %s275 = scalar_lea.vmem %s1, 120
  %v276 = vld [vmem:[%s275] sm:$0x1f]
  %v277 = vld [vmem:[%s275 + $0x8] sm:$0x1f]
  %v278 = vld [vmem:[%s275 + $0x10] sm:$0x1f]
  %v279 = vld [vmem:[%s275 + $0x18] sm:$0x1f]
  %v280 = vld [vmem:[%s275 + $0x20] sm:$0x1f]
  %s281 = scalar_lea.vmem [#allocation2], 88
  %v282 = vld [vmem:[%s281] sm:$0x1f]
  %v283 = vld [vmem:[%s281 + $0x8] sm:$0x1f]
  %v284 = vld [vmem:[%s281 + $0x10] sm:$0x1f]
  %v285 = vld [vmem:[%s281 + $0x18] sm:$0x1f]
  %v286 = vld [vmem:[%s281 + $0x20] sm:$0x1f]
  %v287 = vld [vmem:[%s281 + $0x28] sm:$0x1f]
  %v288 = vld [vmem:[%s281 + $0x30] sm:$0x1f]
  %v289 = vld [vmem:[%s281 + $0x38] sm:$0x1f]
  %v290 = vld [vmem:[%s281 + $0x40] sm:$0x1f]
  %v291 = vld [vmem:[%s281 + $0x48] sm:$0x1f]
  %v292 = vld [vmem:[%s281 + $0x50] sm:$0x1f]
  %v293 = vmul.f32 %v282, %v276
  %v294 = vmul.f32 %v283, %v276
  %v295 = vmul.f32 %v284, %v276
  %v296 = vmul.f32 %v285, %v276
  %v297 = vmul.f32 %v286, %v276
  %v298 = vmul.f32 %v287, %v276
  %v299 = vmul.f32 %v288, %v276
  %v300 = vadd.f32 %v268, %v293
  %v301 = vadd.f32 %v269, %v294
  %v302 = vadd.f32 %v270, %v295
  %v303 = vadd.f32 %v271, %v296
  %v304 = vadd.f32 %v272, %v297
  %v305 = vadd.f32 %v273, %v298
  %v306 = vadd.f32 %v274, %v299
  %v307 = vmul.f32 %v283, %v277
  %v308 = vmul.f32 %v284, %v277
  %v309 = vmul.f32 %v285, %v277
  %v310 = vmul.f32 %v286, %v277
  %v311 = vmul.f32 %v287, %v277
  %v312 = vmul.f32 %v288, %v277
  %v313 = vmul.f32 %v289, %v277
  %v314 = vadd.f32 %v300, %v307
  %v315 = vadd.f32 %v301, %v308
  %v316 = vadd.f32 %v302, %v309
  %v317 = vadd.f32 %v303, %v310
  %v318 = vadd.f32 %v304, %v311
  %v319 = vadd.f32 %v305, %v312
  %v320 = vadd.f32 %v306, %v313
  %v321 = vmul.f32 %v284, %v278
  %v322 = vmul.f32 %v285, %v278
  %v323 = vmul.f32 %v286, %v278
  %v324 = vmul.f32 %v287, %v278
  %v325 = vmul.f32 %v288, %v278
  %v326 = vmul.f32 %v289, %v278
  %v327 = vmul.f32 %v290, %v278
  %v328 = vadd.f32 %v314, %v321
  %v329 = vadd.f32 %v315, %v322
  %v330 = vadd.f32 %v316, %v323
  %v331 = vadd.f32 %v317, %v324
  %v332 = vadd.f32 %v318, %v325
  %v333 = vadd.f32 %v319, %v326
  %v334 = vadd.f32 %v320, %v327
  %v335 = vmul.f32 %v285, %v279
  %v336 = vmul.f32 %v286, %v279
  %v337 = vmul.f32 %v287, %v279
  %v338 = vmul.f32 %v288, %v279
  %v339 = vmul.f32 %v289, %v279
  %v340 = vmul.f32 %v290, %v279
  %v341 = vmul.f32 %v291, %v279
  %v342 = vadd.f32 %v328, %v335
  %v343 = vadd.f32 %v329, %v336
  %v344 = vadd.f32 %v330, %v337
  %v345 = vadd.f32 %v331, %v338
  %v346 = vadd.f32 %v332, %v339
  %v347 = vadd.f32 %v333, %v340
  %v348 = vadd.f32 %v334, %v341
  %v349 = vmul.f32 %v286, %v280
  %v350 = vmul.f32 %v287, %v280
  %v351 = vmul.f32 %v288, %v280
  %v352 = vmul.f32 %v289, %v280
  %v353 = vmul.f32 %v290, %v280
  %v354 = vmul.f32 %v291, %v280
  %v355 = vmul.f32 %v292, %v280
  %v356 = vadd.f32 %v342, %v349
  %v357 = vadd.f32 %v343, %v350
  %v358 = vadd.f32 %v344, %v351
  %v359 = vadd.f32 %v345, %v352
  %v360 = vadd.f32 %v346, %v353
  %v361 = vadd.f32 %v347, %v354
  %v362 = vadd.f32 %v348, %v355
  %s363 = scalar_lea.vmem %s1, 160
  %v364 = vld [vmem:[%s363] sm:$0x1f]
  %v365 = vld [vmem:[%s363 + $0x8] sm:$0x1f]
  %v366 = vld [vmem:[%s363 + $0x10] sm:$0x1f]
  %v367 = vld [vmem:[%s363 + $0x18] sm:$0x1f]
  %v368 = vld [vmem:[%s363 + $0x20] sm:$0x1f]
  %s369 = scalar_lea.vmem [#allocation2], 176
  %v370 = vld [vmem:[%s369] sm:$0x1f]
  %v371 = vld [vmem:[%s369 + $0x8] sm:$0x1f]
  %v372 = vld [vmem:[%s369 + $0x10] sm:$0x1f]
  %v373 = vld [vmem:[%s369 + $0x18] sm:$0x1f]
  %v374 = vld [vmem:[%s369 + $0x20] sm:$0x1f]
  %v375 = vld [vmem:[%s369 + $0x28] sm:$0x1f]
  %v376 = vld [vmem:[%s369 + $0x30] sm:$0x1f]
  %v377 = vld [vmem:[%s369 + $0x38] sm:$0x1f]
  %v378 = vld [vmem:[%s369 + $0x40] sm:$0x1f]
  %v379 = vld [vmem:[%s369 + $0x48] sm:$0x1f]
  %v380 = vld [vmem:[%s369 + $0x50] sm:$0x1f]
  %v381 = vmul.f32 %v370, %v364
  %v382 = vmul.f32 %v371, %v364
  %v383 = vmul.f32 %v372, %v364
  %v384 = vmul.f32 %v373, %v364
  %v385 = vmul.f32 %v374, %v364
  %v386 = vmul.f32 %v375, %v364
  %v387 = vmul.f32 %v376, %v364
  %v388 = vadd.f32 %v356, %v381
  %v389 = vadd.f32 %v357, %v382
  %v390 = vadd.f32 %v358, %v383
  %v391 = vadd.f32 %v359, %v384
  %v392 = vadd.f32 %v360, %v385
  %v393 = vadd.f32 %v361, %v386
  %v394 = vadd.f32 %v362, %v387
  %v395 = vmul.f32 %v371, %v365
  %v396 = vmul.f32 %v372, %v365
  %v397 = vmul.f32 %v373, %v365
  %v398 = vmul.f32 %v374, %v365
  %v399 = vmul.f32 %v375, %v365
  %v400 = vmul.f32 %v376, %v365
  %v401 = vmul.f32 %v377, %v365
  %v402 = vadd.f32 %v388, %v395
  %v403 = vadd.f32 %v389, %v396
  %v404 = vadd.f32 %v390, %v397
  %v405 = vadd.f32 %v391, %v398
  %v406 = vadd.f32 %v392, %v399
  %v407 = vadd.f32 %v393, %v400
  %v408 = vadd.f32 %v394, %v401
  %v409 = vmul.f32 %v372, %v366
  %v410 = vmul.f32 %v373, %v366
  %v411 = vmul.f32 %v374, %v366
  %v412 = vmul.f32 %v375, %v366
  %v413 = vmul.f32 %v376, %v366
  %v414 = vmul.f32 %v377, %v366
  %v415 = vmul.f32 %v378, %v366
  %v416 = vadd.f32 %v402, %v409
  %v417 = vadd.f32 %v403, %v410
  %v418 = vadd.f32 %v404, %v411
  %v419 = vadd.f32 %v405, %v412
  %v420 = vadd.f32 %v406, %v413
  %v421 = vadd.f32 %v407, %v414
  %v422 = vadd.f32 %v408, %v415
  %v423 = vmul.f32 %v373, %v367
  %v424 = vmul.f32 %v374, %v367
  %v425 = vmul.f32 %v375, %v367
  %v426 = vmul.f32 %v376, %v367
  %v427 = vmul.f32 %v377, %v367
  %v428 = vmul.f32 %v378, %v367
  %v429 = vmul.f32 %v379, %v367
  %v430 = vadd.f32 %v416, %v423
  %v431 = vadd.f32 %v417, %v424
  %v432 = vadd.f32 %v418, %v425
  %v433 = vadd.f32 %v419, %v426
  %v434 = vadd.f32 %v420, %v427
  %v435 = vadd.f32 %v421, %v428
  %v436 = vadd.f32 %v422, %v429
  %v437 = vmul.f32 %v374, %v368
  %v438 = vmul.f32 %v375, %v368
  %v439 = vmul.f32 %v376, %v368
  %v440 = vmul.f32 %v377, %v368
  %v441 = vmul.f32 %v378, %v368
  %v442 = vmul.f32 %v379, %v368
  %v443 = vmul.f32 %v380, %v368
  %v444 = vadd.f32 %v430, %v437
  %v445 = vadd.f32 %v431, %v438
  %v446 = vadd.f32 %v432, %v439
  %v447 = vadd.f32 %v433, %v440
  %v448 = vadd.f32 %v434, %v441
  %v449 = vadd.f32 %v435, %v442
  %v450 = vadd.f32 %v436, %v443
  %451 = vst [vmem:[%s2] sm:$0x1f] %v444
  %452 = vst [vmem:[%s2 + $0x8] sm:$0x1f] %v445
  %453 = vst [vmem:[%s2 + $0x10] sm:$0x1f] %v446
  %454 = vst [vmem:[%s2 + $0x18] sm:$0x1f] %v447
  %455 = vst [vmem:[%s2 + $0x20] sm:$0x1f] %v448
  %456 = vst [vmem:[%s2 + $0x28] sm:$0x1f] %v449
  %457 = vst [vmem:[%s2 + $0x30] sm:$0x1f] %v450
  %s458 = scalar_lea.vmem %s1, 40
  %v459 = vld [vmem:[%s458] sm:$0x1f]
  %v460 = vld [vmem:[%s458 + $0x8] sm:$0x1f]
  %v461 = vld [vmem:[%s458 + $0x10] sm:$0x1f]
  %v462 = vld [vmem:[%s458 + $0x18] sm:$0x1f]
  %v463 = vld [vmem:[%s458 + $0x20] sm:$0x1f]
  %v464 = vld [vmem:[#allocation2] sm:$0x1f]
  %v465 = vld [vmem:[#allocation2 + $0x8] sm:$0x1f]
  %v466 = vld [vmem:[#allocation2 + $0x10] sm:$0x1f]
  %v467 = vld [vmem:[#allocation2 + $0x18] sm:$0x1f]
  %v468 = vld [vmem:[#allocation2 + $0x20] sm:$0x1f]
  %v469 = vld [vmem:[#allocation2 + $0x28] sm:$0x1f]
  %v470 = vld [vmem:[#allocation2 + $0x30] sm:$0x1f]
  %v471 = vld [vmem:[#allocation2 + $0x38] sm:$0x1f]
  %v472 = vld [vmem:[#allocation2 + $0x40] sm:$0x1f]
  %v473 = vld [vmem:[#allocation2 + $0x48] sm:$0x1f]
  %v474 = vld [vmem:[#allocation2 + $0x50] sm:$0x1f]
  %v475 = vmul.f32 %v464, %v459
  %v476 = vmul.f32 %v465, %v459
  %v477 = vmul.f32 %v466, %v459
  %v478 = vmul.f32 %v467, %v459
  %v479 = vmul.f32 %v468, %v459
  %v480 = vmul.f32 %v469, %v459
  %v481 = vmul.f32 %v470, %v459
  %v482 = vadd.f32 %v475, 0.0
  %v483 = vadd.f32 %v476, 0.0
  %v484 = vadd.f32 %v477, 0.0
  %v485 = vadd.f32 %v478, 0.0
  %v486 = vadd.f32 %v479, 0.0
  %v487 = vadd.f32 %v480, 0.0
  %v488 = vadd.f32 %v481, 0.0
  %v489 = vmul.f32 %v465, %v460
  %v490 = vmul.f32 %v466, %v460
  %v491 = vmul.f32 %v467, %v460
  %v492 = vmul.f32 %v468, %v460
  %v493 = vmul.f32 %v469, %v460
  %v494 = vmul.f32 %v470, %v460
  %v495 = vmul.f32 %v471, %v460
  %v496 = vadd.f32 %v482, %v489
  %v497 = vadd.f32 %v483, %v490
  %v498 = vadd.f32 %v484, %v491
  %v499 = vadd.f32 %v485, %v492
  %v500 = vadd.f32 %v486, %v493
  %v501 = vadd.f32 %v487, %v494
  %v502 = vadd.f32 %v488, %v495
  %v503 = vmul.f32 %v466, %v461
  %v504 = vmul.f32 %v467, %v461
  %v505 = vmul.f32 %v468, %v461
  %v506 = vmul.f32 %v469, %v461
  %v507 = vmul.f32 %v470, %v461
  %v508 = vmul.f32 %v471, %v461
  %v509 = vmul.f32 %v472, %v461
  %v510 = vadd.f32 %v496, %v503
  %v511 = vadd.f32 %v497, %v504
  %v512 = vadd.f32 %v498, %v505
  %v513 = vadd.f32 %v499, %v506
  %v514 = vadd.f32 %v500, %v507
  %v515 = vadd.f32 %v501, %v508
  %v516 = vadd.f32 %v502, %v509
  %v517 = vmul.f32 %v467, %v462
  %v518 = vmul.f32 %v468, %v462
  %v519 = vmul.f32 %v469, %v462
  %v520 = vmul.f32 %v470, %v462
  %v521 = vmul.f32 %v471, %v462
  %v522 = vmul.f32 %v472, %v462
  %v523 = vmul.f32 %v473, %v462
  %v524 = vadd.f32 %v510, %v517
  %v525 = vadd.f32 %v511, %v518
  %v526 = vadd.f32 %v512, %v519
  %v527 = vadd.f32 %v513, %v520
  %v528 = vadd.f32 %v514, %v521
  %v529 = vadd.f32 %v515, %v522
  %v530 = vadd.f32 %v516, %v523
  %v531 = vmul.f32 %v468, %v463
  %v532 = vmul.f32 %v469, %v463
  %v533 = vmul.f32 %v470, %v463
  %v534 = vmul.f32 %v471, %v463
  %v535 = vmul.f32 %v472, %v463
  %v536 = vmul.f32 %v473, %v463
  %v537 = vmul.f32 %v474, %v463
  %v538 = vadd.f32 %v524, %v531
  %v539 = vadd.f32 %v525, %v532
  %v540 = vadd.f32 %v526, %v533
  %v541 = vadd.f32 %v527, %v534
  %v542 = vadd.f32 %v528, %v535
  %v543 = vadd.f32 %v529, %v536
  %v544 = vadd.f32 %v530, %v537
  %v545 = vld [vmem:[%s188] sm:$0x1f]
  %v546 = vld [vmem:[%s188 + $0x8] sm:$0x1f]
  %v547 = vld [vmem:[%s188 + $0x10] sm:$0x1f]
  %v548 = vld [vmem:[%s188 + $0x18] sm:$0x1f]
  %v549 = vld [vmem:[%s188 + $0x20] sm:$0x1f]
  %v550 = vld [vmem:[%s281] sm:$0x1f]
  %v551 = vld [vmem:[%s281 + $0x8] sm:$0x1f]
  %v552 = vld [vmem:[%s281 + $0x10] sm:$0x1f]
  %v553 = vld [vmem:[%s281 + $0x18] sm:$0x1f]
  %v554 = vld [vmem:[%s281 + $0x20] sm:$0x1f]
  %v555 = vld [vmem:[%s281 + $0x28] sm:$0x1f]
  %v556 = vld [vmem:[%s281 + $0x30] sm:$0x1f]
  %v557 = vld [vmem:[%s281 + $0x38] sm:$0x1f]
  %v558 = vld [vmem:[%s281 + $0x40] sm:$0x1f]
  %v559 = vld [vmem:[%s281 + $0x48] sm:$0x1f]
  %v560 = vld [vmem:[%s281 + $0x50] sm:$0x1f]
  %v561 = vmul.f32 %v550, %v545
  %v562 = vmul.f32 %v551, %v545
  %v563 = vmul.f32 %v552, %v545
  %v564 = vmul.f32 %v553, %v545
  %v565 = vmul.f32 %v554, %v545
  %v566 = vmul.f32 %v555, %v545
  %v567 = vmul.f32 %v556, %v545
  %v568 = vadd.f32 %v538, %v561
  %v569 = vadd.f32 %v539, %v562
  %v570 = vadd.f32 %v540, %v563
  %v571 = vadd.f32 %v541, %v564
  %v572 = vadd.f32 %v542, %v565
  %v573 = vadd.f32 %v543, %v566
  %v574 = vadd.f32 %v544, %v567
  %v575 = vmul.f32 %v551, %v546
  %v576 = vmul.f32 %v552, %v546
  %v577 = vmul.f32 %v553, %v546
  %v578 = vmul.f32 %v554, %v546
  %v579 = vmul.f32 %v555, %v546
  %v580 = vmul.f32 %v556, %v546
  %v581 = vmul.f32 %v557, %v546
  %v582 = vadd.f32 %v568, %v575
  %v583 = vadd.f32 %v569, %v576
  %v584 = vadd.f32 %v570, %v577
  %v585 = vadd.f32 %v571, %v578
  %v586 = vadd.f32 %v572, %v579
  %v587 = vadd.f32 %v573, %v580
  %v588 = vadd.f32 %v574, %v581
  %v589 = vmul.f32 %v552, %v547
  %v590 = vmul.f32 %v553, %v547
  %v591 = vmul.f32 %v554, %v547
  %v592 = vmul.f32 %v555, %v547
  %v593 = vmul.f32 %v556, %v547
  %v594 = vmul.f32 %v557, %v547
  %v595 = vmul.f32 %v558, %v547
  %v596 = vadd.f32 %v582, %v589
  %v597 = vadd.f32 %v583, %v590
  %v598 = vadd.f32 %v584, %v591
  %v599 = vadd.f32 %v585, %v592
  %v600 = vadd.f32 %v586, %v593
  %v601 = vadd.f32 %v587, %v594
  %v602 = vadd.f32 %v588, %v595
  %v603 = vmul.f32 %v553, %v548
  %v604 = vmul.f32 %v554, %v548
  %v605 = vmul.f32 %v555, %v548
  %v606 = vmul.f32 %v556, %v548
  %v607 = vmul.f32 %v557, %v548
  %v608 = vmul.f32 %v558, %v548
  %v609 = vmul.f32 %v559, %v548
  %v610 = vadd.f32 %v596, %v603
  %v611 = vadd.f32 %v597, %v604
  %v612 = vadd.f32 %v598, %v605
  %v613 = vadd.f32 %v599, %v606
  %v614 = vadd.f32 %v600, %v607
  %v615 = vadd.f32 %v601, %v608
  %v616 = vadd.f32 %v602, %v609
  %v617 = vmul.f32 %v554, %v549
  %v618 = vmul.f32 %v555, %v549
  %v619 = vmul.f32 %v556, %v549
  %v620 = vmul.f32 %v557, %v549
  %v621 = vmul.f32 %v558, %v549
  %v622 = vmul.f32 %v559, %v549
  %v623 = vmul.f32 %v560, %v549
  %v624 = vadd.f32 %v610, %v617
  %v625 = vadd.f32 %v611, %v618
  %v626 = vadd.f32 %v612, %v619
  %v627 = vadd.f32 %v613, %v620
  %v628 = vadd.f32 %v614, %v621
  %v629 = vadd.f32 %v615, %v622
  %v630 = vadd.f32 %v616, %v623
  %v631 = vld [vmem:[%s275] sm:$0x1f]
  %v632 = vld [vmem:[%s275 + $0x8] sm:$0x1f]
  %v633 = vld [vmem:[%s275 + $0x10] sm:$0x1f]
  %v634 = vld [vmem:[%s275 + $0x18] sm:$0x1f]
  %v635 = vld [vmem:[%s275 + $0x20] sm:$0x1f]
  %v636 = vld [vmem:[%s369] sm:$0x1f]
  %v637 = vld [vmem:[%s369 + $0x8] sm:$0x1f]
  %v638 = vld [vmem:[%s369 + $0x10] sm:$0x1f]
  %v639 = vld [vmem:[%s369 + $0x18] sm:$0x1f]
  %v640 = vld [vmem:[%s369 + $0x20] sm:$0x1f]
  %v641 = vld [vmem:[%s369 + $0x28] sm:$0x1f]
  %v642 = vld [vmem:[%s369 + $0x30] sm:$0x1f]
  %v643 = vld [vmem:[%s369 + $0x38] sm:$0x1f]
  %v644 = vld [vmem:[%s369 + $0x40] sm:$0x1f]
  %v645 = vld [vmem:[%s369 + $0x48] sm:$0x1f]
  %v646 = vld [vmem:[%s369 + $0x50] sm:$0x1f]
  %v647 = vmul.f32 %v636, %v631
  %v648 = vmul.f32 %v637, %v631
  %v649 = vmul.f32 %v638, %v631
  %v650 = vmul.f32 %v639, %v631
  %v651 = vmul.f32 %v640, %v631
  %v652 = vmul.f32 %v641, %v631
  %v653 = vmul.f32 %v642, %v631
  %v654 = vadd.f32 %v624, %v647
  %v655 = vadd.f32 %v625, %v648
  %v656 = vadd.f32 %v626, %v649
  %v657 = vadd.f32 %v627, %v650
  %v658 = vadd.f32 %v628, %v651
  %v659 = vadd.f32 %v629, %v652
  %v660 = vadd.f32 %v630, %v653
  %v661 = vmul.f32 %v637, %v632
  %v662 = vmul.f32 %v638, %v632
  %v663 = vmul.f32 %v639, %v632
  %v664 = vmul.f32 %v640, %v632
  %v665 = vmul.f32 %v641, %v632
  %v666 = vmul.f32 %v642, %v632
  %v667 = vmul.f32 %v643, %v632
  %v668 = vadd.f32 %v654, %v661
  %v669 = vadd.f32 %v655, %v662
  %v670 = vadd.f32 %v656, %v663
  %v671 = vadd.f32 %v657, %v664
  %v672 = vadd.f32 %v658, %v665
  %v673 = vadd.f32 %v659, %v666
  %v674 = vadd.f32 %v660, %v667
  %v675 = vmul.f32 %v638, %v633
  %v676 = vmul.f32 %v639, %v633
  %v677 = vmul.f32 %v640, %v633
  %v678 = vmul.f32 %v641, %v633
  %v679 = vmul.f32 %v642, %v633
  %v680 = vmul.f32 %v643, %v633
  %v681 = vmul.f32 %v644, %v633
  %v682 = vadd.f32 %v668, %v675
  %v683 = vadd.f32 %v669, %v676
  %v684 = vadd.f32 %v670, %v677
  %v685 = vadd.f32 %v671, %v678
  %v686 = vadd.f32 %v672, %v679
  %v687 = vadd.f32 %v673, %v680
  %v688 = vadd.f32 %v674, %v681
  %v689 = vmul.f32 %v639, %v634
  %v690 = vmul.f32 %v640, %v634
  %v691 = vmul.f32 %v641, %v634
  %v692 = vmul.f32 %v642, %v634
  %v693 = vmul.f32 %v643, %v634
  %v694 = vmul.f32 %v644, %v634
  %v695 = vmul.f32 %v645, %v634
  %v696 = vadd.f32 %v682, %v689
  %v697 = vadd.f32 %v683, %v690
  %v698 = vadd.f32 %v684, %v691
  %v699 = vadd.f32 %v685, %v692
  %v700 = vadd.f32 %v686, %v693
  %v701 = vadd.f32 %v687, %v694
  %v702 = vadd.f32 %v688, %v695
  %v703 = vmul.f32 %v640, %v635
  %v704 = vmul.f32 %v641, %v635
  %v705 = vmul.f32 %v642, %v635
  %v706 = vmul.f32 %v643, %v635
  %v707 = vmul.f32 %v644, %v635
  %v708 = vmul.f32 %v645, %v635
  %v709 = vmul.f32 %v646, %v635
  %v710 = vadd.f32 %v696, %v703
  %v711 = vadd.f32 %v697, %v704
  %v712 = vadd.f32 %v698, %v705
  %v713 = vadd.f32 %v699, %v706
  %v714 = vadd.f32 %v700, %v707
  %v715 = vadd.f32 %v701, %v708
  %v716 = vadd.f32 %v702, %v709
  %v717 = vld [vmem:[%s363] sm:$0x1f]
  %v718 = vld [vmem:[%s363 + $0x8] sm:$0x1f]
  %v719 = vld [vmem:[%s363 + $0x10] sm:$0x1f]
  %v720 = vld [vmem:[%s363 + $0x18] sm:$0x1f]
  %v721 = vld [vmem:[%s363 + $0x20] sm:$0x1f]
  %s722 = scalar_lea.vmem [#allocation2], 264
  %v723 = vld [vmem:[%s722] sm:$0x1f]
  %v724 = vld [vmem:[%s722 + $0x8] sm:$0x1f]
  %v725 = vld [vmem:[%s722 + $0x10] sm:$0x1f]
  %v726 = vld [vmem:[%s722 + $0x18] sm:$0x1f]
  %v727 = vld [vmem:[%s722 + $0x20] sm:$0x1f]
  %v728 = vld [vmem:[%s722 + $0x28] sm:$0x1f]
  %v729 = vld [vmem:[%s722 + $0x30] sm:$0x1f]
  %v730 = vld [vmem:[%s722 + $0x38] sm:$0x1f]
  %v731 = vld [vmem:[%s722 + $0x40] sm:$0x1f]
  %v732 = vld [vmem:[%s722 + $0x48] sm:$0x1f]
  %v733 = vld [vmem:[%s722 + $0x50] sm:$0x1f]
  %v734 = vmul.f32 %v723, %v717
  %v735 = vmul.f32 %v724, %v717
  %v736 = vmul.f32 %v725, %v717
  %v737 = vmul.f32 %v726, %v717
  %v738 = vmul.f32 %v727, %v717
  %v739 = vmul.f32 %v728, %v717
  %v740 = vmul.f32 %v729, %v717
  %v741 = vadd.f32 %v710, %v734
  %v742 = vadd.f32 %v711, %v735
  %v743 = vadd.f32 %v712, %v736
  %v744 = vadd.f32 %v713, %v737
  %v745 = vadd.f32 %v714, %v738
  %v746 = vadd.f32 %v715, %v739
  %v747 = vadd.f32 %v716, %v740
  %v748 = vmul.f32 %v724, %v718
  %v749 = vmul.f32 %v725, %v718
  %v750 = vmul.f32 %v726, %v718
  %v751 = vmul.f32 %v727, %v718
  %v752 = vmul.f32 %v728, %v718
  %v753 = vmul.f32 %v729, %v718
  %v754 = vmul.f32 %v730, %v718
  %v755 = vadd.f32 %v741, %v748
  %v756 = vadd.f32 %v742, %v749
  %v757 = vadd.f32 %v743, %v750
  %v758 = vadd.f32 %v744, %v751
  %v759 = vadd.f32 %v745, %v752
  %v760 = vadd.f32 %v746, %v753
  %v761 = vadd.f32 %v747, %v754
  %v762 = vmul.f32 %v725, %v719
  %v763 = vmul.f32 %v726, %v719
  %v764 = vmul.f32 %v727, %v719
  %v765 = vmul.f32 %v728, %v719
  %v766 = vmul.f32 %v729, %v719
  %v767 = vmul.f32 %v730, %v719
  %v768 = vmul.f32 %v731, %v719
  %v769 = vadd.f32 %v755, %v762
  %v770 = vadd.f32 %v756, %v763
  %v771 = vadd.f32 %v757, %v764
  %v772 = vadd.f32 %v758, %v765
  %v773 = vadd.f32 %v759, %v766
  %v774 = vadd.f32 %v760, %v767
  %v775 = vadd.f32 %v761, %v768
  %v776 = vmul.f32 %v726, %v720
  %v777 = vmul.f32 %v727, %v720
  %v778 = vmul.f32 %v728, %v720
  %v779 = vmul.f32 %v729, %v720
  %v780 = vmul.f32 %v730, %v720
  %v781 = vmul.f32 %v731, %v720
  %v782 = vmul.f32 %v732, %v720
  %v783 = vadd.f32 %v769, %v776
  %v784 = vadd.f32 %v770, %v777
  %v785 = vadd.f32 %v771, %v778
  %v786 = vadd.f32 %v772, %v779
  %v787 = vadd.f32 %v773, %v780
  %v788 = vadd.f32 %v774, %v781
  %v789 = vadd.f32 %v775, %v782
  %v790 = vmul.f32 %v727, %v721
  %v791 = vmul.f32 %v728, %v721
  %v792 = vmul.f32 %v729, %v721
  %v793 = vmul.f32 %v730, %v721
  %v794 = vmul.f32 %v731, %v721
  %v795 = vmul.f32 %v732, %v721
  %v796 = vmul.f32 %v733, %v721
  %v797 = vadd.f32 %v783, %v790
  %v798 = vadd.f32 %v784, %v791
  %v799 = vadd.f32 %v785, %v792
  %v800 = vadd.f32 %v786, %v793
  %v801 = vadd.f32 %v787, %v794
  %v802 = vadd.f32 %v788, %v795
  %v803 = vadd.f32 %v789, %v796
  %s804 = scalar_lea.vmem %s2, 56
  %805 = vst [vmem:[%s804] sm:$0x1f] %v797
  %806 = vst [vmem:[%s804 + $0x8] sm:$0x1f] %v798
  %807 = vst [vmem:[%s804 + $0x10] sm:$0x1f] %v799
  %808 = vst [vmem:[%s804 + $0x18] sm:$0x1f] %v800
  %809 = vst [vmem:[%s804 + $0x20] sm:$0x1f] %v801
  %810 = vst [vmem:[%s804 + $0x28] sm:$0x1f] %v802
  %811 = vst [vmem:[%s804 + $0x30] sm:$0x1f] %v803
  %v812 = vld [vmem:[%s1] sm:$0x1f]
  %v813 = vld [vmem:[%s1 + $0x8] sm:$0x1f]
  %v814 = vld [vmem:[%s1 + $0x10] sm:$0x1f]
  %v815 = vld [vmem:[%s1 + $0x18] sm:$0x1f]
  %v816 = vld [vmem:[%s1 + $0x20] sm:$0x1f]
  %v817 = vld [vmem:[#allocation2] sm:$0x1f]
  %v818 = vld [vmem:[#allocation2 + $0x8] sm:$0x1f]
  %v819 = vld [vmem:[#allocation2 + $0x10] sm:$0x1f]
  %v820 = vld [vmem:[#allocation2 + $0x18] sm:$0x1f]
  %v821 = vld [vmem:[#allocation2 + $0x20] sm:$0x1f]
  %v822 = vld [vmem:[#allocation2 + $0x28] sm:$0x1f]
  %v823 = vld [vmem:[#allocation2 + $0x30] sm:$0x1f]
  %v824 = vld [vmem:[#allocation2 + $0x38] sm:$0x1f]
  %v825 = vld [vmem:[#allocation2 + $0x40] sm:$0x1f]
  %v826 = vld [vmem:[#allocation2 + $0x48] sm:$0x1f]
  %v827 = vld [vmem:[#allocation2 + $0x50] sm:$0x1f]
  %v828 = vmul.f32 %v817, %v812
  %v829 = vmul.f32 %v818, %v812
  %v830 = vmul.f32 %v819, %v812
  %v831 = vmul.f32 %v820, %v812
  %v832 = vmul.f32 %v821, %v812
  %v833 = vmul.f32 %v822, %v812
  %v834 = vmul.f32 %v823, %v812
  %v835 = vadd.f32 %v828, 0.0
  %v836 = vadd.f32 %v829, 0.0
  %v837 = vadd.f32 %v830, 0.0
  %v838 = vadd.f32 %v831, 0.0
  %v839 = vadd.f32 %v832, 0.0
  %v840 = vadd.f32 %v833, 0.0
  %v841 = vadd.f32 %v834, 0.0
  %v842 = vmul.f32 %v818, %v813
  %v843 = vmul.f32 %v819, %v813
  %v844 = vmul.f32 %v820, %v813
  %v845 = vmul.f32 %v821, %v813
  %v846 = vmul.f32 %v822, %v813
  %v847 = vmul.f32 %v823, %v813
  %v848 = vmul.f32 %v824, %v813
  %v849 = vadd.f32 %v835, %v842
  %v850 = vadd.f32 %v836, %v843
  %v851 = vadd.f32 %v837, %v844
  %v852 = vadd.f32 %v838, %v845
  %v853 = vadd.f32 %v839, %v846
  %v854 = vadd.f32 %v840, %v847
  %v855 = vadd.f32 %v841, %v848
  %v856 = vmul.f32 %v819, %v814
  %v857 = vmul.f32 %v820, %v814
  %v858 = vmul.f32 %v821, %v814
  %v859 = vmul.f32 %v822, %v814
  %v860 = vmul.f32 %v823, %v814
  %v861 = vmul.f32 %v824, %v814
  %v862 = vmul.f32 %v825, %v814
  %v863 = vadd.f32 %v849, %v856
  %v864 = vadd.f32 %v850, %v857
  %v865 = vadd.f32 %v851, %v858
  %v866 = vadd.f32 %v852, %v859
  %v867 = vadd.f32 %v853, %v860
  %v868 = vadd.f32 %v854, %v861
  %v869 = vadd.f32 %v855, %v862
  %v870 = vmul.f32 %v820, %v815
  %v871 = vmul.f32 %v821, %v815
  %v872 = vmul.f32 %v822, %v815
  %v873 = vmul.f32 %v823, %v815
  %v874 = vmul.f32 %v824, %v815
  %v875 = vmul.f32 %v825, %v815
  %v876 = vmul.f32 %v826, %v815
  %v877 = vadd.f32 %v863, %v870
  %v878 = vadd.f32 %v864, %v871
  %v879 = vadd.f32 %v865, %v872
  %v880 = vadd.f32 %v866, %v873
  %v881 = vadd.f32 %v867, %v874
  %v882 = vadd.f32 %v868, %v875
  %v883 = vadd.f32 %v869, %v876
  %v884 = vmul.f32 %v821, %v816
  %v885 = vmul.f32 %v822, %v816
  %v886 = vmul.f32 %v823, %v816
  %v887 = vmul.f32 %v824, %v816
  %v888 = vmul.f32 %v825, %v816
  %v889 = vmul.f32 %v826, %v816
  %v890 = vmul.f32 %v827, %v816
  %v891 = vadd.f32 %v877, %v884
  %v892 = vadd.f32 %v878, %v885
  %v893 = vadd.f32 %v879, %v886
  %v894 = vadd.f32 %v880, %v887
  %v895 = vadd.f32 %v881, %v888
  %v896 = vadd.f32 %v882, %v889
  %v897 = vadd.f32 %v883, %v890
  %v898 = vld [vmem:[%s458] sm:$0x1f]
  %v899 = vld [vmem:[%s458 + $0x8] sm:$0x1f]
  %v900 = vld [vmem:[%s458 + $0x10] sm:$0x1f]
  %v901 = vld [vmem:[%s458 + $0x18] sm:$0x1f]
  %v902 = vld [vmem:[%s458 + $0x20] sm:$0x1f]
  %v903 = vld [vmem:[%s281] sm:$0x1f]
  %v904 = vld [vmem:[%s281 + $0x8] sm:$0x1f]
  %v905 = vld [vmem:[%s281 + $0x10] sm:$0x1f]
  %v906 = vld [vmem:[%s281 + $0x18] sm:$0x1f]
  %v907 = vld [vmem:[%s281 + $0x20] sm:$0x1f]
  %v908 = vld [vmem:[%s281 + $0x28] sm:$0x1f]
  %v909 = vld [vmem:[%s281 + $0x30] sm:$0x1f]
  %v910 = vld [vmem:[%s281 + $0x38] sm:$0x1f]
  %v911 = vld [vmem:[%s281 + $0x40] sm:$0x1f]
  %v912 = vld [vmem:[%s281 + $0x48] sm:$0x1f]
  %v913 = vld [vmem:[%s281 + $0x50] sm:$0x1f]
  %v914 = vmul.f32 %v903, %v898
  %v915 = vmul.f32 %v904, %v898
  %v916 = vmul.f32 %v905, %v898
  %v917 = vmul.f32 %v906, %v898
  %v918 = vmul.f32 %v907, %v898
  %v919 = vmul.f32 %v908, %v898
  %v920 = vmul.f32 %v909, %v898
  %v921 = vadd.f32 %v891, %v914
  %v922 = vadd.f32 %v892, %v915
  %v923 = vadd.f32 %v893, %v916
  %v924 = vadd.f32 %v894, %v917
  %v925 = vadd.f32 %v895, %v918
  %v926 = vadd.f32 %v896, %v919
  %v927 = vadd.f32 %v897, %v920
  %v928 = vmul.f32 %v904, %v899
  %v929 = vmul.f32 %v905, %v899
  %v930 = vmul.f32 %v906, %v899
  %v931 = vmul.f32 %v907, %v899
  %v932 = vmul.f32 %v908, %v899
  %v933 = vmul.f32 %v909, %v899
  %v934 = vmul.f32 %v910, %v899
  %v935 = vadd.f32 %v921, %v928
  %v936 = vadd.f32 %v922, %v929
  %v937 = vadd.f32 %v923, %v930
  %v938 = vadd.f32 %v924, %v931
  %v939 = vadd.f32 %v925, %v932
  %v940 = vadd.f32 %v926, %v933
  %v941 = vadd.f32 %v927, %v934
  %v942 = vmul.f32 %v905, %v900
  %v943 = vmul.f32 %v906, %v900
  %v944 = vmul.f32 %v907, %v900
  %v945 = vmul.f32 %v908, %v900
  %v946 = vmul.f32 %v909, %v900
  %v947 = vmul.f32 %v910, %v900
  %v948 = vmul.f32 %v911, %v900
  %v949 = vadd.f32 %v935, %v942
  %v950 = vadd.f32 %v936, %v943
  %v951 = vadd.f32 %v937, %v944
  %v952 = vadd.f32 %v938, %v945
  %v953 = vadd.f32 %v939, %v946
  %v954 = vadd.f32 %v940, %v947
  %v955 = vadd.f32 %v941, %v948
  %v956 = vmul.f32 %v906, %v901
  %v957 = vmul.f32 %v907, %v901
  %v958 = vmul.f32 %v908, %v901
  %v959 = vmul.f32 %v909, %v901
  %v960 = vmul.f32 %v910, %v901
  %v961 = vmul.f32 %v911, %v901
  %v962 = vmul.f32 %v912, %v901
  %v963 = vadd.f32 %v949, %v956
  %v964 = vadd.f32 %v950, %v957
  %v965 = vadd.f32 %v951, %v958
  %v966 = vadd.f32 %v952, %v959
  %v967 = vadd.f32 %v953, %v960
  %v968 = vadd.f32 %v954, %v961
  %v969 = vadd.f32 %v955, %v962
  %v970 = vmul.f32 %v907, %v902
  %v971 = vmul.f32 %v908, %v902
  %v972 = vmul.f32 %v909, %v902
  %v973 = vmul.f32 %v910, %v902
  %v974 = vmul.f32 %v911, %v902
  %v975 = vmul.f32 %v912, %v902
  %v976 = vmul.f32 %v913, %v902
  %v977 = vadd.f32 %v963, %v970
  %v978 = vadd.f32 %v964, %v971
  %v979 = vadd.f32 %v965, %v972
  %v980 = vadd.f32 %v966, %v973
  %v981 = vadd.f32 %v967, %v974
  %v982 = vadd.f32 %v968, %v975
  %v983 = vadd.f32 %v969, %v976
  %v984 = vld [vmem:[%s188] sm:$0x1f]
  %v985 = vld [vmem:[%s188 + $0x8] sm:$0x1f]
  %v986 = vld [vmem:[%s188 + $0x10] sm:$0x1f]
  %v987 = vld [vmem:[%s188 + $0x18] sm:$0x1f]
  %v988 = vld [vmem:[%s188 + $0x20] sm:$0x1f]
  %v989 = vld [vmem:[%s369] sm:$0x1f]
  %v990 = vld [vmem:[%s369 + $0x8] sm:$0x1f]
  %v991 = vld [vmem:[%s369 + $0x10] sm:$0x1f]
  %v992 = vld [vmem:[%s369 + $0x18] sm:$0x1f]
  %v993 = vld [vmem:[%s369 + $0x20] sm:$0x1f]
  %v994 = vld [vmem:[%s369 + $0x28] sm:$0x1f]
  %v995 = vld [vmem:[%s369 + $0x30] sm:$0x1f]
  %v996 = vld [vmem:[%s369 + $0x38] sm:$0x1f]
  %v997 = vld [vmem:[%s369 + $0x40] sm:$0x1f]
  %v998 = vld [vmem:[%s369 + $0x48] sm:$0x1f]
  %v999 = vld [vmem:[%s369 + $0x50] sm:$0x1f]
  %v1000 = vmul.f32 %v989, %v984
  %v1001 = vmul.f32 %v990, %v984
  %v1002 = vmul.f32 %v991, %v984
  %v1003 = vmul.f32 %v992, %v984
  %v1004 = vmul.f32 %v993, %v984
  %v1005 = vmul.f32 %v994, %v984
  %v1006 = vmul.f32 %v995, %v984
  %v1007 = vadd.f32 %v977, %v1000
  %v1008 = vadd.f32 %v978, %v1001
  %v1009 = vadd.f32 %v979, %v1002
  %v1010 = vadd.f32 %v980, %v1003
  %v1011 = vadd.f32 %v981, %v1004
  %v1012 = vadd.f32 %v982, %v1005
  %v1013 = vadd.f32 %v983, %v1006
  %v1014 = vmul.f32 %v990, %v985
  %v1015 = vmul.f32 %v991, %v985
  %v1016 = vmul.f32 %v992, %v985
  %v1017 = vmul.f32 %v993, %v985
  %v1018 = vmul.f32 %v994, %v985
  %v1019 = vmul.f32 %v995, %v985
  %v1020 = vmul.f32 %v996, %v985
  %v1021 = vadd.f32 %v1007, %v1014
  %v1022 = vadd.f32 %v1008, %v1015
  %v1023 = vadd.f32 %v1009, %v1016
  %v1024 = vadd.f32 %v1010, %v1017
  %v1025 = vadd.f32 %v1011, %v1018
  %v1026 = vadd.f32 %v1012, %v1019
  %v1027 = vadd.f32 %v1013, %v1020
  %v1028 = vmul.f32 %v991, %v986
  %v1029 = vmul.f32 %v992, %v986
  %v1030 = vmul.f32 %v993, %v986
  %v1031 = vmul.f32 %v994, %v986
  %v1032 = vmul.f32 %v995, %v986
  %v1033 = vmul.f32 %v996, %v986
  %v1034 = vmul.f32 %v997, %v986
  %v1035 = vadd.f32 %v1021, %v1028
  %v1036 = vadd.f32 %v1022, %v1029
  %v1037 = vadd.f32 %v1023, %v1030
  %v1038 = vadd.f32 %v1024, %v1031
  %v1039 = vadd.f32 %v1025, %v1032
  %v1040 = vadd.f32 %v1026, %v1033
  %v1041 = vadd.f32 %v1027, %v1034
  %v1042 = vmul.f32 %v992, %v987
  %v1043 = vmul.f32 %v993, %v987
  %v1044 = vmul.f32 %v994, %v987
  %v1045 = vmul.f32 %v995, %v987
  %v1046 = vmul.f32 %v996, %v987
  %v1047 = vmul.f32 %v997, %v987
  %v1048 = vmul.f32 %v998, %v987
  %v1049 = vadd.f32 %v1035, %v1042
  %v1050 = vadd.f32 %v1036, %v1043
  %v1051 = vadd.f32 %v1037, %v1044
  %v1052 = vadd.f32 %v1038, %v1045
  %v1053 = vadd.f32 %v1039, %v1046
  %v1054 = vadd.f32 %v1040, %v1047
  %v1055 = vadd.f32 %v1041, %v1048
  %v1056 = vmul.f32 %v993, %v988
  %v1057 = vmul.f32 %v994, %v988
  %v1058 = vmul.f32 %v995, %v988
  %v1059 = vmul.f32 %v996, %v988
  %v1060 = vmul.f32 %v997, %v988
  %v1061 = vmul.f32 %v998, %v988
  %v1062 = vmul.f32 %v999, %v988
  %v1063 = vadd.f32 %v1049, %v1056
  %v1064 = vadd.f32 %v1050, %v1057
  %v1065 = vadd.f32 %v1051, %v1058
  %v1066 = vadd.f32 %v1052, %v1059
  %v1067 = vadd.f32 %v1053, %v1060
  %v1068 = vadd.f32 %v1054, %v1061
  %v1069 = vadd.f32 %v1055, %v1062
  %v1070 = vld [vmem:[%s275] sm:$0x1f]
  %v1071 = vld [vmem:[%s275 + $0x8] sm:$0x1f]
  %v1072 = vld [vmem:[%s275 + $0x10] sm:$0x1f]
  %v1073 = vld [vmem:[%s275 + $0x18] sm:$0x1f]
  %v1074 = vld [vmem:[%s275 + $0x20] sm:$0x1f]
  %v1075 = vld [vmem:[%s722] sm:$0x1f]
  %v1076 = vld [vmem:[%s722 + $0x8] sm:$0x1f]
  %v1077 = vld [vmem:[%s722 + $0x10] sm:$0x1f]
  %v1078 = vld [vmem:[%s722 + $0x18] sm:$0x1f]
  %v1079 = vld [vmem:[%s722 + $0x20] sm:$0x1f]
  %v1080 = vld [vmem:[%s722 + $0x28] sm:$0x1f]
  %v1081 = vld [vmem:[%s722 + $0x30] sm:$0x1f]
  %v1082 = vld [vmem:[%s722 + $0x38] sm:$0x1f]
  %v1083 = vld [vmem:[%s722 + $0x40] sm:$0x1f]
  %v1084 = vld [vmem:[%s722 + $0x48] sm:$0x1f]
  %v1085 = vld [vmem:[%s722 + $0x50] sm:$0x1f]
  %v1086 = vmul.f32 %v1075, %v1070
  %v1087 = vmul.f32 %v1076, %v1070
  %v1088 = vmul.f32 %v1077, %v1070
  %v1089 = vmul.f32 %v1078, %v1070
  %v1090 = vmul.f32 %v1079, %v1070
  %v1091 = vmul.f32 %v1080, %v1070
  %v1092 = vmul.f32 %v1081, %v1070
  %v1093 = vadd.f32 %v1063, %v1086
  %v1094 = vadd.f32 %v1064, %v1087
  %v1095 = vadd.f32 %v1065, %v1088
  %v1096 = vadd.f32 %v1066, %v1089
  %v1097 = vadd.f32 %v1067, %v1090
  %v1098 = vadd.f32 %v1068, %v1091
  %v1099 = vadd.f32 %v1069, %v1092
  %v1100 = vmul.f32 %v1076, %v1071
  %v1101 = vmul.f32 %v1077, %v1071
  %v1102 = vmul.f32 %v1078, %v1071
  %v1103 = vmul.f32 %v1079, %v1071
  %v1104 = vmul.f32 %v1080, %v1071
  %v1105 = vmul.f32 %v1081, %v1071
  %v1106 = vmul.f32 %v1082, %v1071
  %v1107 = vadd.f32 %v1093, %v1100
  %v1108 = vadd.f32 %v1094, %v1101
  %v1109 = vadd.f32 %v1095, %v1102
  %v1110 = vadd.f32 %v1096, %v1103
  %v1111 = vadd.f32 %v1097, %v1104
  %v1112 = vadd.f32 %v1098, %v1105
  %v1113 = vadd.f32 %v1099, %v1106
  %v1114 = vmul.f32 %v1077, %v1072
  %v1115 = vmul.f32 %v1078, %v1072
  %v1116 = vmul.f32 %v1079, %v1072
  %v1117 = vmul.f32 %v1080, %v1072
  %v1118 = vmul.f32 %v1081, %v1072
  %v1119 = vmul.f32 %v1082, %v1072
  %v1120 = vmul.f32 %v1083, %v1072
  %v1121 = vadd.f32 %v1107, %v1114
  %v1122 = vadd.f32 %v1108, %v1115
  %v1123 = vadd.f32 %v1109, %v1116
  %v1124 = vadd.f32 %v1110, %v1117
  %v1125 = vadd.f32 %v1111, %v1118
  %v1126 = vadd.f32 %v1112, %v1119
  %v1127 = vadd.f32 %v1113, %v1120
  %v1128 = vmul.f32 %v1078, %v1073
  %v1129 = vmul.f32 %v1079, %v1073
  %v1130 = vmul.f32 %v1080, %v1073
  %v1131 = vmul.f32 %v1081, %v1073
  %v1132 = vmul.f32 %v1082, %v1073
  %v1133 = vmul.f32 %v1083, %v1073
  %v1134 = vmul.f32 %v1084, %v1073
  %v1135 = vadd.f32 %v1121, %v1128
  %v1136 = vadd.f32 %v1122, %v1129
  %v1137 = vadd.f32 %v1123, %v1130
  %v1138 = vadd.f32 %v1124, %v1131
  %v1139 = vadd.f32 %v1125, %v1132
  %v1140 = vadd.f32 %v1126, %v1133
  %v1141 = vadd.f32 %v1127, %v1134
  %v1142 = vmul.f32 %v1079, %v1074
  %v1143 = vmul.f32 %v1080, %v1074
  %v1144 = vmul.f32 %v1081, %v1074
  %v1145 = vmul.f32 %v1082, %v1074
  %v1146 = vmul.f32 %v1083, %v1074
  %v1147 = vmul.f32 %v1084, %v1074
  %v1148 = vmul.f32 %v1085, %v1074
  %v1149 = vadd.f32 %v1135, %v1142
  %v1150 = vadd.f32 %v1136, %v1143
  %v1151 = vadd.f32 %v1137, %v1144
  %v1152 = vadd.f32 %v1138, %v1145
  %v1153 = vadd.f32 %v1139, %v1146
  %v1154 = vadd.f32 %v1140, %v1147
  %v1155 = vadd.f32 %v1141, %v1148
  %v1156 = vld [vmem:[%s363] sm:$0x1f]
  %v1157 = vld [vmem:[%s363 + $0x8] sm:$0x1f]
  %v1158 = vld [vmem:[%s363 + $0x10] sm:$0x1f]
  %v1159 = vld [vmem:[%s363 + $0x18] sm:$0x1f]
  %v1160 = vld [vmem:[%s363 + $0x20] sm:$0x1f]
  %s1161 = scalar_lea.vmem [#allocation2], 352
  %v1162 = vld [vmem:[%s1161] sm:$0x1f]
  %v1163 = vld [vmem:[%s1161 + $0x8] sm:$0x1f]
  %v1164 = vld [vmem:[%s1161 + $0x10] sm:$0x1f]
  %v1165 = vld [vmem:[%s1161 + $0x18] sm:$0x1f]
  %v1166 = vld [vmem:[%s1161 + $0x20] sm:$0x1f]
  %v1167 = vld [vmem:[%s1161 + $0x28] sm:$0x1f]
  %v1168 = vld [vmem:[%s1161 + $0x30] sm:$0x1f]
  %v1169 = vld [vmem:[%s1161 + $0x38] sm:$0x1f]
  %v1170 = vld [vmem:[%s1161 + $0x40] sm:$0x1f]
  %v1171 = vld [vmem:[%s1161 + $0x48] sm:$0x1f]
  %v1172 = vld [vmem:[%s1161 + $0x50] sm:$0x1f]
  %v1173 = vmul.f32 %v1162, %v1156
  %v1174 = vmul.f32 %v1163, %v1156
  %v1175 = vmul.f32 %v1164, %v1156
  %v1176 = vmul.f32 %v1165, %v1156
  %v1177 = vmul.f32 %v1166, %v1156
  %v1178 = vmul.f32 %v1167, %v1156
  %v1179 = vmul.f32 %v1168, %v1156
  %v1180 = vadd.f32 %v1149, %v1173
  %v1181 = vadd.f32 %v1150, %v1174
  %v1182 = vadd.f32 %v1151, %v1175
  %v1183 = vadd.f32 %v1152, %v1176
  %v1184 = vadd.f32 %v1153, %v1177
  %v1185 = vadd.f32 %v1154, %v1178
  %v1186 = vadd.f32 %v1155, %v1179
  %v1187 = vmul.f32 %v1163, %v1157
  %v1188 = vmul.f32 %v1164, %v1157
  %v1189 = vmul.f32 %v1165, %v1157
  %v1190 = vmul.f32 %v1166, %v1157
  %v1191 = vmul.f32 %v1167, %v1157
  %v1192 = vmul.f32 %v1168, %v1157
  %v1193 = vmul.f32 %v1169, %v1157
  %v1194 = vadd.f32 %v1180, %v1187
  %v1195 = vadd.f32 %v1181, %v1188
  %v1196 = vadd.f32 %v1182, %v1189
  %v1197 = vadd.f32 %v1183, %v1190
  %v1198 = vadd.f32 %v1184, %v1191
  %v1199 = vadd.f32 %v1185, %v1192
  %v1200 = vadd.f32 %v1186, %v1193
  %v1201 = vmul.f32 %v1164, %v1158
  %v1202 = vmul.f32 %v1165, %v1158
  %v1203 = vmul.f32 %v1166, %v1158
  %v1204 = vmul.f32 %v1167, %v1158
  %v1205 = vmul.f32 %v1168, %v1158
  %v1206 = vmul.f32 %v1169, %v1158
  %v1207 = vmul.f32 %v1170, %v1158
  %v1208 = vadd.f32 %v1194, %v1201
  %v1209 = vadd.f32 %v1195, %v1202
  %v1210 = vadd.f32 %v1196, %v1203
  %v1211 = vadd.f32 %v1197, %v1204
  %v1212 = vadd.f32 %v1198, %v1205
  %v1213 = vadd.f32 %v1199, %v1206
  %v1214 = vadd.f32 %v1200, %v1207
  %v1215 = vmul.f32 %v1165, %v1159
  %v1216 = vmul.f32 %v1166, %v1159
  %v1217 = vmul.f32 %v1167, %v1159
  %v1218 = vmul.f32 %v1168, %v1159
  %v1219 = vmul.f32 %v1169, %v1159
  %v1220 = vmul.f32 %v1170, %v1159
  %v1221 = vmul.f32 %v1171, %v1159
  %v1222 = vadd.f32 %v1208, %v1215
  %v1223 = vadd.f32 %v1209, %v1216
  %v1224 = vadd.f32 %v1210, %v1217
  %v1225 = vadd.f32 %v1211, %v1218
  %v1226 = vadd.f32 %v1212, %v1219
  %v1227 = vadd.f32 %v1213, %v1220
  %v1228 = vadd.f32 %v1214, %v1221
  %v1229 = vmul.f32 %v1166, %v1160
  %v1230 = vmul.f32 %v1167, %v1160
  %v1231 = vmul.f32 %v1168, %v1160
  %v1232 = vmul.f32 %v1169, %v1160
  %v1233 = vmul.f32 %v1170, %v1160
  %v1234 = vmul.f32 %v1171, %v1160
  %v1235 = vmul.f32 %v1172, %v1160
  %v1236 = vadd.f32 %v1222, %v1229
  %v1237 = vadd.f32 %v1223, %v1230
  %v1238 = vadd.f32 %v1224, %v1231
  %v1239 = vadd.f32 %v1225, %v1232
  %v1240 = vadd.f32 %v1226, %v1233
  %v1241 = vadd.f32 %v1227, %v1234
  %v1242 = vadd.f32 %v1228, %v1235
  %s1243 = scalar_lea.vmem %s2, 112
  %1244 = vst [vmem:[%s1243] sm:$0x1f] %v1236
  %1245 = vst [vmem:[%s1243 + $0x8] sm:$0x1f] %v1237
  %1246 = vst [vmem:[%s1243 + $0x10] sm:$0x1f] %v1238
  %1247 = vst [vmem:[%s1243 + $0x18] sm:$0x1f] %v1239
  %1248 = vst [vmem:[%s1243 + $0x20] sm:$0x1f] %v1240
  %1249 = vst [vmem:[%s1243 + $0x28] sm:$0x1f] %v1241
  %1250 = vst [vmem:[%s1243 + $0x30] sm:$0x1f] %v1242
  %v1251 = vld [vmem:[%s1] sm:$0x1f]
  %v1252 = vld [vmem:[%s1 + $0x8] sm:$0x1f]
  %v1253 = vld [vmem:[%s1 + $0x10] sm:$0x1f]
  %v1254 = vld [vmem:[%s1 + $0x18] sm:$0x1f]
  %v1255 = vld [vmem:[%s1 + $0x20] sm:$0x1f]
  %v1256 = vld [vmem:[%s281] sm:$0x1f]
  %v1257 = vld [vmem:[%s281 + $0x8] sm:$0x1f]
  %v1258 = vld [vmem:[%s281 + $0x10] sm:$0x1f]
  %v1259 = vld [vmem:[%s281 + $0x18] sm:$0x1f]
  %v1260 = vld [vmem:[%s281 + $0x20] sm:$0x1f]
  %v1261 = vld [vmem:[%s281 + $0x28] sm:$0x1f]
  %v1262 = vld [vmem:[%s281 + $0x30] sm:$0x1f]
  %v1263 = vld [vmem:[%s281 + $0x38] sm:$0x1f]
  %v1264 = vld [vmem:[%s281 + $0x40] sm:$0x1f]
  %v1265 = vld [vmem:[%s281 + $0x48] sm:$0x1f]
  %v1266 = vld [vmem:[%s281 + $0x50] sm:$0x1f]
  %v1267 = vmul.f32 %v1256, %v1251
  %v1268 = vmul.f32 %v1257, %v1251
  %v1269 = vmul.f32 %v1258, %v1251
  %v1270 = vmul.f32 %v1259, %v1251
  %v1271 = vmul.f32 %v1260, %v1251
  %v1272 = vmul.f32 %v1261, %v1251
  %v1273 = vmul.f32 %v1262, %v1251
  %v1274 = vadd.f32 %v1267, 0.0
  %v1275 = vadd.f32 %v1268, 0.0
  %v1276 = vadd.f32 %v1269, 0.0
  %v1277 = vadd.f32 %v1270, 0.0
  %v1278 = vadd.f32 %v1271, 0.0
  %v1279 = vadd.f32 %v1272, 0.0
  %v1280 = vadd.f32 %v1273, 0.0
  %v1281 = vmul.f32 %v1257, %v1252
  %v1282 = vmul.f32 %v1258, %v1252
  %v1283 = vmul.f32 %v1259, %v1252
  %v1284 = vmul.f32 %v1260, %v1252
  %v1285 = vmul.f32 %v1261, %v1252
  %v1286 = vmul.f32 %v1262, %v1252
  %v1287 = vmul.f32 %v1263, %v1252
  %v1288 = vadd.f32 %v1274, %v1281
  %v1289 = vadd.f32 %v1275, %v1282
  %v1290 = vadd.f32 %v1276, %v1283
  %v1291 = vadd.f32 %v1277, %v1284
  %v1292 = vadd.f32 %v1278, %v1285
  %v1293 = vadd.f32 %v1279, %v1286
  %v1294 = vadd.f32 %v1280, %v1287
  %v1295 = vmul.f32 %v1258, %v1253
  %v1296 = vmul.f32 %v1259, %v1253
  %v1297 = vmul.f32 %v1260, %v1253
  %v1298 = vmul.f32 %v1261, %v1253
  %v1299 = vmul.f32 %v1262, %v1253
  %v1300 = vmul.f32 %v1263, %v1253
  %v1301 = vmul.f32 %v1264, %v1253
  %v1302 = vadd.f32 %v1288, %v1295
  %v1303 = vadd.f32 %v1289, %v1296
  %v1304 = vadd.f32 %v1290, %v1297
  %v1305 = vadd.f32 %v1291, %v1298
  %v1306 = vadd.f32 %v1292, %v1299
  %v1307 = vadd.f32 %v1293, %v1300
  %v1308 = vadd.f32 %v1294, %v1301
  %v1309 = vmul.f32 %v1259, %v1254
  %v1310 = vmul.f32 %v1260, %v1254
  %v1311 = vmul.f32 %v1261, %v1254
  %v1312 = vmul.f32 %v1262, %v1254
  %v1313 = vmul.f32 %v1263, %v1254
  %v1314 = vmul.f32 %v1264, %v1254
  %v1315 = vmul.f32 %v1265, %v1254
  %v1316 = vadd.f32 %v1302, %v1309
  %v1317 = vadd.f32 %v1303, %v1310
  %v1318 = vadd.f32 %v1304, %v1311
  %v1319 = vadd.f32 %v1305, %v1312
  %v1320 = vadd.f32 %v1306, %v1313
  %v1321 = vadd.f32 %v1307, %v1314
  %v1322 = vadd.f32 %v1308, %v1315
  %v1323 = vmul.f32 %v1260, %v1255
  %v1324 = vmul.f32 %v1261, %v1255
  %v1325 = vmul.f32 %v1262, %v1255
  %v1326 = vmul.f32 %v1263, %v1255
  %v1327 = vmul.f32 %v1264, %v1255
  %v1328 = vmul.f32 %v1265, %v1255
  %v1329 = vmul.f32 %v1266, %v1255
  %v1330 = vadd.f32 %v1316, %v1323
  %v1331 = vadd.f32 %v1317, %v1324
  %v1332 = vadd.f32 %v1318, %v1325
  %v1333 = vadd.f32 %v1319, %v1326
  %v1334 = vadd.f32 %v1320, %v1327
  %v1335 = vadd.f32 %v1321, %v1328
  %v1336 = vadd.f32 %v1322, %v1329
  %v1337 = vld [vmem:[%s458] sm:$0x1f]
  %v1338 = vld [vmem:[%s458 + $0x8] sm:$0x1f]
  %v1339 = vld [vmem:[%s458 + $0x10] sm:$0x1f]
  %v1340 = vld [vmem:[%s458 + $0x18] sm:$0x1f]
  %v1341 = vld [vmem:[%s458 + $0x20] sm:$0x1f]
  %v1342 = vld [vmem:[%s369] sm:$0x1f]
  %v1343 = vld [vmem:[%s369 + $0x8] sm:$0x1f]
  %v1344 = vld [vmem:[%s369 + $0x10] sm:$0x1f]
  %v1345 = vld [vmem:[%s369 + $0x18] sm:$0x1f]
  %v1346 = vld [vmem:[%s369 + $0x20] sm:$0x1f]
  %v1347 = vld [vmem:[%s369 + $0x28] sm:$0x1f]
  %v1348 = vld [vmem:[%s369 + $0x30] sm:$0x1f]
  %v1349 = vld [vmem:[%s369 + $0x38] sm:$0x1f]
  %v1350 = vld [vmem:[%s369 + $0x40] sm:$0x1f]
  %v1351 = vld [vmem:[%s369 + $0x48] sm:$0x1f]
  %v1352 = vld [vmem:[%s369 + $0x50] sm:$0x1f]
  %v1353 = vmul.f32 %v1342, %v1337
  %v1354 = vmul.f32 %v1343, %v1337
  %v1355 = vmul.f32 %v1344, %v1337
  %v1356 = vmul.f32 %v1345, %v1337
  %v1357 = vmul.f32 %v1346, %v1337
  %v1358 = vmul.f32 %v1347, %v1337
  %v1359 = vmul.f32 %v1348, %v1337
  %v1360 = vadd.f32 %v1330, %v1353
  %v1361 = vadd.f32 %v1331, %v1354
  %v1362 = vadd.f32 %v1332, %v1355
  %v1363 = vadd.f32 %v1333, %v1356
  %v1364 = vadd.f32 %v1334, %v1357
  %v1365 = vadd.f32 %v1335, %v1358
  %v1366 = vadd.f32 %v1336, %v1359
  %v1367 = vmul.f32 %v1343, %v1338
  %v1368 = vmul.f32 %v1344, %v1338
  %v1369 = vmul.f32 %v1345, %v1338
  %v1370 = vmul.f32 %v1346, %v1338
  %v1371 = vmul.f32 %v1347, %v1338
  %v1372 = vmul.f32 %v1348, %v1338
  %v1373 = vmul.f32 %v1349, %v1338
  %v1374 = vadd.f32 %v1360, %v1367
  %v1375 = vadd.f32 %v1361, %v1368
  %v1376 = vadd.f32 %v1362, %v1369
  %v1377 = vadd.f32 %v1363, %v1370
  %v1378 = vadd.f32 %v1364, %v1371
  %v1379 = vadd.f32 %v1365, %v1372
  %v1380 = vadd.f32 %v1366, %v1373
  %v1381 = vmul.f32 %v1344, %v1339
  %v1382 = vmul.f32 %v1345, %v1339
  %v1383 = vmul.f32 %v1346, %v1339
  %v1384 = vmul.f32 %v1347, %v1339
  %v1385 = vmul.f32 %v1348, %v1339
  %v1386 = vmul.f32 %v1349, %v1339
  %v1387 = vmul.f32 %v1350, %v1339
  %v1388 = vadd.f32 %v1374, %v1381
  %v1389 = vadd.f32 %v1375, %v1382
  %v1390 = vadd.f32 %v1376, %v1383
  %v1391 = vadd.f32 %v1377, %v1384
  %v1392 = vadd.f32 %v1378, %v1385
  %v1393 = vadd.f32 %v1379, %v1386
  %v1394 = vadd.f32 %v1380, %v1387
  %v1395 = vmul.f32 %v1345, %v1340
  %v1396 = vmul.f32 %v1346, %v1340
  %v1397 = vmul.f32 %v1347, %v1340
  %v1398 = vmul.f32 %v1348, %v1340
  %v1399 = vmul.f32 %v1349, %v1340
  %v1400 = vmul.f32 %v1350, %v1340
  %v1401 = vmul.f32 %v1351, %v1340
  %v1402 = vadd.f32 %v1388, %v1395
  %v1403 = vadd.f32 %v1389, %v1396
  %v1404 = vadd.f32 %v1390, %v1397
  %v1405 = vadd.f32 %v1391, %v1398
  %v1406 = vadd.f32 %v1392, %v1399
  %v1407 = vadd.f32 %v1393, %v1400
  %v1408 = vadd.f32 %v1394, %v1401
  %v1409 = vmul.f32 %v1346, %v1341
  %v1410 = vmul.f32 %v1347, %v1341
  %v1411 = vmul.f32 %v1348, %v1341
  %v1412 = vmul.f32 %v1349, %v1341
  %v1413 = vmul.f32 %v1350, %v1341
  %v1414 = vmul.f32 %v1351, %v1341
  %v1415 = vmul.f32 %v1352, %v1341
  %v1416 = vadd.f32 %v1402, %v1409
  %v1417 = vadd.f32 %v1403, %v1410
  %v1418 = vadd.f32 %v1404, %v1411
  %v1419 = vadd.f32 %v1405, %v1412
  %v1420 = vadd.f32 %v1406, %v1413
  %v1421 = vadd.f32 %v1407, %v1414
  %v1422 = vadd.f32 %v1408, %v1415
  %v1423 = vld [vmem:[%s188] sm:$0x1f]
  %v1424 = vld [vmem:[%s188 + $0x8] sm:$0x1f]
  %v1425 = vld [vmem:[%s188 + $0x10] sm:$0x1f]
  %v1426 = vld [vmem:[%s188 + $0x18] sm:$0x1f]
  %v1427 = vld [vmem:[%s188 + $0x20] sm:$0x1f]
  %v1428 = vld [vmem:[%s722] sm:$0x1f]
  %v1429 = vld [vmem:[%s722 + $0x8] sm:$0x1f]
  %v1430 = vld [vmem:[%s722 + $0x10] sm:$0x1f]
  %v1431 = vld [vmem:[%s722 + $0x18] sm:$0x1f]
  %v1432 = vld [vmem:[%s722 + $0x20] sm:$0x1f]
  %v1433 = vld [vmem:[%s722 + $0x28] sm:$0x1f]
  %v1434 = vld [vmem:[%s722 + $0x30] sm:$0x1f]
  %v1435 = vld [vmem:[%s722 + $0x38] sm:$0x1f]
  %v1436 = vld [vmem:[%s722 + $0x40] sm:$0x1f]
  %v1437 = vld [vmem:[%s722 + $0x48] sm:$0x1f]
  %v1438 = vld [vmem:[%s722 + $0x50] sm:$0x1f]
  %v1439 = vmul.f32 %v1428, %v1423
  %v1440 = vmul.f32 %v1429, %v1423
  %v1441 = vmul.f32 %v1430, %v1423
  %v1442 = vmul.f32 %v1431, %v1423
  %v1443 = vmul.f32 %v1432, %v1423
  %v1444 = vmul.f32 %v1433, %v1423
  %v1445 = vmul.f32 %v1434, %v1423
  %v1446 = vadd.f32 %v1416, %v1439
  %v1447 = vadd.f32 %v1417, %v1440
  %v1448 = vadd.f32 %v1418, %v1441
  %v1449 = vadd.f32 %v1419, %v1442
  %v1450 = vadd.f32 %v1420, %v1443
  %v1451 = vadd.f32 %v1421, %v1444
  %v1452 = vadd.f32 %v1422, %v1445
  %v1453 = vmul.f32 %v1429, %v1424
  %v1454 = vmul.f32 %v1430, %v1424
  %v1455 = vmul.f32 %v1431, %v1424
  %v1456 = vmul.f32 %v1432, %v1424
  %v1457 = vmul.f32 %v1433, %v1424
  %v1458 = vmul.f32 %v1434, %v1424
  %v1459 = vmul.f32 %v1435, %v1424
  %v1460 = vadd.f32 %v1446, %v1453
  %v1461 = vadd.f32 %v1447, %v1454
  %v1462 = vadd.f32 %v1448, %v1455
  %v1463 = vadd.f32 %v1449, %v1456
  %v1464 = vadd.f32 %v1450, %v1457
  %v1465 = vadd.f32 %v1451, %v1458
  %v1466 = vadd.f32 %v1452, %v1459
  %v1467 = vmul.f32 %v1430, %v1425
  %v1468 = vmul.f32 %v1431, %v1425
  %v1469 = vmul.f32 %v1432, %v1425
  %v1470 = vmul.f32 %v1433, %v1425
  %v1471 = vmul.f32 %v1434, %v1425
  %v1472 = vmul.f32 %v1435, %v1425
  %v1473 = vmul.f32 %v1436, %v1425
  %v1474 = vadd.f32 %v1460, %v1467
  %v1475 = vadd.f32 %v1461, %v1468
  %v1476 = vadd.f32 %v1462, %v1469
  %v1477 = vadd.f32 %v1463, %v1470
  %v1478 = vadd.f32 %v1464, %v1471
  %v1479 = vadd.f32 %v1465, %v1472
  %v1480 = vadd.f32 %v1466, %v1473
  %v1481 = vmul.f32 %v1431, %v1426
  %v1482 = vmul.f32 %v1432, %v1426
  %v1483 = vmul.f32 %v1433, %v1426
  %v1484 = vmul.f32 %v1434, %v1426
  %v1485 = vmul.f32 %v1435, %v1426
  %v1486 = vmul.f32 %v1436, %v1426
  %v1487 = vmul.f32 %v1437, %v1426
  %v1488 = vadd.f32 %v1474, %v1481
  %v1489 = vadd.f32 %v1475, %v1482
  %v1490 = vadd.f32 %v1476, %v1483
  %v1491 = vadd.f32 %v1477, %v1484
  %v1492 = vadd.f32 %v1478, %v1485
  %v1493 = vadd.f32 %v1479, %v1486
  %v1494 = vadd.f32 %v1480, %v1487
  %v1495 = vmul.f32 %v1432, %v1427
  %v1496 = vmul.f32 %v1433, %v1427
  %v1497 = vmul.f32 %v1434, %v1427
  %v1498 = vmul.f32 %v1435, %v1427
  %v1499 = vmul.f32 %v1436, %v1427
  %v1500 = vmul.f32 %v1437, %v1427
  %v1501 = vmul.f32 %v1438, %v1427
  %v1502 = vadd.f32 %v1488, %v1495
  %v1503 = vadd.f32 %v1489, %v1496
  %v1504 = vadd.f32 %v1490, %v1497
  %v1505 = vadd.f32 %v1491, %v1498
  %v1506 = vadd.f32 %v1492, %v1499
  %v1507 = vadd.f32 %v1493, %v1500
  %v1508 = vadd.f32 %v1494, %v1501
  %v1509 = vld [vmem:[%s275] sm:$0x1f]
  %v1510 = vld [vmem:[%s275 + $0x8] sm:$0x1f]
  %v1511 = vld [vmem:[%s275 + $0x10] sm:$0x1f]
  %v1512 = vld [vmem:[%s275 + $0x18] sm:$0x1f]
  %v1513 = vld [vmem:[%s275 + $0x20] sm:$0x1f]
  %v1514 = vld [vmem:[%s1161] sm:$0x1f]
  %v1515 = vld [vmem:[%s1161 + $0x8] sm:$0x1f]
  %v1516 = vld [vmem:[%s1161 + $0x10] sm:$0x1f]
  %v1517 = vld [vmem:[%s1161 + $0x18] sm:$0x1f]
  %v1518 = vld [vmem:[%s1161 + $0x20] sm:$0x1f]
  %v1519 = vld [vmem:[%s1161 + $0x28] sm:$0x1f]
  %v1520 = vld [vmem:[%s1161 + $0x30] sm:$0x1f]
  %v1521 = vld [vmem:[%s1161 + $0x38] sm:$0x1f]
  %v1522 = vld [vmem:[%s1161 + $0x40] sm:$0x1f]
  %v1523 = vld [vmem:[%s1161 + $0x48] sm:$0x1f]
  %v1524 = vld [vmem:[%s1161 + $0x50] sm:$0x1f]
  %v1525 = vmul.f32 %v1514, %v1509
  %v1526 = vmul.f32 %v1515, %v1509
  %v1527 = vmul.f32 %v1516, %v1509
  %v1528 = vmul.f32 %v1517, %v1509
  %v1529 = vmul.f32 %v1518, %v1509
  %v1530 = vmul.f32 %v1519, %v1509
  %v1531 = vmul.f32 %v1520, %v1509
  %v1532 = vadd.f32 %v1502, %v1525
  %v1533 = vadd.f32 %v1503, %v1526
  %v1534 = vadd.f32 %v1504, %v1527
  %v1535 = vadd.f32 %v1505, %v1528
  %v1536 = vadd.f32 %v1506, %v1529
  %v1537 = vadd.f32 %v1507, %v1530
  %v1538 = vadd.f32 %v1508, %v1531
  %v1539 = vmul.f32 %v1515, %v1510
  %v1540 = vmul.f32 %v1516, %v1510
  %v1541 = vmul.f32 %v1517, %v1510
  %v1542 = vmul.f32 %v1518, %v1510
  %v1543 = vmul.f32 %v1519, %v1510
  %v1544 = vmul.f32 %v1520, %v1510
  %v1545 = vmul.f32 %v1521, %v1510
  %v1546 = vadd.f32 %v1532, %v1539
  %v1547 = vadd.f32 %v1533, %v1540
  %v1548 = vadd.f32 %v1534, %v1541
  %v1549 = vadd.f32 %v1535, %v1542
  %v1550 = vadd.f32 %v1536, %v1543
  %v1551 = vadd.f32 %v1537, %v1544
  %v1552 = vadd.f32 %v1538, %v1545
  %v1553 = vmul.f32 %v1516, %v1511
  %v1554 = vmul.f32 %v1517, %v1511
  %v1555 = vmul.f32 %v1518, %v1511
  %v1556 = vmul.f32 %v1519, %v1511
  %v1557 = vmul.f32 %v1520, %v1511
  %v1558 = vmul.f32 %v1521, %v1511
  %v1559 = vmul.f32 %v1522, %v1511
  %v1560 = vadd.f32 %v1546, %v1553
  %v1561 = vadd.f32 %v1547, %v1554
  %v1562 = vadd.f32 %v1548, %v1555
  %v1563 = vadd.f32 %v1549, %v1556
  %v1564 = vadd.f32 %v1550, %v1557
  %v1565 = vadd.f32 %v1551, %v1558
  %v1566 = vadd.f32 %v1552, %v1559
  %v1567 = vmul.f32 %v1517, %v1512
  %v1568 = vmul.f32 %v1518, %v1512
  %v1569 = vmul.f32 %v1519, %v1512
  %v1570 = vmul.f32 %v1520, %v1512
  %v1571 = vmul.f32 %v1521, %v1512
  %v1572 = vmul.f32 %v1522, %v1512
  %v1573 = vmul.f32 %v1523, %v1512
  %v1574 = vadd.f32 %v1560, %v1567
  %v1575 = vadd.f32 %v1561, %v1568
  %v1576 = vadd.f32 %v1562, %v1569
  %v1577 = vadd.f32 %v1563, %v1570
  %v1578 = vadd.f32 %v1564, %v1571
  %v1579 = vadd.f32 %v1565, %v1572
  %v1580 = vadd.f32 %v1566, %v1573
  %v1581 = vmul.f32 %v1518, %v1513
  %v1582 = vmul.f32 %v1519, %v1513
  %v1583 = vmul.f32 %v1520, %v1513
  %v1584 = vmul.f32 %v1521, %v1513
  %v1585 = vmul.f32 %v1522, %v1513
  %v1586 = vmul.f32 %v1523, %v1513
  %v1587 = vmul.f32 %v1524, %v1513
  %v1588 = vadd.f32 %v1574, %v1581
  %v1589 = vadd.f32 %v1575, %v1582
  %v1590 = vadd.f32 %v1576, %v1583
  %v1591 = vadd.f32 %v1577, %v1584
  %v1592 = vadd.f32 %v1578, %v1585
  %v1593 = vadd.f32 %v1579, %v1586
  %v1594 = vadd.f32 %v1580, %v1587
  %v1595 = vld [vmem:[%s363] sm:$0x1f]
  %v1596 = vld [vmem:[%s363 + $0x8] sm:$0x1f]
  %v1597 = vld [vmem:[%s363 + $0x10] sm:$0x1f]
  %v1598 = vld [vmem:[%s363 + $0x18] sm:$0x1f]
  %v1599 = vld [vmem:[%s363 + $0x20] sm:$0x1f]
  %s1600 = scalar_lea.vmem [#allocation2], 440
  %v1601 = vld [vmem:[%s1600] sm:$0x1f]
  %v1602 = vld [vmem:[%s1600 + $0x8] sm:$0x1f]
  %v1603 = vld [vmem:[%s1600 + $0x10] sm:$0x1f]
  %v1604 = vld [vmem:[%s1600 + $0x18] sm:$0x1f]
  %v1605 = vld [vmem:[%s1600 + $0x20] sm:$0x1f]
  %v1606 = vld [vmem:[%s1600 + $0x28] sm:$0x1f]
  %v1607 = vld [vmem:[%s1600 + $0x30] sm:$0x1f]
  %v1608 = vld [vmem:[%s1600 + $0x38] sm:$0x1f]
  %v1609 = vld [vmem:[%s1600 + $0x40] sm:$0x1f]
  %v1610 = vld [vmem:[%s1600 + $0x48] sm:$0x1f]
  %v1611 = vld [vmem:[%s1600 + $0x50] sm:$0x1f]
  %v1612 = vmul.f32 %v1601, %v1595
  %v1613 = vmul.f32 %v1602, %v1595
  %v1614 = vmul.f32 %v1603, %v1595
  %v1615 = vmul.f32 %v1604, %v1595
  %v1616 = vmul.f32 %v1605, %v1595
  %v1617 = vmul.f32 %v1606, %v1595
  %v1618 = vmul.f32 %v1607, %v1595
  %v1619 = vadd.f32 %v1588, %v1612
  %v1620 = vadd.f32 %v1589, %v1613
  %v1621 = vadd.f32 %v1590, %v1614
  %v1622 = vadd.f32 %v1591, %v1615
  %v1623 = vadd.f32 %v1592, %v1616
  %v1624 = vadd.f32 %v1593, %v1617
  %v1625 = vadd.f32 %v1594, %v1618
  %v1626 = vmul.f32 %v1602, %v1596
  %v1627 = vmul.f32 %v1603, %v1596
  %v1628 = vmul.f32 %v1604, %v1596
  %v1629 = vmul.f32 %v1605, %v1596
  %v1630 = vmul.f32 %v1606, %v1596
  %v1631 = vmul.f32 %v1607, %v1596
  %v1632 = vmul.f32 %v1608, %v1596
  %v1633 = vadd.f32 %v1619, %v1626
  %v1634 = vadd.f32 %v1620, %v1627
  %v1635 = vadd.f32 %v1621, %v1628
  %v1636 = vadd.f32 %v1622, %v1629
  %v1637 = vadd.f32 %v1623, %v1630
  %v1638 = vadd.f32 %v1624, %v1631
  %v1639 = vadd.f32 %v1625, %v1632
  %v1640 = vmul.f32 %v1603, %v1597
  %v1641 = vmul.f32 %v1604, %v1597
  %v1642 = vmul.f32 %v1605, %v1597
  %v1643 = vmul.f32 %v1606, %v1597
  %v1644 = vmul.f32 %v1607, %v1597
  %v1645 = vmul.f32 %v1608, %v1597
  %v1646 = vmul.f32 %v1609, %v1597
  %v1647 = vadd.f32 %v1633, %v1640
  %v1648 = vadd.f32 %v1634, %v1641
  %v1649 = vadd.f32 %v1635, %v1642
  %v1650 = vadd.f32 %v1636, %v1643
  %v1651 = vadd.f32 %v1637, %v1644
  %v1652 = vadd.f32 %v1638, %v1645
  %v1653 = vadd.f32 %v1639, %v1646
  %v1654 = vmul.f32 %v1604, %v1598
  %v1655 = vmul.f32 %v1605, %v1598
  %v1656 = vmul.f32 %v1606, %v1598
  %v1657 = vmul.f32 %v1607, %v1598
  %v1658 = vmul.f32 %v1608, %v1598
  %v1659 = vmul.f32 %v1609, %v1598
  %v1660 = vmul.f32 %v1610, %v1598
  %v1661 = vadd.f32 %v1647, %v1654
  %v1662 = vadd.f32 %v1648, %v1655
  %v1663 = vadd.f32 %v1649, %v1656
  %v1664 = vadd.f32 %v1650, %v1657
  %v1665 = vadd.f32 %v1651, %v1658
  %v1666 = vadd.f32 %v1652, %v1659
  %v1667 = vadd.f32 %v1653, %v1660
  %v1668 = vmul.f32 %v1605, %v1599
  %v1669 = vmul.f32 %v1606, %v1599
  %v1670 = vmul.f32 %v1607, %v1599
  %v1671 = vmul.f32 %v1608, %v1599
  %v1672 = vmul.f32 %v1609, %v1599
  %v1673 = vmul.f32 %v1610, %v1599
  %v1674 = vmul.f32 %v1611, %v1599
  %v1675 = vadd.f32 %v1661, %v1668
  %v1676 = vadd.f32 %v1662, %v1669
  %v1677 = vadd.f32 %v1663, %v1670
  %v1678 = vadd.f32 %v1664, %v1671
  %v1679 = vadd.f32 %v1665, %v1672
  %v1680 = vadd.f32 %v1666, %v1673
  %v1681 = vadd.f32 %v1667, %v1674
  %s1682 = scalar_lea.vmem %s2, 168
  %1683 = vst [vmem:[%s1682] sm:$0x1f] %v1675
  %1684 = vst [vmem:[%s1682 + $0x8] sm:$0x1f] %v1676
  %1685 = vst [vmem:[%s1682 + $0x10] sm:$0x1f] %v1677
  %1686 = vst [vmem:[%s1682 + $0x18] sm:$0x1f] %v1678
  %1687 = vst [vmem:[%s1682 + $0x20] sm:$0x1f] %v1679
  %1688 = vst [vmem:[%s1682 + $0x28] sm:$0x1f] %v1680
  %1689 = vst [vmem:[%s1682 + $0x30] sm:$0x1f] %v1681
  %v1690 = vld [vmem:[%s1] sm:$0x1f]
  %v1691 = vld [vmem:[%s1 + $0x8] sm:$0x1f]
  %v1692 = vld [vmem:[%s1 + $0x10] sm:$0x1f]
  %v1693 = vld [vmem:[%s1 + $0x18] sm:$0x1f]
  %v1694 = vld [vmem:[%s1 + $0x20] sm:$0x1f]
  %v1695 = vld [vmem:[%s369] sm:$0x1f]
  %v1696 = vld [vmem:[%s369 + $0x8] sm:$0x1f]
  %v1697 = vld [vmem:[%s369 + $0x10] sm:$0x1f]
  %v1698 = vld [vmem:[%s369 + $0x18] sm:$0x1f]
  %v1699 = vld [vmem:[%s369 + $0x20] sm:$0x1f]
  %v1700 = vld [vmem:[%s369 + $0x28] sm:$0x1f]
  %v1701 = vld [vmem:[%s369 + $0x30] sm:$0x1f]
  %v1702 = vld [vmem:[%s369 + $0x38] sm:$0x1f]
  %v1703 = vld [vmem:[%s369 + $0x40] sm:$0x1f]
  %v1704 = vld [vmem:[%s369 + $0x48] sm:$0x1f]
  %v1705 = vld [vmem:[%s369 + $0x50] sm:$0x1f]
  %v1706 = vmul.f32 %v1695, %v1690
  %v1707 = vmul.f32 %v1696, %v1690
  %v1708 = vmul.f32 %v1697, %v1690
  %v1709 = vmul.f32 %v1698, %v1690
  %v1710 = vmul.f32 %v1699, %v1690
  %v1711 = vmul.f32 %v1700, %v1690
  %v1712 = vmul.f32 %v1701, %v1690
  %v1713 = vadd.f32 %v1706, 0.0
  %v1714 = vadd.f32 %v1707, 0.0
  %v1715 = vadd.f32 %v1708, 0.0
  %v1716 = vadd.f32 %v1709, 0.0
  %v1717 = vadd.f32 %v1710, 0.0
  %v1718 = vadd.f32 %v1711, 0.0
  %v1719 = vadd.f32 %v1712, 0.0
  %v1720 = vmul.f32 %v1696, %v1691
  %v1721 = vmul.f32 %v1697, %v1691
  %v1722 = vmul.f32 %v1698, %v1691
  %v1723 = vmul.f32 %v1699, %v1691
  %v1724 = vmul.f32 %v1700, %v1691
  %v1725 = vmul.f32 %v1701, %v1691
  %v1726 = vmul.f32 %v1702, %v1691
  %v1727 = vadd.f32 %v1713, %v1720
  %v1728 = vadd.f32 %v1714, %v1721
  %v1729 = vadd.f32 %v1715, %v1722
  %v1730 = vadd.f32 %v1716, %v1723
  %v1731 = vadd.f32 %v1717, %v1724
  %v1732 = vadd.f32 %v1718, %v1725
  %v1733 = vadd.f32 %v1719, %v1726
  %v1734 = vmul.f32 %v1697, %v1692
  %v1735 = vmul.f32 %v1698, %v1692
  %v1736 = vmul.f32 %v1699, %v1692
  %v1737 = vmul.f32 %v1700, %v1692
  %v1738 = vmul.f32 %v1701, %v1692
  %v1739 = vmul.f32 %v1702, %v1692
  %v1740 = vmul.f32 %v1703, %v1692
  %v1741 = vadd.f32 %v1727, %v1734
  %v1742 = vadd.f32 %v1728, %v1735
  %v1743 = vadd.f32 %v1729, %v1736
  %v1744 = vadd.f32 %v1730, %v1737
  %v1745 = vadd.f32 %v1731, %v1738
  %v1746 = vadd.f32 %v1732, %v1739
  %v1747 = vadd.f32 %v1733, %v1740
  %v1748 = vmul.f32 %v1698, %v1693
  %v1749 = vmul.f32 %v1699, %v1693
  %v1750 = vmul.f32 %v1700, %v1693
  %v1751 = vmul.f32 %v1701, %v1693
  %v1752 = vmul.f32 %v1702, %v1693
  %v1753 = vmul.f32 %v1703, %v1693
  %v1754 = vmul.f32 %v1704, %v1693
  %v1755 = vadd.f32 %v1741, %v1748
  %v1756 = vadd.f32 %v1742, %v1749
  %v1757 = vadd.f32 %v1743, %v1750
  %v1758 = vadd.f32 %v1744, %v1751
  %v1759 = vadd.f32 %v1745, %v1752
  %v1760 = vadd.f32 %v1746, %v1753
  %v1761 = vadd.f32 %v1747, %v1754
  %v1762 = vmul.f32 %v1699, %v1694
  %v1763 = vmul.f32 %v1700, %v1694
  %v1764 = vmul.f32 %v1701, %v1694
  %v1765 = vmul.f32 %v1702, %v1694
  %v1766 = vmul.f32 %v1703, %v1694
  %v1767 = vmul.f32 %v1704, %v1694
  %v1768 = vmul.f32 %v1705, %v1694
  %v1769 = vadd.f32 %v1755, %v1762
  %v1770 = vadd.f32 %v1756, %v1763
  %v1771 = vadd.f32 %v1757, %v1764
  %v1772 = vadd.f32 %v1758, %v1765
  %v1773 = vadd.f32 %v1759, %v1766
  %v1774 = vadd.f32 %v1760, %v1767
  %v1775 = vadd.f32 %v1761, %v1768
  %v1776 = vld [vmem:[%s458] sm:$0x1f]
  %v1777 = vld [vmem:[%s458 + $0x8] sm:$0x1f]
  %v1778 = vld [vmem:[%s458 + $0x10] sm:$0x1f]
  %v1779 = vld [vmem:[%s458 + $0x18] sm:$0x1f]
  %v1780 = vld [vmem:[%s458 + $0x20] sm:$0x1f]
  %v1781 = vld [vmem:[%s722] sm:$0x1f]
  %v1782 = vld [vmem:[%s722 + $0x8] sm:$0x1f]
  %v1783 = vld [vmem:[%s722 + $0x10] sm:$0x1f]
  %v1784 = vld [vmem:[%s722 + $0x18] sm:$0x1f]
  %v1785 = vld [vmem:[%s722 + $0x20] sm:$0x1f]
  %v1786 = vld [vmem:[%s722 + $0x28] sm:$0x1f]
  %v1787 = vld [vmem:[%s722 + $0x30] sm:$0x1f]
  %v1788 = vld [vmem:[%s722 + $0x38] sm:$0x1f]
  %v1789 = vld [vmem:[%s722 + $0x40] sm:$0x1f]
  %v1790 = vld [vmem:[%s722 + $0x48] sm:$0x1f]
  %v1791 = vld [vmem:[%s722 + $0x50] sm:$0x1f]
  %v1792 = vmul.f32 %v1781, %v1776
  %v1793 = vmul.f32 %v1782, %v1776
  %v1794 = vmul.f32 %v1783, %v1776
  %v1795 = vmul.f32 %v1784, %v1776
  %v1796 = vmul.f32 %v1785, %v1776
  %v1797 = vmul.f32 %v1786, %v1776
  %v1798 = vmul.f32 %v1787, %v1776
  %v1799 = vadd.f32 %v1769, %v1792
  %v1800 = vadd.f32 %v1770, %v1793
  %v1801 = vadd.f32 %v1771, %v1794
  %v1802 = vadd.f32 %v1772, %v1795
  %v1803 = vadd.f32 %v1773, %v1796
  %v1804 = vadd.f32 %v1774, %v1797
  %v1805 = vadd.f32 %v1775, %v1798
  %v1806 = vmul.f32 %v1782, %v1777
  %v1807 = vmul.f32 %v1783, %v1777
  %v1808 = vmul.f32 %v1784, %v1777
  %v1809 = vmul.f32 %v1785, %v1777
  %v1810 = vmul.f32 %v1786, %v1777
  %v1811 = vmul.f32 %v1787, %v1777
  %v1812 = vmul.f32 %v1788, %v1777
  %v1813 = vadd.f32 %v1799, %v1806
  %v1814 = vadd.f32 %v1800, %v1807
  %v1815 = vadd.f32 %v1801, %v1808
  %v1816 = vadd.f32 %v1802, %v1809
  %v1817 = vadd.f32 %v1803, %v1810
  %v1818 = vadd.f32 %v1804, %v1811
  %v1819 = vadd.f32 %v1805, %v1812
  %v1820 = vmul.f32 %v1783, %v1778
  %v1821 = vmul.f32 %v1784, %v1778
  %v1822 = vmul.f32 %v1785, %v1778
  %v1823 = vmul.f32 %v1786, %v1778
  %v1824 = vmul.f32 %v1787, %v1778
  %v1825 = vmul.f32 %v1788, %v1778
  %v1826 = vmul.f32 %v1789, %v1778
  %v1827 = vadd.f32 %v1813, %v1820
  %v1828 = vadd.f32 %v1814, %v1821
  %v1829 = vadd.f32 %v1815, %v1822
  %v1830 = vadd.f32 %v1816, %v1823
  %v1831 = vadd.f32 %v1817, %v1824
  %v1832 = vadd.f32 %v1818, %v1825
  %v1833 = vadd.f32 %v1819, %v1826
  %v1834 = vmul.f32 %v1784, %v1779
  %v1835 = vmul.f32 %v1785, %v1779
  %v1836 = vmul.f32 %v1786, %v1779
  %v1837 = vmul.f32 %v1787, %v1779
  %v1838 = vmul.f32 %v1788, %v1779
  %v1839 = vmul.f32 %v1789, %v1779
  %v1840 = vmul.f32 %v1790, %v1779
  %v1841 = vadd.f32 %v1827, %v1834
  %v1842 = vadd.f32 %v1828, %v1835
  %v1843 = vadd.f32 %v1829, %v1836
  %v1844 = vadd.f32 %v1830, %v1837
  %v1845 = vadd.f32 %v1831, %v1838
  %v1846 = vadd.f32 %v1832, %v1839
  %v1847 = vadd.f32 %v1833, %v1840
  %v1848 = vmul.f32 %v1785, %v1780
  %v1849 = vmul.f32 %v1786, %v1780
  %v1850 = vmul.f32 %v1787, %v1780
  %v1851 = vmul.f32 %v1788, %v1780
  %v1852 = vmul.f32 %v1789, %v1780
  %v1853 = vmul.f32 %v1790, %v1780
  %v1854 = vmul.f32 %v1791, %v1780
  %v1855 = vadd.f32 %v1841, %v1848
  %v1856 = vadd.f32 %v1842, %v1849
  %v1857 = vadd.f32 %v1843, %v1850
  %v1858 = vadd.f32 %v1844, %v1851
  %v1859 = vadd.f32 %v1845, %v1852
  %v1860 = vadd.f32 %v1846, %v1853
  %v1861 = vadd.f32 %v1847, %v1854
  %v1862 = vld [vmem:[%s188] sm:$0x1f]
  %v1863 = vld [vmem:[%s188 + $0x8] sm:$0x1f]
  %v1864 = vld [vmem:[%s188 + $0x10] sm:$0x1f]
  %v1865 = vld [vmem:[%s188 + $0x18] sm:$0x1f]
  %v1866 = vld [vmem:[%s188 + $0x20] sm:$0x1f]
  %v1867 = vld [vmem:[%s1161] sm:$0x1f]
  %v1868 = vld [vmem:[%s1161 + $0x8] sm:$0x1f]
  %v1869 = vld [vmem:[%s1161 + $0x10] sm:$0x1f]
  %v1870 = vld [vmem:[%s1161 + $0x18] sm:$0x1f]
  %v1871 = vld [vmem:[%s1161 + $0x20] sm:$0x1f]
  %v1872 = vld [vmem:[%s1161 + $0x28] sm:$0x1f]
  %v1873 = vld [vmem:[%s1161 + $0x30] sm:$0x1f]
  %v1874 = vld [vmem:[%s1161 + $0x38] sm:$0x1f]
  %v1875 = vld [vmem:[%s1161 + $0x40] sm:$0x1f]
  %v1876 = vld [vmem:[%s1161 + $0x48] sm:$0x1f]
  %v1877 = vld [vmem:[%s1161 + $0x50] sm:$0x1f]
  %v1878 = vmul.f32 %v1867, %v1862
  %v1879 = vmul.f32 %v1868, %v1862
  %v1880 = vmul.f32 %v1869, %v1862
  %v1881 = vmul.f32 %v1870, %v1862
  %v1882 = vmul.f32 %v1871, %v1862
  %v1883 = vmul.f32 %v1872, %v1862
  %v1884 = vmul.f32 %v1873, %v1862
  %v1885 = vadd.f32 %v1855, %v1878
  %v1886 = vadd.f32 %v1856, %v1879
  %v1887 = vadd.f32 %v1857, %v1880
  %v1888 = vadd.f32 %v1858, %v1881
  %v1889 = vadd.f32 %v1859, %v1882
  %v1890 = vadd.f32 %v1860, %v1883
  %v1891 = vadd.f32 %v1861, %v1884
  %v1892 = vmul.f32 %v1868, %v1863
  %v1893 = vmul.f32 %v1869, %v1863
  %v1894 = vmul.f32 %v1870, %v1863
  %v1895 = vmul.f32 %v1871, %v1863
  %v1896 = vmul.f32 %v1872, %v1863
  %v1897 = vmul.f32 %v1873, %v1863
  %v1898 = vmul.f32 %v1874, %v1863
  %v1899 = vadd.f32 %v1885, %v1892
  %v1900 = vadd.f32 %v1886, %v1893
  %v1901 = vadd.f32 %v1887, %v1894
  %v1902 = vadd.f32 %v1888, %v1895
  %v1903 = vadd.f32 %v1889, %v1896
  %v1904 = vadd.f32 %v1890, %v1897
  %v1905 = vadd.f32 %v1891, %v1898
  %v1906 = vmul.f32 %v1869, %v1864
  %v1907 = vmul.f32 %v1870, %v1864
  %v1908 = vmul.f32 %v1871, %v1864
  %v1909 = vmul.f32 %v1872, %v1864
  %v1910 = vmul.f32 %v1873, %v1864
  %v1911 = vmul.f32 %v1874, %v1864
  %v1912 = vmul.f32 %v1875, %v1864
  %v1913 = vadd.f32 %v1899, %v1906
  %v1914 = vadd.f32 %v1900, %v1907
  %v1915 = vadd.f32 %v1901, %v1908
  %v1916 = vadd.f32 %v1902, %v1909
  %v1917 = vadd.f32 %v1903, %v1910
  %v1918 = vadd.f32 %v1904, %v1911
  %v1919 = vadd.f32 %v1905, %v1912
  %v1920 = vmul.f32 %v1870, %v1865
  %v1921 = vmul.f32 %v1871, %v1865
  %v1922 = vmul.f32 %v1872, %v1865
  %v1923 = vmul.f32 %v1873, %v1865
  %v1924 = vmul.f32 %v1874, %v1865
  %v1925 = vmul.f32 %v1875, %v1865
  %v1926 = vmul.f32 %v1876, %v1865
  %v1927 = vadd.f32 %v1913, %v1920
  %v1928 = vadd.f32 %v1914, %v1921
  %v1929 = vadd.f32 %v1915, %v1922
  %v1930 = vadd.f32 %v1916, %v1923
  %v1931 = vadd.f32 %v1917, %v1924
  %v1932 = vadd.f32 %v1918, %v1925
  %v1933 = vadd.f32 %v1919, %v1926
  %v1934 = vmul.f32 %v1871, %v1866
  %v1935 = vmul.f32 %v1872, %v1866
  %v1936 = vmul.f32 %v1873, %v1866
  %v1937 = vmul.f32 %v1874, %v1866
  %v1938 = vmul.f32 %v1875, %v1866
  %v1939 = vmul.f32 %v1876, %v1866
  %v1940 = vmul.f32 %v1877, %v1866
  %v1941 = vadd.f32 %v1927, %v1934
  %v1942 = vadd.f32 %v1928, %v1935
  %v1943 = vadd.f32 %v1929, %v1936
  %v1944 = vadd.f32 %v1930, %v1937
  %v1945 = vadd.f32 %v1931, %v1938
  %v1946 = vadd.f32 %v1932, %v1939
  %v1947 = vadd.f32 %v1933, %v1940
  %v1948 = vld [vmem:[%s275] sm:$0x1f]
  %v1949 = vld [vmem:[%s275 + $0x8] sm:$0x1f]
  %v1950 = vld [vmem:[%s275 + $0x10] sm:$0x1f]
  %v1951 = vld [vmem:[%s275 + $0x18] sm:$0x1f]
  %v1952 = vld [vmem:[%s275 + $0x20] sm:$0x1f]
  %v1953 = vld [vmem:[%s1600] sm:$0x1f]
  %v1954 = vld [vmem:[%s1600 + $0x8] sm:$0x1f]
  %v1955 = vld [vmem:[%s1600 + $0x10] sm:$0x1f]
  %v1956 = vld [vmem:[%s1600 + $0x18] sm:$0x1f]
  %v1957 = vld [vmem:[%s1600 + $0x20] sm:$0x1f]
  %v1958 = vld [vmem:[%s1600 + $0x28] sm:$0x1f]
  %v1959 = vld [vmem:[%s1600 + $0x30] sm:$0x1f]
  %v1960 = vld [vmem:[%s1600 + $0x38] sm:$0x1f]
  %v1961 = vld [vmem:[%s1600 + $0x40] sm:$0x1f]
  %v1962 = vld [vmem:[%s1600 + $0x48] sm:$0x1f]
  %v1963 = vld [vmem:[%s1600 + $0x50] sm:$0x1f]
  %v1964 = vmul.f32 %v1953, %v1948
  %v1965 = vmul.f32 %v1954, %v1948
  %v1966 = vmul.f32 %v1955, %v1948
  %v1967 = vmul.f32 %v1956, %v1948
  %v1968 = vmul.f32 %v1957, %v1948
  %v1969 = vmul.f32 %v1958, %v1948
  %v1970 = vmul.f32 %v1959, %v1948
  %v1971 = vadd.f32 %v1941, %v1964
  %v1972 = vadd.f32 %v1942, %v1965
  %v1973 = vadd.f32 %v1943, %v1966
  %v1974 = vadd.f32 %v1944, %v1967
  %v1975 = vadd.f32 %v1945, %v1968
  %v1976 = vadd.f32 %v1946, %v1969
  %v1977 = vadd.f32 %v1947, %v1970
  %v1978 = vmul.f32 %v1954, %v1949
  %v1979 = vmul.f32 %v1955, %v1949
  %v1980 = vmul.f32 %v1956, %v1949
  %v1981 = vmul.f32 %v1957, %v1949
  %v1982 = vmul.f32 %v1958, %v1949
  %v1983 = vmul.f32 %v1959, %v1949
  %v1984 = vmul.f32 %v1960, %v1949
  %v1985 = vadd.f32 %v1971, %v1978
  %v1986 = vadd.f32 %v1972, %v1979
  %v1987 = vadd.f32 %v1973, %v1980
  %v1988 = vadd.f32 %v1974, %v1981
  %v1989 = vadd.f32 %v1975, %v1982
  %v1990 = vadd.f32 %v1976, %v1983
  %v1991 = vadd.f32 %v1977, %v1984
  %v1992 = vmul.f32 %v1955, %v1950
  %v1993 = vmul.f32 %v1956, %v1950
  %v1994 = vmul.f32 %v1957, %v1950
  %v1995 = vmul.f32 %v1958, %v1950
  %v1996 = vmul.f32 %v1959, %v1950
  %v1997 = vmul.f32 %v1960, %v1950
  %v1998 = vmul.f32 %v1961, %v1950
  %v1999 = vadd.f32 %v1985, %v1992
  %v2000 = vadd.f32 %v1986, %v1993
  %v2001 = vadd.f32 %v1987, %v1994
  %v2002 = vadd.f32 %v1988, %v1995
  %v2003 = vadd.f32 %v1989, %v1996
  %v2004 = vadd.f32 %v1990, %v1997
  %v2005 = vadd.f32 %v1991, %v1998
  %v2006 = vmul.f32 %v1956, %v1951
  %v2007 = vmul.f32 %v1957, %v1951
  %v2008 = vmul.f32 %v1958, %v1951
  %v2009 = vmul.f32 %v1959, %v1951
  %v2010 = vmul.f32 %v1960, %v1951
  %v2011 = vmul.f32 %v1961, %v1951
  %v2012 = vmul.f32 %v1962, %v1951
  %v2013 = vadd.f32 %v1999, %v2006
  %v2014 = vadd.f32 %v2000, %v2007
  %v2015 = vadd.f32 %v2001, %v2008
  %v2016 = vadd.f32 %v2002, %v2009
  %v2017 = vadd.f32 %v2003, %v2010
  %v2018 = vadd.f32 %v2004, %v2011
  %v2019 = vadd.f32 %v2005, %v2012
  %v2020 = vmul.f32 %v1957, %v1952
  %v2021 = vmul.f32 %v1958, %v1952
  %v2022 = vmul.f32 %v1959, %v1952
  %v2023 = vmul.f32 %v1960, %v1952
  %v2024 = vmul.f32 %v1961, %v1952
  %v2025 = vmul.f32 %v1962, %v1952
  %v2026 = vmul.f32 %v1963, %v1952
  %v2027 = vadd.f32 %v2013, %v2020
  %v2028 = vadd.f32 %v2014, %v2021
  %v2029 = vadd.f32 %v2015, %v2022
  %v2030 = vadd.f32 %v2016, %v2023
  %v2031 = vadd.f32 %v2017, %v2024
  %v2032 = vadd.f32 %v2018, %v2025
  %v2033 = vadd.f32 %v2019, %v2026
  %v2034 = vld [vmem:[%s363] sm:$0x1f]
  %v2035 = vld [vmem:[%s363 + $0x8] sm:$0x1f]
  %v2036 = vld [vmem:[%s363 + $0x10] sm:$0x1f]
  %v2037 = vld [vmem:[%s363 + $0x18] sm:$0x1f]
  %v2038 = vld [vmem:[%s363 + $0x20] sm:$0x1f]
  %s2039 = scalar_lea.vmem [#allocation2], 528
  %v2040 = vld [vmem:[%s2039] sm:$0x1f]
  %v2041 = vld [vmem:[%s2039 + $0x8] sm:$0x1f]
  %v2042 = vld [vmem:[%s2039 + $0x10] sm:$0x1f]
  %v2043 = vld [vmem:[%s2039 + $0x18] sm:$0x1f]
  %v2044 = vld [vmem:[%s2039 + $0x20] sm:$0x1f]
  %v2045 = vld [vmem:[%s2039 + $0x28] sm:$0x1f]
  %v2046 = vld [vmem:[%s2039 + $0x30] sm:$0x1f]
  %v2047 = vld [vmem:[%s2039 + $0x38] sm:$0x1f]
  %v2048 = vld [vmem:[%s2039 + $0x40] sm:$0x1f]
  %v2049 = vld [vmem:[%s2039 + $0x48] sm:$0x1f]
  %v2050 = vld [vmem:[%s2039 + $0x50] sm:$0x1f]
  %v2051 = vmul.f32 %v2040, %v2034
  %v2052 = vmul.f32 %v2041, %v2034
  %v2053 = vmul.f32 %v2042, %v2034
  %v2054 = vmul.f32 %v2043, %v2034
  %v2055 = vmul.f32 %v2044, %v2034
  %v2056 = vmul.f32 %v2045, %v2034
  %v2057 = vmul.f32 %v2046, %v2034
  %v2058 = vadd.f32 %v2027, %v2051
  %v2059 = vadd.f32 %v2028, %v2052
  %v2060 = vadd.f32 %v2029, %v2053
  %v2061 = vadd.f32 %v2030, %v2054
  %v2062 = vadd.f32 %v2031, %v2055
  %v2063 = vadd.f32 %v2032, %v2056
  %v2064 = vadd.f32 %v2033, %v2057
  %v2065 = vmul.f32 %v2041, %v2035
  %v2066 = vmul.f32 %v2042, %v2035
  %v2067 = vmul.f32 %v2043, %v2035
  %v2068 = vmul.f32 %v2044, %v2035
  %v2069 = vmul.f32 %v2045, %v2035
  %v2070 = vmul.f32 %v2046, %v2035
  %v2071 = vmul.f32 %v2047, %v2035
  %v2072 = vadd.f32 %v2058, %v2065
  %v2073 = vadd.f32 %v2059, %v2066
  %v2074 = vadd.f32 %v2060, %v2067
  %v2075 = vadd.f32 %v2061, %v2068
  %v2076 = vadd.f32 %v2062, %v2069
  %v2077 = vadd.f32 %v2063, %v2070
  %v2078 = vadd.f32 %v2064, %v2071
  %v2079 = vmul.f32 %v2042, %v2036
  %v2080 = vmul.f32 %v2043, %v2036
  %v2081 = vmul.f32 %v2044, %v2036
  %v2082 = vmul.f32 %v2045, %v2036
  %v2083 = vmul.f32 %v2046, %v2036
  %v2084 = vmul.f32 %v2047, %v2036
  %v2085 = vmul.f32 %v2048, %v2036
  %v2086 = vadd.f32 %v2072, %v2079
  %v2087 = vadd.f32 %v2073, %v2080
  %v2088 = vadd.f32 %v2074, %v2081
  %v2089 = vadd.f32 %v2075, %v2082
  %v2090 = vadd.f32 %v2076, %v2083
  %v2091 = vadd.f32 %v2077, %v2084
  %v2092 = vadd.f32 %v2078, %v2085
  %v2093 = vmul.f32 %v2043, %v2037
  %v2094 = vmul.f32 %v2044, %v2037
  %v2095 = vmul.f32 %v2045, %v2037
  %v2096 = vmul.f32 %v2046, %v2037
  %v2097 = vmul.f32 %v2047, %v2037
  %v2098 = vmul.f32 %v2048, %v2037
  %v2099 = vmul.f32 %v2049, %v2037
  %v2100 = vadd.f32 %v2086, %v2093
  %v2101 = vadd.f32 %v2087, %v2094
  %v2102 = vadd.f32 %v2088, %v2095
  %v2103 = vadd.f32 %v2089, %v2096
  %v2104 = vadd.f32 %v2090, %v2097
  %v2105 = vadd.f32 %v2091, %v2098
  %v2106 = vadd.f32 %v2092, %v2099
  %v2107 = vmul.f32 %v2044, %v2038
  %v2108 = vmul.f32 %v2045, %v2038
  %v2109 = vmul.f32 %v2046, %v2038
  %v2110 = vmul.f32 %v2047, %v2038
  %v2111 = vmul.f32 %v2048, %v2038
  %v2112 = vmul.f32 %v2049, %v2038
  %v2113 = vmul.f32 %v2050, %v2038
  %v2114 = vadd.f32 %v2100, %v2107
  %v2115 = vadd.f32 %v2101, %v2108
  %v2116 = vadd.f32 %v2102, %v2109
  %v2117 = vadd.f32 %v2103, %v2110
  %v2118 = vadd.f32 %v2104, %v2111
  %v2119 = vadd.f32 %v2105, %v2112
  %v2120 = vadd.f32 %v2106, %v2113
  %s2121 = scalar_lea.vmem %s2, 224
  %2122 = vst [vmem:[%s2121] sm:$0x1f] %v2114
  %2123 = vst [vmem:[%s2121 + $0x8] sm:$0x1f] %v2115
  %2124 = vst [vmem:[%s2121 + $0x10] sm:$0x1f] %v2116
  %2125 = vst [vmem:[%s2121 + $0x18] sm:$0x1f] %v2117
  %2126 = vst [vmem:[%s2121 + $0x20] sm:$0x1f] %v2118
  %2127 = vst [vmem:[%s2121 + $0x28] sm:$0x1f] %v2119
  %2128 = vst [vmem:[%s2121 + $0x30] sm:$0x1f] %v2120
  %v2129 = vld [vmem:[%s1] sm:$0x1f]
  %v2130 = vld [vmem:[%s1 + $0x8] sm:$0x1f]
  %v2131 = vld [vmem:[%s1 + $0x10] sm:$0x1f]
  %v2132 = vld [vmem:[%s1 + $0x18] sm:$0x1f]
  %v2133 = vld [vmem:[%s1 + $0x20] sm:$0x1f]
  %v2134 = vld [vmem:[%s722] sm:$0x1f]
  %v2135 = vld [vmem:[%s722 + $0x8] sm:$0x1f]
  %v2136 = vld [vmem:[%s722 + $0x10] sm:$0x1f]
  %v2137 = vld [vmem:[%s722 + $0x18] sm:$0x1f]
  %v2138 = vld [vmem:[%s722 + $0x20] sm:$0x1f]
  %v2139 = vld [vmem:[%s722 + $0x28] sm:$0x1f]
  %v2140 = vld [vmem:[%s722 + $0x30] sm:$0x1f]
  %v2141 = vld [vmem:[%s722 + $0x38] sm:$0x1f]
  %v2142 = vld [vmem:[%s722 + $0x40] sm:$0x1f]
  %v2143 = vld [vmem:[%s722 + $0x48] sm:$0x1f]
  %v2144 = vld [vmem:[%s722 + $0x50] sm:$0x1f]
  %v2145 = vmul.f32 %v2134, %v2129
  %v2146 = vmul.f32 %v2135, %v2129
  %v2147 = vmul.f32 %v2136, %v2129
  %v2148 = vmul.f32 %v2137, %v2129
  %v2149 = vmul.f32 %v2138, %v2129
  %v2150 = vmul.f32 %v2139, %v2129
  %v2151 = vmul.f32 %v2140, %v2129
  %v2152 = vadd.f32 %v2145, 0.0
  %v2153 = vadd.f32 %v2146, 0.0
  %v2154 = vadd.f32 %v2147, 0.0
  %v2155 = vadd.f32 %v2148, 0.0
  %v2156 = vadd.f32 %v2149, 0.0
  %v2157 = vadd.f32 %v2150, 0.0
  %v2158 = vadd.f32 %v2151, 0.0
  %v2159 = vmul.f32 %v2135, %v2130
  %v2160 = vmul.f32 %v2136, %v2130
  %v2161 = vmul.f32 %v2137, %v2130
  %v2162 = vmul.f32 %v2138, %v2130
  %v2163 = vmul.f32 %v2139, %v2130
  %v2164 = vmul.f32 %v2140, %v2130
  %v2165 = vmul.f32 %v2141, %v2130
  %v2166 = vadd.f32 %v2152, %v2159
  %v2167 = vadd.f32 %v2153, %v2160
  %v2168 = vadd.f32 %v2154, %v2161
  %v2169 = vadd.f32 %v2155, %v2162
  %v2170 = vadd.f32 %v2156, %v2163
  %v2171 = vadd.f32 %v2157, %v2164
  %v2172 = vadd.f32 %v2158, %v2165
  %v2173 = vmul.f32 %v2136, %v2131
  %v2174 = vmul.f32 %v2137, %v2131
  %v2175 = vmul.f32 %v2138, %v2131
  %v2176 = vmul.f32 %v2139, %v2131
  %v2177 = vmul.f32 %v2140, %v2131
  %v2178 = vmul.f32 %v2141, %v2131
  %v2179 = vmul.f32 %v2142, %v2131
  %v2180 = vadd.f32 %v2166, %v2173
  %v2181 = vadd.f32 %v2167, %v2174
  %v2182 = vadd.f32 %v2168, %v2175
  %v2183 = vadd.f32 %v2169, %v2176
  %v2184 = vadd.f32 %v2170, %v2177
  %v2185 = vadd.f32 %v2171, %v2178
  %v2186 = vadd.f32 %v2172, %v2179
  %v2187 = vmul.f32 %v2137, %v2132
  %v2188 = vmul.f32 %v2138, %v2132
  %v2189 = vmul.f32 %v2139, %v2132
  %v2190 = vmul.f32 %v2140, %v2132
  %v2191 = vmul.f32 %v2141, %v2132
  %v2192 = vmul.f32 %v2142, %v2132
  %v2193 = vmul.f32 %v2143, %v2132
  %v2194 = vadd.f32 %v2180, %v2187
  %v2195 = vadd.f32 %v2181, %v2188
  %v2196 = vadd.f32 %v2182, %v2189
  %v2197 = vadd.f32 %v2183, %v2190
  %v2198 = vadd.f32 %v2184, %v2191
  %v2199 = vadd.f32 %v2185, %v2192
  %v2200 = vadd.f32 %v2186, %v2193
  %v2201 = vmul.f32 %v2138, %v2133
  %v2202 = vmul.f32 %v2139, %v2133
  %v2203 = vmul.f32 %v2140, %v2133
  %v2204 = vmul.f32 %v2141, %v2133
  %v2205 = vmul.f32 %v2142, %v2133
  %v2206 = vmul.f32 %v2143, %v2133
  %v2207 = vmul.f32 %v2144, %v2133
  %v2208 = vadd.f32 %v2194, %v2201
  %v2209 = vadd.f32 %v2195, %v2202
  %v2210 = vadd.f32 %v2196, %v2203
  %v2211 = vadd.f32 %v2197, %v2204
  %v2212 = vadd.f32 %v2198, %v2205
  %v2213 = vadd.f32 %v2199, %v2206
  %v2214 = vadd.f32 %v2200, %v2207
  %v2215 = vld [vmem:[%s458] sm:$0x1f]
  %v2216 = vld [vmem:[%s458 + $0x8] sm:$0x1f]
  %v2217 = vld [vmem:[%s458 + $0x10] sm:$0x1f]
  %v2218 = vld [vmem:[%s458 + $0x18] sm:$0x1f]
  %v2219 = vld [vmem:[%s458 + $0x20] sm:$0x1f]
  %v2220 = vld [vmem:[%s1161] sm:$0x1f]
  %v2221 = vld [vmem:[%s1161 + $0x8] sm:$0x1f]
  %v2222 = vld [vmem:[%s1161 + $0x10] sm:$0x1f]
  %v2223 = vld [vmem:[%s1161 + $0x18] sm:$0x1f]
  %v2224 = vld [vmem:[%s1161 + $0x20] sm:$0x1f]
  %v2225 = vld [vmem:[%s1161 + $0x28] sm:$0x1f]
  %v2226 = vld [vmem:[%s1161 + $0x30] sm:$0x1f]
  %v2227 = vld [vmem:[%s1161 + $0x38] sm:$0x1f]
  %v2228 = vld [vmem:[%s1161 + $0x40] sm:$0x1f]
  %v2229 = vld [vmem:[%s1161 + $0x48] sm:$0x1f]
  %v2230 = vld [vmem:[%s1161 + $0x50] sm:$0x1f]
  %v2231 = vmul.f32 %v2220, %v2215
  %v2232 = vmul.f32 %v2221, %v2215
  %v2233 = vmul.f32 %v2222, %v2215
  %v2234 = vmul.f32 %v2223, %v2215
  %v2235 = vmul.f32 %v2224, %v2215
  %v2236 = vmul.f32 %v2225, %v2215
  %v2237 = vmul.f32 %v2226, %v2215
  %v2238 = vadd.f32 %v2208, %v2231
  %v2239 = vadd.f32 %v2209, %v2232
  %v2240 = vadd.f32 %v2210, %v2233
  %v2241 = vadd.f32 %v2211, %v2234
  %v2242 = vadd.f32 %v2212, %v2235
  %v2243 = vadd.f32 %v2213, %v2236
  %v2244 = vadd.f32 %v2214, %v2237
  %v2245 = vmul.f32 %v2221, %v2216
  %v2246 = vmul.f32 %v2222, %v2216
  %v2247 = vmul.f32 %v2223, %v2216
  %v2248 = vmul.f32 %v2224, %v2216
  %v2249 = vmul.f32 %v2225, %v2216
  %v2250 = vmul.f32 %v2226, %v2216
  %v2251 = vmul.f32 %v2227, %v2216
  %v2252 = vadd.f32 %v2238, %v2245
  %v2253 = vadd.f32 %v2239, %v2246
  %v2254 = vadd.f32 %v2240, %v2247
  %v2255 = vadd.f32 %v2241, %v2248
  %v2256 = vadd.f32 %v2242, %v2249
  %v2257 = vadd.f32 %v2243, %v2250
  %v2258 = vadd.f32 %v2244, %v2251
  %v2259 = vmul.f32 %v2222, %v2217
  %v2260 = vmul.f32 %v2223, %v2217
  %v2261 = vmul.f32 %v2224, %v2217
  %v2262 = vmul.f32 %v2225, %v2217
  %v2263 = vmul.f32 %v2226, %v2217
  %v2264 = vmul.f32 %v2227, %v2217
  %v2265 = vmul.f32 %v2228, %v2217
  %v2266 = vadd.f32 %v2252, %v2259
  %v2267 = vadd.f32 %v2253, %v2260
  %v2268 = vadd.f32 %v2254, %v2261
  %v2269 = vadd.f32 %v2255, %v2262
  %v2270 = vadd.f32 %v2256, %v2263
  %v2271 = vadd.f32 %v2257, %v2264
  %v2272 = vadd.f32 %v2258, %v2265
  %v2273 = vmul.f32 %v2223, %v2218
  %v2274 = vmul.f32 %v2224, %v2218
  %v2275 = vmul.f32 %v2225, %v2218
  %v2276 = vmul.f32 %v2226, %v2218
  %v2277 = vmul.f32 %v2227, %v2218
  %v2278 = vmul.f32 %v2228, %v2218
  %v2279 = vmul.f32 %v2229, %v2218
  %v2280 = vadd.f32 %v2266, %v2273
  %v2281 = vadd.f32 %v2267, %v2274
  %v2282 = vadd.f32 %v2268, %v2275
  %v2283 = vadd.f32 %v2269, %v2276
  %v2284 = vadd.f32 %v2270, %v2277
  %v2285 = vadd.f32 %v2271, %v2278
  %v2286 = vadd.f32 %v2272, %v2279
  %v2287 = vmul.f32 %v2224, %v2219
  %v2288 = vmul.f32 %v2225, %v2219
  %v2289 = vmul.f32 %v2226, %v2219
  %v2290 = vmul.f32 %v2227, %v2219
  %v2291 = vmul.f32 %v2228, %v2219
  %v2292 = vmul.f32 %v2229, %v2219
  %v2293 = vmul.f32 %v2230, %v2219
  %v2294 = vadd.f32 %v2280, %v2287
  %v2295 = vadd.f32 %v2281, %v2288
  %v2296 = vadd.f32 %v2282, %v2289
  %v2297 = vadd.f32 %v2283, %v2290
  %v2298 = vadd.f32 %v2284, %v2291
  %v2299 = vadd.f32 %v2285, %v2292
  %v2300 = vadd.f32 %v2286, %v2293
  %v2301 = vld [vmem:[%s188] sm:$0x1f]
  %v2302 = vld [vmem:[%s188 + $0x8] sm:$0x1f]
  %v2303 = vld [vmem:[%s188 + $0x10] sm:$0x1f]
  %v2304 = vld [vmem:[%s188 + $0x18] sm:$0x1f]
  %v2305 = vld [vmem:[%s188 + $0x20] sm:$0x1f]
  %v2306 = vld [vmem:[%s1600] sm:$0x1f]
  %v2307 = vld [vmem:[%s1600 + $0x8] sm:$0x1f]
  %v2308 = vld [vmem:[%s1600 + $0x10] sm:$0x1f]
  %v2309 = vld [vmem:[%s1600 + $0x18] sm:$0x1f]
  %v2310 = vld [vmem:[%s1600 + $0x20] sm:$0x1f]
  %v2311 = vld [vmem:[%s1600 + $0x28] sm:$0x1f]
  %v2312 = vld [vmem:[%s1600 + $0x30] sm:$0x1f]
  %v2313 = vld [vmem:[%s1600 + $0x38] sm:$0x1f]
  %v2314 = vld [vmem:[%s1600 + $0x40] sm:$0x1f]
  %v2315 = vld [vmem:[%s1600 + $0x48] sm:$0x1f]
  %v2316 = vld [vmem:[%s1600 + $0x50] sm:$0x1f]
  %v2317 = vmul.f32 %v2306, %v2301
  %v2318 = vmul.f32 %v2307, %v2301
  %v2319 = vmul.f32 %v2308, %v2301
  %v2320 = vmul.f32 %v2309, %v2301
  %v2321 = vmul.f32 %v2310, %v2301
  %v2322 = vmul.f32 %v2311, %v2301
  %v2323 = vmul.f32 %v2312, %v2301
  %v2324 = vadd.f32 %v2294, %v2317
  %v2325 = vadd.f32 %v2295, %v2318
  %v2326 = vadd.f32 %v2296, %v2319
  %v2327 = vadd.f32 %v2297, %v2320
  %v2328 = vadd.f32 %v2298, %v2321
  %v2329 = vadd.f32 %v2299, %v2322
  %v2330 = vadd.f32 %v2300, %v2323
  %v2331 = vmul.f32 %v2307, %v2302
  %v2332 = vmul.f32 %v2308, %v2302
  %v2333 = vmul.f32 %v2309, %v2302
  %v2334 = vmul.f32 %v2310, %v2302
  %v2335 = vmul.f32 %v2311, %v2302
  %v2336 = vmul.f32 %v2312, %v2302
  %v2337 = vmul.f32 %v2313, %v2302
  %v2338 = vadd.f32 %v2324, %v2331
  %v2339 = vadd.f32 %v2325, %v2332
  %v2340 = vadd.f32 %v2326, %v2333
  %v2341 = vadd.f32 %v2327, %v2334
  %v2342 = vadd.f32 %v2328, %v2335
  %v2343 = vadd.f32 %v2329, %v2336
  %v2344 = vadd.f32 %v2330, %v2337
  %v2345 = vmul.f32 %v2308, %v2303
  %v2346 = vmul.f32 %v2309, %v2303
  %v2347 = vmul.f32 %v2310, %v2303
  %v2348 = vmul.f32 %v2311, %v2303
  %v2349 = vmul.f32 %v2312, %v2303
  %v2350 = vmul.f32 %v2313, %v2303
  %v2351 = vmul.f32 %v2314, %v2303
  %v2352 = vadd.f32 %v2338, %v2345
  %v2353 = vadd.f32 %v2339, %v2346
  %v2354 = vadd.f32 %v2340, %v2347
  %v2355 = vadd.f32 %v2341, %v2348
  %v2356 = vadd.f32 %v2342, %v2349
  %v2357 = vadd.f32 %v2343, %v2350
  %v2358 = vadd.f32 %v2344, %v2351
  %v2359 = vmul.f32 %v2309, %v2304
  %v2360 = vmul.f32 %v2310, %v2304
  %v2361 = vmul.f32 %v2311, %v2304
  %v2362 = vmul.f32 %v2312, %v2304
  %v2363 = vmul.f32 %v2313, %v2304
  %v2364 = vmul.f32 %v2314, %v2304
  %v2365 = vmul.f32 %v2315, %v2304
  %v2366 = vadd.f32 %v2352, %v2359
  %v2367 = vadd.f32 %v2353, %v2360
  %v2368 = vadd.f32 %v2354, %v2361
  %v2369 = vadd.f32 %v2355, %v2362
  %v2370 = vadd.f32 %v2356, %v2363
  %v2371 = vadd.f32 %v2357, %v2364
  %v2372 = vadd.f32 %v2358, %v2365
  %v2373 = vmul.f32 %v2310, %v2305
  %v2374 = vmul.f32 %v2311, %v2305
  %v2375 = vmul.f32 %v2312, %v2305
  %v2376 = vmul.f32 %v2313, %v2305
  %v2377 = vmul.f32 %v2314, %v2305
  %v2378 = vmul.f32 %v2315, %v2305
  %v2379 = vmul.f32 %v2316, %v2305
  %v2380 = vadd.f32 %v2366, %v2373
  %v2381 = vadd.f32 %v2367, %v2374
  %v2382 = vadd.f32 %v2368, %v2375
  %v2383 = vadd.f32 %v2369, %v2376
  %v2384 = vadd.f32 %v2370, %v2377
  %v2385 = vadd.f32 %v2371, %v2378
  %v2386 = vadd.f32 %v2372, %v2379
  %v2387 = vld [vmem:[%s275] sm:$0x1f]
  %v2388 = vld [vmem:[%s275 + $0x8] sm:$0x1f]
  %v2389 = vld [vmem:[%s275 + $0x10] sm:$0x1f]
  %v2390 = vld [vmem:[%s275 + $0x18] sm:$0x1f]
  %v2391 = vld [vmem:[%s275 + $0x20] sm:$0x1f]
  %v2392 = vld [vmem:[%s2039] sm:$0x1f]
  %v2393 = vld [vmem:[%s2039 + $0x8] sm:$0x1f]
  %v2394 = vld [vmem:[%s2039 + $0x10] sm:$0x1f]
  %v2395 = vld [vmem:[%s2039 + $0x18] sm:$0x1f]
  %v2396 = vld [vmem:[%s2039 + $0x20] sm:$0x1f]
  %v2397 = vld [vmem:[%s2039 + $0x28] sm:$0x1f]
  %v2398 = vld [vmem:[%s2039 + $0x30] sm:$0x1f]
  %v2399 = vld [vmem:[%s2039 + $0x38] sm:$0x1f]
  %v2400 = vld [vmem:[%s2039 + $0x40] sm:$0x1f]
  %v2401 = vld [vmem:[%s2039 + $0x48] sm:$0x1f]
  %v2402 = vld [vmem:[%s2039 + $0x50] sm:$0x1f]
  %v2403 = vmul.f32 %v2392, %v2387
  %v2404 = vmul.f32 %v2393, %v2387
  %v2405 = vmul.f32 %v2394, %v2387
  %v2406 = vmul.f32 %v2395, %v2387
  %v2407 = vmul.f32 %v2396, %v2387
  %v2408 = vmul.f32 %v2397, %v2387
  %v2409 = vmul.f32 %v2398, %v2387
  %v2410 = vadd.f32 %v2380, %v2403
  %v2411 = vadd.f32 %v2381, %v2404
  %v2412 = vadd.f32 %v2382, %v2405
  %v2413 = vadd.f32 %v2383, %v2406
  %v2414 = vadd.f32 %v2384, %v2407
  %v2415 = vadd.f32 %v2385, %v2408
  %v2416 = vadd.f32 %v2386, %v2409
  %v2417 = vmul.f32 %v2393, %v2388
  %v2418 = vmul.f32 %v2394, %v2388
  %v2419 = vmul.f32 %v2395, %v2388
  %v2420 = vmul.f32 %v2396, %v2388
  %v2421 = vmul.f32 %v2397, %v2388
  %v2422 = vmul.f32 %v2398, %v2388
  %v2423 = vmul.f32 %v2399, %v2388
  %v2424 = vadd.f32 %v2410, %v2417
  %v2425 = vadd.f32 %v2411, %v2418
  %v2426 = vadd.f32 %v2412, %v2419
  %v2427 = vadd.f32 %v2413, %v2420
  %v2428 = vadd.f32 %v2414, %v2421
  %v2429 = vadd.f32 %v2415, %v2422
  %v2430 = vadd.f32 %v2416, %v2423
  %v2431 = vmul.f32 %v2394, %v2389
  %v2432 = vmul.f32 %v2395, %v2389
  %v2433 = vmul.f32 %v2396, %v2389
  %v2434 = vmul.f32 %v2397, %v2389
  %v2435 = vmul.f32 %v2398, %v2389
  %v2436 = vmul.f32 %v2399, %v2389
  %v2437 = vmul.f32 %v2400, %v2389
  %v2438 = vadd.f32 %v2424, %v2431
  %v2439 = vadd.f32 %v2425, %v2432
  %v2440 = vadd.f32 %v2426, %v2433
  %v2441 = vadd.f32 %v2427, %v2434
  %v2442 = vadd.f32 %v2428, %v2435
  %v2443 = vadd.f32 %v2429, %v2436
  %v2444 = vadd.f32 %v2430, %v2437
  %v2445 = vmul.f32 %v2395, %v2390
  %v2446 = vmul.f32 %v2396, %v2390
  %v2447 = vmul.f32 %v2397, %v2390
  %v2448 = vmul.f32 %v2398, %v2390
  %v2449 = vmul.f32 %v2399, %v2390
  %v2450 = vmul.f32 %v2400, %v2390
  %v2451 = vmul.f32 %v2401, %v2390
  %v2452 = vadd.f32 %v2438, %v2445
  %v2453 = vadd.f32 %v2439, %v2446
  %v2454 = vadd.f32 %v2440, %v2447
  %v2455 = vadd.f32 %v2441, %v2448
  %v2456 = vadd.f32 %v2442, %v2449
  %v2457 = vadd.f32 %v2443, %v2450
  %v2458 = vadd.f32 %v2444, %v2451
  %v2459 = vmul.f32 %v2396, %v2391
  %v2460 = vmul.f32 %v2397, %v2391
  %v2461 = vmul.f32 %v2398, %v2391
  %v2462 = vmul.f32 %v2399, %v2391
  %v2463 = vmul.f32 %v2400, %v2391
  %v2464 = vmul.f32 %v2401, %v2391
  %v2465 = vmul.f32 %v2402, %v2391
  %v2466 = vadd.f32 %v2452, %v2459
  %v2467 = vadd.f32 %v2453, %v2460
  %v2468 = vadd.f32 %v2454, %v2461
  %v2469 = vadd.f32 %v2455, %v2462
  %v2470 = vadd.f32 %v2456, %v2463
  %v2471 = vadd.f32 %v2457, %v2464
  %v2472 = vadd.f32 %v2458, %v2465
  %s2473 = scalar_lea.vmem %s2, 280
  %2474 = vst [vmem:[%s2473] sm:$0x1f] %v2466
  %2475 = vst [vmem:[%s2473 + $0x8] sm:$0x1f] %v2467
  %2476 = vst [vmem:[%s2473 + $0x10] sm:$0x1f] %v2468
  %2477 = vst [vmem:[%s2473 + $0x18] sm:$0x1f] %v2469
  %2478 = vst [vmem:[%s2473 + $0x20] sm:$0x1f] %v2470
  %2479 = vst [vmem:[%s2473 + $0x28] sm:$0x1f] %v2471
  %2480 = vst [vmem:[%s2473 + $0x30] sm:$0x1f] %v2472
  %v2481 = vld [vmem:[%s1] sm:$0x1f]
  %v2482 = vld [vmem:[%s1 + $0x8] sm:$0x1f]
  %v2483 = vld [vmem:[%s1 + $0x10] sm:$0x1f]
  %v2484 = vld [vmem:[%s1 + $0x18] sm:$0x1f]
  %v2485 = vld [vmem:[%s1 + $0x20] sm:$0x1f]
  %v2486 = vld [vmem:[%s1161] sm:$0x1f]
  %v2487 = vld [vmem:[%s1161 + $0x8] sm:$0x1f]
  %v2488 = vld [vmem:[%s1161 + $0x10] sm:$0x1f]
  %v2489 = vld [vmem:[%s1161 + $0x18] sm:$0x1f]
  %v2490 = vld [vmem:[%s1161 + $0x20] sm:$0x1f]
  %v2491 = vld [vmem:[%s1161 + $0x28] sm:$0x1f]
  %v2492 = vld [vmem:[%s1161 + $0x30] sm:$0x1f]
  %v2493 = vld [vmem:[%s1161 + $0x38] sm:$0x1f]
  %v2494 = vld [vmem:[%s1161 + $0x40] sm:$0x1f]
  %v2495 = vld [vmem:[%s1161 + $0x48] sm:$0x1f]
  %v2496 = vld [vmem:[%s1161 + $0x50] sm:$0x1f]
  %v2497 = vmul.f32 %v2486, %v2481
  %v2498 = vmul.f32 %v2487, %v2481
  %v2499 = vmul.f32 %v2488, %v2481
  %v2500 = vmul.f32 %v2489, %v2481
  %v2501 = vmul.f32 %v2490, %v2481
  %v2502 = vmul.f32 %v2491, %v2481
  %v2503 = vmul.f32 %v2492, %v2481
  %v2504 = vadd.f32 %v2497, 0.0
  %v2505 = vadd.f32 %v2498, 0.0
  %v2506 = vadd.f32 %v2499, 0.0
  %v2507 = vadd.f32 %v2500, 0.0
  %v2508 = vadd.f32 %v2501, 0.0
  %v2509 = vadd.f32 %v2502, 0.0
  %v2510 = vadd.f32 %v2503, 0.0
  %v2511 = vmul.f32 %v2487, %v2482
  %v2512 = vmul.f32 %v2488, %v2482
  %v2513 = vmul.f32 %v2489, %v2482
  %v2514 = vmul.f32 %v2490, %v2482
  %v2515 = vmul.f32 %v2491, %v2482
  %v2516 = vmul.f32 %v2492, %v2482
  %v2517 = vmul.f32 %v2493, %v2482
  %v2518 = vadd.f32 %v2504, %v2511
  %v2519 = vadd.f32 %v2505, %v2512
  %v2520 = vadd.f32 %v2506, %v2513
  %v2521 = vadd.f32 %v2507, %v2514
  %v2522 = vadd.f32 %v2508, %v2515
  %v2523 = vadd.f32 %v2509, %v2516
  %v2524 = vadd.f32 %v2510, %v2517
  %v2525 = vmul.f32 %v2488, %v2483
  %v2526 = vmul.f32 %v2489, %v2483
  %v2527 = vmul.f32 %v2490, %v2483
  %v2528 = vmul.f32 %v2491, %v2483
  %v2529 = vmul.f32 %v2492, %v2483
  %v2530 = vmul.f32 %v2493, %v2483
  %v2531 = vmul.f32 %v2494, %v2483
  %v2532 = vadd.f32 %v2518, %v2525
  %v2533 = vadd.f32 %v2519, %v2526
  %v2534 = vadd.f32 %v2520, %v2527
  %v2535 = vadd.f32 %v2521, %v2528
  %v2536 = vadd.f32 %v2522, %v2529
  %v2537 = vadd.f32 %v2523, %v2530
  %v2538 = vadd.f32 %v2524, %v2531
  %v2539 = vmul.f32 %v2489, %v2484
  %v2540 = vmul.f32 %v2490, %v2484
  %v2541 = vmul.f32 %v2491, %v2484
  %v2542 = vmul.f32 %v2492, %v2484
  %v2543 = vmul.f32 %v2493, %v2484
  %v2544 = vmul.f32 %v2494, %v2484
  %v2545 = vmul.f32 %v2495, %v2484
  %v2546 = vadd.f32 %v2532, %v2539
  %v2547 = vadd.f32 %v2533, %v2540
  %v2548 = vadd.f32 %v2534, %v2541
  %v2549 = vadd.f32 %v2535, %v2542
  %v2550 = vadd.f32 %v2536, %v2543
  %v2551 = vadd.f32 %v2537, %v2544
  %v2552 = vadd.f32 %v2538, %v2545
  %v2553 = vmul.f32 %v2490, %v2485
  %v2554 = vmul.f32 %v2491, %v2485
  %v2555 = vmul.f32 %v2492, %v2485
  %v2556 = vmul.f32 %v2493, %v2485
  %v2557 = vmul.f32 %v2494, %v2485
  %v2558 = vmul.f32 %v2495, %v2485
  %v2559 = vmul.f32 %v2496, %v2485
  %v2560 = vadd.f32 %v2546, %v2553
  %v2561 = vadd.f32 %v2547, %v2554
  %v2562 = vadd.f32 %v2548, %v2555
  %v2563 = vadd.f32 %v2549, %v2556
  %v2564 = vadd.f32 %v2550, %v2557
  %v2565 = vadd.f32 %v2551, %v2558
  %v2566 = vadd.f32 %v2552, %v2559
  %v2567 = vld [vmem:[%s458] sm:$0x1f]
  %v2568 = vld [vmem:[%s458 + $0x8] sm:$0x1f]
  %v2569 = vld [vmem:[%s458 + $0x10] sm:$0x1f]
  %v2570 = vld [vmem:[%s458 + $0x18] sm:$0x1f]
  %v2571 = vld [vmem:[%s458 + $0x20] sm:$0x1f]
  %v2572 = vld [vmem:[%s1600] sm:$0x1f]
  %v2573 = vld [vmem:[%s1600 + $0x8] sm:$0x1f]
  %v2574 = vld [vmem:[%s1600 + $0x10] sm:$0x1f]
  %v2575 = vld [vmem:[%s1600 + $0x18] sm:$0x1f]
  %v2576 = vld [vmem:[%s1600 + $0x20] sm:$0x1f]
  %v2577 = vld [vmem:[%s1600 + $0x28] sm:$0x1f]
  %v2578 = vld [vmem:[%s1600 + $0x30] sm:$0x1f]
  %v2579 = vld [vmem:[%s1600 + $0x38] sm:$0x1f]
  %v2580 = vld [vmem:[%s1600 + $0x40] sm:$0x1f]
  %v2581 = vld [vmem:[%s1600 + $0x48] sm:$0x1f]
  %v2582 = vld [vmem:[%s1600 + $0x50] sm:$0x1f]
  %v2583 = vmul.f32 %v2572, %v2567
  %v2584 = vmul.f32 %v2573, %v2567
  %v2585 = vmul.f32 %v2574, %v2567
  %v2586 = vmul.f32 %v2575, %v2567
  %v2587 = vmul.f32 %v2576, %v2567
  %v2588 = vmul.f32 %v2577, %v2567
  %v2589 = vmul.f32 %v2578, %v2567
  %v2590 = vadd.f32 %v2560, %v2583
  %v2591 = vadd.f32 %v2561, %v2584
  %v2592 = vadd.f32 %v2562, %v2585
  %v2593 = vadd.f32 %v2563, %v2586
  %v2594 = vadd.f32 %v2564, %v2587
  %v2595 = vadd.f32 %v2565, %v2588
  %v2596 = vadd.f32 %v2566, %v2589
  %v2597 = vmul.f32 %v2573, %v2568
  %v2598 = vmul.f32 %v2574, %v2568
  %v2599 = vmul.f32 %v2575, %v2568
  %v2600 = vmul.f32 %v2576, %v2568
  %v2601 = vmul.f32 %v2577, %v2568
  %v2602 = vmul.f32 %v2578, %v2568
  %v2603 = vmul.f32 %v2579, %v2568
  %v2604 = vadd.f32 %v2590, %v2597
  %v2605 = vadd.f32 %v2591, %v2598
  %v2606 = vadd.f32 %v2592, %v2599
  %v2607 = vadd.f32 %v2593, %v2600
  %v2608 = vadd.f32 %v2594, %v2601
  %v2609 = vadd.f32 %v2595, %v2602
  %v2610 = vadd.f32 %v2596, %v2603
  %v2611 = vmul.f32 %v2574, %v2569
  %v2612 = vmul.f32 %v2575, %v2569
  %v2613 = vmul.f32 %v2576, %v2569
  %v2614 = vmul.f32 %v2577, %v2569
  %v2615 = vmul.f32 %v2578, %v2569
  %v2616 = vmul.f32 %v2579, %v2569
  %v2617 = vmul.f32 %v2580, %v2569
  %v2618 = vadd.f32 %v2604, %v2611
  %v2619 = vadd.f32 %v2605, %v2612
  %v2620 = vadd.f32 %v2606, %v2613
  %v2621 = vadd.f32 %v2607, %v2614
  %v2622 = vadd.f32 %v2608, %v2615
  %v2623 = vadd.f32 %v2609, %v2616
  %v2624 = vadd.f32 %v2610, %v2617
  %v2625 = vmul.f32 %v2575, %v2570
  %v2626 = vmul.f32 %v2576, %v2570
  %v2627 = vmul.f32 %v2577, %v2570
  %v2628 = vmul.f32 %v2578, %v2570
  %v2629 = vmul.f32 %v2579, %v2570
  %v2630 = vmul.f32 %v2580, %v2570
  %v2631 = vmul.f32 %v2581, %v2570
  %v2632 = vadd.f32 %v2618, %v2625
  %v2633 = vadd.f32 %v2619, %v2626
  %v2634 = vadd.f32 %v2620, %v2627
  %v2635 = vadd.f32 %v2621, %v2628
  %v2636 = vadd.f32 %v2622, %v2629
  %v2637 = vadd.f32 %v2623, %v2630
  %v2638 = vadd.f32 %v2624, %v2631
  %v2639 = vmul.f32 %v2576, %v2571
  %v2640 = vmul.f32 %v2577, %v2571
  %v2641 = vmul.f32 %v2578, %v2571
  %v2642 = vmul.f32 %v2579, %v2571
  %v2643 = vmul.f32 %v2580, %v2571
  %v2644 = vmul.f32 %v2581, %v2571
  %v2645 = vmul.f32 %v2582, %v2571
  %v2646 = vadd.f32 %v2632, %v2639
  %v2647 = vadd.f32 %v2633, %v2640
  %v2648 = vadd.f32 %v2634, %v2641
  %v2649 = vadd.f32 %v2635, %v2642
  %v2650 = vadd.f32 %v2636, %v2643
  %v2651 = vadd.f32 %v2637, %v2644
  %v2652 = vadd.f32 %v2638, %v2645
  %v2653 = vld [vmem:[%s188] sm:$0x1f]
  %v2654 = vld [vmem:[%s188 + $0x8] sm:$0x1f]
  %v2655 = vld [vmem:[%s188 + $0x10] sm:$0x1f]
  %v2656 = vld [vmem:[%s188 + $0x18] sm:$0x1f]
  %v2657 = vld [vmem:[%s188 + $0x20] sm:$0x1f]
  %v2658 = vld [vmem:[%s2039] sm:$0x1f]
  %v2659 = vld [vmem:[%s2039 + $0x8] sm:$0x1f]
  %v2660 = vld [vmem:[%s2039 + $0x10] sm:$0x1f]
  %v2661 = vld [vmem:[%s2039 + $0x18] sm:$0x1f]
  %v2662 = vld [vmem:[%s2039 + $0x20] sm:$0x1f]
  %v2663 = vld [vmem:[%s2039 + $0x28] sm:$0x1f]
  %v2664 = vld [vmem:[%s2039 + $0x30] sm:$0x1f]
  %v2665 = vld [vmem:[%s2039 + $0x38] sm:$0x1f]
  %v2666 = vld [vmem:[%s2039 + $0x40] sm:$0x1f]
  %v2667 = vld [vmem:[%s2039 + $0x48] sm:$0x1f]
  %v2668 = vld [vmem:[%s2039 + $0x50] sm:$0x1f]
  %v2669 = vmul.f32 %v2658, %v2653
  %v2670 = vmul.f32 %v2659, %v2653
  %v2671 = vmul.f32 %v2660, %v2653
  %v2672 = vmul.f32 %v2661, %v2653
  %v2673 = vmul.f32 %v2662, %v2653
  %v2674 = vmul.f32 %v2663, %v2653
  %v2675 = vmul.f32 %v2664, %v2653
  %v2676 = vadd.f32 %v2646, %v2669
  %v2677 = vadd.f32 %v2647, %v2670
  %v2678 = vadd.f32 %v2648, %v2671
  %v2679 = vadd.f32 %v2649, %v2672
  %v2680 = vadd.f32 %v2650, %v2673
  %v2681 = vadd.f32 %v2651, %v2674
  %v2682 = vadd.f32 %v2652, %v2675
  %v2683 = vmul.f32 %v2659, %v2654
  %v2684 = vmul.f32 %v2660, %v2654
  %v2685 = vmul.f32 %v2661, %v2654
  %v2686 = vmul.f32 %v2662, %v2654
  %v2687 = vmul.f32 %v2663, %v2654
  %v2688 = vmul.f32 %v2664, %v2654
  %v2689 = vmul.f32 %v2665, %v2654
  %v2690 = vadd.f32 %v2676, %v2683
  %v2691 = vadd.f32 %v2677, %v2684
  %v2692 = vadd.f32 %v2678, %v2685
  %v2693 = vadd.f32 %v2679, %v2686
  %v2694 = vadd.f32 %v2680, %v2687
  %v2695 = vadd.f32 %v2681, %v2688
  %v2696 = vadd.f32 %v2682, %v2689
  %v2697 = vmul.f32 %v2660, %v2655
  %v2698 = vmul.f32 %v2661, %v2655
  %v2699 = vmul.f32 %v2662, %v2655
  %v2700 = vmul.f32 %v2663, %v2655
  %v2701 = vmul.f32 %v2664, %v2655
  %v2702 = vmul.f32 %v2665, %v2655
  %v2703 = vmul.f32 %v2666, %v2655
  %v2704 = vadd.f32 %v2690, %v2697
  %v2705 = vadd.f32 %v2691, %v2698
  %v2706 = vadd.f32 %v2692, %v2699
  %v2707 = vadd.f32 %v2693, %v2700
  %v2708 = vadd.f32 %v2694, %v2701
  %v2709 = vadd.f32 %v2695, %v2702
  %v2710 = vadd.f32 %v2696, %v2703
  %v2711 = vmul.f32 %v2661, %v2656
  %v2712 = vmul.f32 %v2662, %v2656
  %v2713 = vmul.f32 %v2663, %v2656
  %v2714 = vmul.f32 %v2664, %v2656
  %v2715 = vmul.f32 %v2665, %v2656
  %v2716 = vmul.f32 %v2666, %v2656
  %v2717 = vmul.f32 %v2667, %v2656
  %v2718 = vadd.f32 %v2704, %v2711
  %v2719 = vadd.f32 %v2705, %v2712
  %v2720 = vadd.f32 %v2706, %v2713
  %v2721 = vadd.f32 %v2707, %v2714
  %v2722 = vadd.f32 %v2708, %v2715
  %v2723 = vadd.f32 %v2709, %v2716
  %v2724 = vadd.f32 %v2710, %v2717
  %v2725 = vmul.f32 %v2662, %v2657
  %v2726 = vmul.f32 %v2663, %v2657
  %v2727 = vmul.f32 %v2664, %v2657
  %v2728 = vmul.f32 %v2665, %v2657
  %v2729 = vmul.f32 %v2666, %v2657
  %v2730 = vmul.f32 %v2667, %v2657
  %v2731 = vmul.f32 %v2668, %v2657
  %v2732 = vadd.f32 %v2718, %v2725
  %v2733 = vadd.f32 %v2719, %v2726
  %v2734 = vadd.f32 %v2720, %v2727
  %v2735 = vadd.f32 %v2721, %v2728
  %v2736 = vadd.f32 %v2722, %v2729
  %v2737 = vadd.f32 %v2723, %v2730
  %v2738 = vadd.f32 %v2724, %v2731
  %s2739 = scalar_lea.vmem %s2, 336
  %2740 = vst [vmem:[%s2739] sm:$0x1f] %v2732
  %2741 = vst [vmem:[%s2739 + $0x8] sm:$0x1f] %v2733
  %2742 = vst [vmem:[%s2739 + $0x10] sm:$0x1f] %v2734
  %2743 = vst [vmem:[%s2739 + $0x18] sm:$0x1f] %v2735
  %2744 = vst [vmem:[%s2739 + $0x20] sm:$0x1f] %v2736
  %2745 = vst [vmem:[%s2739 + $0x28] sm:$0x1f] %v2737
  %2746 = vst [vmem:[%s2739 + $0x30] sm:$0x1f] %v2738
  // Predicated region
  $region10: #{relu_dwconv2d.1} parent=0 // pred_check
    _
  $region11: #{relu_dwconv2d.1} parent=0 // pred_check_branch
    %2748 = sbr.rel (0) target = $region13
  $region12: #{relu_dwconv2d.1} parent=0 // pred_region
    _
  $region13: #{relu_dwconv2d.1} parent=0 // pred_fallthru
    _
  // Predicated region
  $region14: #{relu_dwconv2d.1} parent=0 // pred_check
    _
  $region15: #{relu_dwconv2d.1} parent=0 // pred_check_branch
    %2750 = sbr.rel (0) target = $region17
  $region16: #{relu_dwconv2d.1} parent=0 // pred_region
    _
  $region17: #{relu_dwconv2d.1} parent=0 // pred_fallthru
    _

</llo_original>
